<compile_context>
chip_gen: v5e
topology: v5e:2x2
jax: 0.10.0
libtpu: 0.0.40
codegen_flags: <defaults>
</compile_context>

<pallas_src>
import numpy as np
import jax
import jax.numpy as jnp
from jax.experimental import pallas as pl
from jax.experimental.pallas import tpu as pltpu

# ---------------------------------------------------------------------------
# Static network dims (from the PyTorch module; MNIST-style 1x28x28 input,
# which is what fc1's in_features == 320 == 20*4*4 implies).
# ---------------------------------------------------------------------------
H0, W0 = 28, 28                      # input spatial
K = 5                                # conv kernel size
C1, C2 = 10, 20                      # conv1 / conv2 output channels
H1, W1 = H0 - K + 1, W0 - K + 1      # 24, 24 (conv1 valid out)
H1P, W1P = H1 // 2, W1 // 2          # 12, 12 (pool1 out)
H2, W2 = H1P - K + 1, W1P - K + 1    # 8, 8   (conv2 valid out)
H2P, W2P = H2 // 2, W2 // 2          # 4, 4   (pool2 out)
assert H1 % 2 == 0 and H2 % 2 == 0   # the stride-2 H-pool trick relies on this

LANE = 128                           # padded (wo, oc) lane-group width
KBLK = 2 * LANE                      # per-kh column block: (dw=0 | dw=1) x 128
HP1 = H0 // 2                        # 14 rows/image after pool1 (12 valid + 2 scrap)
HP2 = H0 // 4                        # 7  rows/image after pool2 (4 valid + 3 scrap)
PAD_ROWS = 8                         # zeroed tail rows so kh-shifted reads stay in bounds

BT = 8                               # images per grid step (batch tile); per-step VMEM
                                     # < 2 MiB so it fits v5e(16)/v6e(32)/v7x(32) MiB
                                     # scoped defaults with large headroom.  Must be a
                                     # multiple of 8 (keeps every block (8,128)-aligned).


# ---------------------------------------------------------------------------
# Fused kernel: conv1 -> pool+relu -> conv2 -> (dropout=id) -> pool+relu.
# ---------------------------------------------------------------------------
def _fused_net_kernel(x_ref, a1_ref, b1_ref, a2_ref, b2_ref, o_ref,
                      xs_ref, acc1_ref, p1_ref, a1s_ref, acc2_ref, p2_ref):
    R0 = BT * H0      # 224 conv1 rows (28/image; rows >= 24 of an image are scrap)
    R1 = BT * HP1     # 112 pool1 rows (14/image; rows >= 12 of an image are scrap)
    R2 = BT * HP2     # 56  pool2 rows (7/image;  rows >= 4  of an image are scrap)

    # Stage the input tile with a zeroed tail so per-kh row-shifted reads never
    # leave the scratch (scrap rows produced this way are trimmed later).
    xs_ref[0:R0, :] = x_ref[...]
    xs_ref[R0:R0 + PAD_ROWS, :] = jnp.zeros((PAD_ROWS, LANE), jnp.float32)

    # conv1: 5 per-kh GEMMs.  Shifting the GEMM LHS rows by kh (a ref-offset
    # read) shifts its row-wise output identically, so no post-GEMM shifted
    # adds, no value-level relayouts and no (rows, 1280) intermediate.
    acc1_ref[...] = jnp.dot(xs_ref[pl.ds(0, R0), :].astype(jnp.bfloat16),
                            a1_ref[:, 0:KBLK],
                            preferred_element_type=jnp.float32)
    for kh in range(1, K):
        acc1_ref[...] += jnp.dot(xs_ref[pl.ds(kh, R0), :].astype(jnp.bfloat16),
                                 a1_ref[:, kh * KBLK:(kh + 1) * KBLK],
                                 preferred_element_type=jnp.float32)

    # maxpool 2x2 + bias + relu.  W direction: max of the two 128-lane halves
    # (even/odd output column); H direction: stride-2 sublane reads.  Bias is
    # per-channel, so max(x + b) == max(x) + b and it is added after the pool.
    p1_ref[...] = jnp.maximum(acc1_ref[:, 0:LANE], acc1_ref[:, LANE:KBLK])
    hp1 = jnp.maximum(p1_ref[pl.ds(0, R1, stride=2), :],
                      p1_ref[pl.ds(1, R1, stride=2), :])
    a1s_ref[0:R1, :] = jnp.maximum(hp1 + b1_ref[...], 0.0)
    a1s_ref[R1:R1 + PAD_ROWS, :] = jnp.zeros((PAD_ROWS, LANE), jnp.float32)

    # conv2: identical structure; contraction = 120 (w, c) lanes padded to 128.
    acc2_ref[...] = jnp.dot(a1s_ref[pl.ds(0, R1), :].astype(jnp.bfloat16),
                            a2_ref[:, 0:KBLK],
                            preferred_element_type=jnp.float32)
    for kh in range(1, K):
        acc2_ref[...] += jnp.dot(a1s_ref[pl.ds(kh, R1), :].astype(jnp.bfloat16),
                                 a2_ref[:, kh * KBLK:(kh + 1) * KBLK],
                                 preferred_element_type=jnp.float32)

    # TODO(synk): nn.Dropout2d is treated as identity (eval semantics); the
    # train-mode per-channel stochastic mask / (1-p) scaling is not reproduced.

    # maxpool 2x2 + bias + relu; the store is lane-dense (128 lanes, 80 valid).
    p2_ref[...] = jnp.maximum(acc2_ref[:, 0:LANE], acc2_ref[:, LANE:KBLK])
    hp2 = jnp.maximum(p2_ref[pl.ds(0, R2, stride=2), :],
                      p2_ref[pl.ds(1, R2, stride=2), :])
    o_ref[...] = jnp.maximum(hp2 + b2_ref[...], 0.0)


def _forward_packed(x2d, a1, b1t, a2, b2t):
    rows = x2d.shape[0]
    bp = rows // H0
    n_steps = rows // (BT * H0)
    flops = 2 * K * BT * (H0 + HP1) * LANE * KBLK * n_steps
    bytes_accessed = (x2d.size * 4 + a1.size * 2 + a2.size * 2 +
                      b1t.size * 4 + b2t.size * 4 + bp * HP2 * LANE * 4)
    return pl.pallas_call(
        _fused_net_kernel,
        out_shape=jax.ShapeDtypeStruct((bp * HP2, LANE), jnp.float32),
        grid=(n_steps,),
        in_specs=[
            pl.BlockSpec((BT * H0, LANE), lambda i: (i, 0)),   # batch tile of images
            pl.BlockSpec(a1.shape, lambda i: (0, 0)),          # weights stay VMEM-resident
            pl.BlockSpec(b1t.shape, lambda i: (0, 0)),
            pl.BlockSpec(a2.shape, lambda i: (0, 0)),
            pl.BlockSpec(b2t.shape, lambda i: (0, 0)),
        ],
        out_specs=pl.BlockSpec((BT * HP2, LANE), lambda i: (i, 0)),
        scratch_shapes=[
            pltpu.VMEM((BT * H0 + PAD_ROWS, LANE), jnp.float32),   # staged input rows
            pltpu.VMEM((BT * H0, KBLK), jnp.float32),              # conv1 accumulator
            pltpu.VMEM((BT * H0, LANE), jnp.float32),              # W-pooled conv1
            pltpu.VMEM((BT * HP1 + PAD_ROWS, LANE), jnp.float32),  # staged act1 rows
            pltpu.VMEM((BT * HP1, KBLK), jnp.float32),             # conv2 accumulator
            pltpu.VMEM((BT * HP1, LANE), jnp.float32),             # W-pooled conv2
        ],
        compiler_params=pltpu.CompilerParams(
            dimension_semantics=("parallel",)),                    # megacore on v7x
        cost_estimate=pl.CostEstimate(flops=flops, transcendentals=0,
                                      bytes_accessed=bytes_accessed),
    )(x2d, a1, b1t, a2, b2t)


@jax.jit
def network_forward(x, packed):
    """x: (B, 1, 28, 28) f32 NCHW -> (B, 20, 4, 4) f32 NCHW (the value of the
    torch forward at its print/exit point: relu(pool2(conv2(pool_relu(conv1)))))."""
    a1, b1t, a2, b2t = packed
    B = x.shape[0]
    bp = ((B + BT - 1) // BT) * BT                      # pad batch to the tile size
    x2d = x.reshape(B * H0, W0)                         # C_in == 1
    x2d = jnp.pad(x2d, ((0, (bp - B) * H0), (0, LANE - W0)))   # lane-dense input
    out = _forward_packed(x2d, a1, b1t, a2, b2t)        # (bp*7, 128)
    out = out.reshape(bp, HP2, LANE)[:B, :H2P, :W2P * C2]      # drop scrap rows / pad lanes
    # rows (b, oh), lanes (ow, oc) -> NCHW (tiny 320*B-element transform)
    return out.reshape(B, H2P, W2P, C2).transpose(0, 3, 1, 2)


# ---------------------------------------------------------------------------
# Parameter init (deterministic, PyTorch shapes) and one-time weight packing.
# fc1/fc2/fc3 exist in __init__ but the forward exits before reaching them.
# ---------------------------------------------------------------------------
def init_params(key):
    k1, k2, k3, k4 = jax.random.split(key, 4)
    conv1_w = 0.10 * jax.random.normal(k1, (C1, 1, K, K), jnp.float32)
    conv1_b = 0.10 * jax.random.normal(k2, (C1,), jnp.float32)
    conv2_w = 0.05 * jax.random.normal(k3, (C2, C1, K, K), jnp.float32)
    conv2_b = 0.05 * jax.random.normal(k4, (C2,), jnp.float32)
    return conv1_w, conv1_b, conv2_w, conv2_b


def pack_params(params):
    """One-time host repack of the PyTorch-layout conv weights into the
    128-lane-aligned structured GEMM operands used by the fused kernel."""
    w1, b1, w2, b2 = (np.asarray(p, np.float32) for p in params)

    # conv1: A1[w, kh*256 + dw*128 + wo*C1 + oc] = w1[oc, 0, kh, w - (2*wo+dw)]
    # rows 28..127 and lanes 120..127 of each 128-half stay zero.
    A1 = np.zeros((LANE, K * KBLK), np.float32)
    for kh in range(K):
        for kw in range(K):
            for wo in range(W1P):
                for dw in range(2):
                    col = kh * KBLK + dw * LANE + wo * C1
                    A1[2 * wo + dw + kw, col:col + C1] = w1[:, 0, kh, kw]

    # conv2: A2[w*C1 + c, kh*256 + dw*128 + wo*C2 + oc] = w2[oc, c, kh, w-(2*wo+dw)]
    A2 = np.zeros((LANE, K * KBLK), np.float32)
    for kh in range(K):
        for kw in range(K):
            for wo in range(W2P):
                for dw in range(2):
                    col = kh * KBLK + dw * LANE + wo * C2
                    r = (2 * wo + dw + kw) * C1
                    A2[r:r + C1, col:col + C2] = w2[:, :, kh, kw].T

    # Biases on the pooled (wo, oc) lane layout; pad lanes stay 0 so they remain
    # 0 through pool / relu and never contaminate valid lanes.
    b1t = np.zeros((1, LANE), np.float32)
    b1t[0, :W1P * C1] = np.tile(b1, W1P)
    b2t = np.zeros((1, LANE), np.float32)
    b2t[0, :W2P * C2] = np.tile(b2, W2P)

    return (jnp.asarray(A1, jnp.bfloat16), jnp.asarray(b1t, jnp.float32),
            jnp.asarray(A2, jnp.bfloat16), jnp.asarray(b2t, jnp.float32))


# ---------------------------------------------------------------------------
# Pure-JAX reference (XLA ops, f32) for a correctness cross-check.
# ---------------------------------------------------------------------------
def reference_forward(x, params):
    w1, b1, w2, b2 = params

    def conv(y, w):
        dn = jax.lax.conv_dimension_numbers(y.shape, w.shape,
                                            ('NCHW', 'OIHW', 'NCHW'))
        return jax.lax.conv_general_dilated(
            y, w, (1, 1), 'VALID', dimension_numbers=dn,
            precision=jax.lax.Precision.HIGHEST)

    def pool_relu(y):
        y = jax.lax.reduce_window(y, -jnp.inf, jax.lax.max,
                                  (1, 1, 2, 2), (1, 1, 2, 2), 'VALID')
        return jnp.maximum(y, 0.0)

    y = pool_relu(conv(x, w1) + b1[None, :, None, None])
    y = pool_relu(conv(y, w2) + b2[None, :, None, None])   # Dropout2d = identity (eval)
    return y


if __name__ == "__main__":
    key = jax.random.PRNGKey(0)
    pkey, xkey = jax.random.split(key)
    params = init_params(pkey)
    packed = pack_params(params)

    # MNIST-style input implied by the module (1x28x28 -> 320 flatten).
    # B=12 pads to 16 -> a 2-step batch-tiled grid and exercises the trim path.
    B = 12
    x = jax.random.normal(xkey, (B, 1, H0, W0), jnp.float32)

    out = jax.block_until_ready(network_forward(x, packed))

    assert out.shape == (B, C2, H2P, W2P), out.shape
    assert bool(jnp.all(jnp.isfinite(out)))

    ref = jax.block_until_ready(reference_forward(x, params))
    np.testing.assert_allclose(np.asarray(out), np.asarray(ref),
                               rtol=5e-2, atol=5e-2)

    print("KERNEL_OK")
</pallas_src>

<mosaic_0001>
module attributes {stable_mosaic.version = 11 : i64} {
  func.func @_fused_net_kernel(%arg0: i32, %arg1: memref<224x128xf32, #tpu.memory_space<vmem>>, %arg2: memref<128x1280xbf16, #tpu.memory_space<vmem>>, %arg3: memref<1x128xf32, #tpu.memory_space<vmem>>, %arg4: memref<128x1280xbf16, #tpu.memory_space<vmem>>, %arg5: memref<1x128xf32, #tpu.memory_space<vmem>>, %arg6: memref<56x128xf32, #tpu.memory_space<vmem>>, %arg7: memref<232x128xf32, #tpu.memory_space<vmem>>, %arg8: memref<224x256xf32, #tpu.memory_space<vmem>>, %arg9: memref<224x128xf32, #tpu.memory_space<vmem>>, %arg10: memref<120x128xf32, #tpu.memory_space<vmem>>, %arg11: memref<112x256xf32, #tpu.memory_space<vmem>>, %arg12: memref<112x128xf32, #tpu.memory_space<vmem>>) attributes {dimension_semantics = [#tpu.dimension_semantics<parallel>], iteration_bounds = array<i64: 2>, scalar_prefetch = 0 : i64, scratch_operands = 6 : i64, tpu.core_type = #tpu.core_type<tc>, window_params = [{transform_indices = @transform_0, window_bounds = array<i64: 224, 128>}, {pipeline_mode = #tpu.pipeline_mode<synchronous>, transform_indices = @transform_1, window_bounds = array<i64: 128, 1280>}, {pipeline_mode = #tpu.pipeline_mode<synchronous>, transform_indices = @transform_2, window_bounds = array<i64: 1, 128>}, {pipeline_mode = #tpu.pipeline_mode<synchronous>, transform_indices = @transform_3, window_bounds = array<i64: 128, 1280>}, {pipeline_mode = #tpu.pipeline_mode<synchronous>, transform_indices = @transform_4, window_bounds = array<i64: 1, 128>}, {transform_indices = @transform_5, window_bounds = array<i64: 56, 128>}]} {
    %c0 = arith.constant 0 : index
    %c0_0 = arith.constant 0 : index
    %0 = vector.load %arg1[%c0, %c0_0] : memref<224x128xf32, #tpu.memory_space<vmem>>, vector<224x128xf32>
    %c0_1 = arith.constant 0 : index
    %c0_2 = arith.constant 0 : index
    %1 = vector.load %arg7[%c0_1, %c0_2] : memref<232x128xf32, #tpu.memory_space<vmem>>, vector<224x128xf32>
    tpu.vector_store %arg7[%c0_1, %c0_2], %0 {strides = array<i32>} : memref<232x128xf32, #tpu.memory_space<vmem>>, vector<224x128xf32>,
    %cst = arith.constant 0.000000e+00 : f32
    %2 = vector.broadcast %cst : f32 to vector<8x128xf32>
    %c224 = arith.constant 224 : index
    %c0_3 = arith.constant 0 : index
    %3 = vector.load %arg7[%c224, %c0_3] : memref<232x128xf32, #tpu.memory_space<vmem>>, vector<8x128xf32>
    tpu.vector_store %arg7[%c224, %c0_3], %2 {strides = array<i32>} : memref<232x128xf32, #tpu.memory_space<vmem>>, vector<8x128xf32>,
    %c0_4 = arith.constant 0 : index
    %c0_5 = arith.constant 0 : index
    %4 = vector.load %arg7[%c0_4, %c0_5] : memref<232x128xf32, #tpu.memory_space<vmem>>, vector<224x128xf32>
    %5 = arith.truncf %4 : vector<224x128xf32> to vector<224x128xbf16>
    %c0_6 = arith.constant 0 : index
    %c0_7 = arith.constant 0 : index
    %6 = vector.load %arg2[%c0_6, %c0_7] : memref<128x1280xbf16, #tpu.memory_space<vmem>>, vector<128x256xbf16>
    %cst_8 = arith.constant dense<0.000000e+00> : vector<224x256xf32>
    %7 = tpu.matmul %5, %6, %cst_8 {dimension_numbers = #tpu.dot_dimension_numbers<[1], [0], [0], [1], [0, 0, 1, 1], [], []>} : vector<224x128xbf16>, vector<128x256xbf16>, vector<224x256xf32> -> vector<224x256xf32>
    %c0_9 = arith.constant 0 : index
    %c0_10 = arith.constant 0 : index
    %8 = vector.load %arg8[%c0_9, %c0_10] : memref<224x256xf32, #tpu.memory_space<vmem>>, vector<224x256xf32>
    tpu.vector_store %arg8[%c0_9, %c0_10], %7 {strides = array<i32>} : memref<224x256xf32, #tpu.memory_space<vmem>>, vector<224x256xf32>,
    %c0_11 = arith.constant 0 : index
    %c0_12 = arith.constant 0 : index
    %9 = vector.load %arg8[%c0_11, %c0_12] : memref<224x256xf32, #tpu.memory_space<vmem>>, vector<224x256xf32>
    %c1 = arith.constant 1 : index
    %c0_13 = arith.constant 0 : index
    %10 = vector.load %arg7[%c1, %c0_13] : memref<232x128xf32, #tpu.memory_space<vmem>>, vector<224x128xf32>
    %11 = arith.truncf %10 : vector<224x128xf32> to vector<224x128xbf16>
    %c0_14 = arith.constant 0 : index
    %c256 = arith.constant 256 : index
    %12 = vector.load %arg2[%c0_14, %c256] : memref<128x1280xbf16, #tpu.memory_space<vmem>>, vector<128x256xbf16>
    %cst_15 = arith.constant dense<0.000000e+00> : vector<224x256xf32>
    %13 = tpu.matmul %11, %12, %cst_15 {dimension_numbers = #tpu.dot_dimension_numbers<[1], [0], [0], [1], [0, 0, 1, 1], [], []>} : vector<224x128xbf16>, vector<128x256xbf16>, vector<224x256xf32> -> vector<224x256xf32>
    %14 = arith.addf %9, %13 : vector<224x256xf32>
    %c0_16 = arith.constant 0 : index
    %c0_17 = arith.constant 0 : index
    %15 = vector.load %arg8[%c0_16, %c0_17] : memref<224x256xf32, #tpu.memory_space<vmem>>, vector<224x256xf32>
    tpu.vector_store %arg8[%c0_16, %c0_17], %14 {strides = array<i32>} : memref<224x256xf32, #tpu.memory_space<vmem>>, vector<224x256xf32>,
    %c0_18 = arith.constant 0 : index
    %c0_19 = arith.constant 0 : index
    %16 = vector.load %arg8[%c0_18, %c0_19] : memref<224x256xf32, #tpu.memory_space<vmem>>, vector<224x256xf32>
    %c2 = arith.constant 2 : index
    %c0_20 = arith.constant 0 : index
    %17 = vector.load %arg7[%c2, %c0_20] : memref<232x128xf32, #tpu.memory_space<vmem>>, vector<224x128xf32>
    %18 = arith.truncf %17 : vector<224x128xf32> to vector<224x128xbf16>
    %c0_21 = arith.constant 0 : index
    %c512 = arith.constant 512 : index
    %19 = vector.load %arg2[%c0_21, %c512] : memref<128x1280xbf16, #tpu.memory_space<vmem>>, vector<128x256xbf16>
    %cst_22 = arith.constant dense<0.000000e+00> : vector<224x256xf32>
    %20 = tpu.matmul %18, %19, %cst_22 {dimension_numbers = #tpu.dot_dimension_numbers<[1], [0], [0], [1], [0, 0, 1, 1], [], []>} : vector<224x128xbf16>, vector<128x256xbf16>, vector<224x256xf32> -> vector<224x256xf32>
    %21 = arith.addf %16, %20 : vector<224x256xf32>
    %c0_23 = arith.constant 0 : index
    %c0_24 = arith.constant 0 : index
    %22 = vector.load %arg8[%c0_23, %c0_24] : memref<224x256xf32, #tpu.memory_space<vmem>>, vector<224x256xf32>
    tpu.vector_store %arg8[%c0_23, %c0_24], %21 {strides = array<i32>} : memref<224x256xf32, #tpu.memory_space<vmem>>, vector<224x256xf32>,
    %c0_25 = arith.constant 0 : index
    %c0_26 = arith.constant 0 : index
    %23 = vector.load %arg8[%c0_25, %c0_26] : memref<224x256xf32, #tpu.memory_space<vmem>>, vector<224x256xf32>
    %c3 = arith.constant 3 : index
    %c0_27 = arith.constant 0 : index
    %24 = vector.load %arg7[%c3, %c0_27] : memref<232x128xf32, #tpu.memory_space<vmem>>, vector<224x128xf32>
    %25 = arith.truncf %24 : vector<224x128xf32> to vector<224x128xbf16>
    %c0_28 = arith.constant 0 : index
    %c768 = arith.constant 768 : index
    %26 = vector.load %arg2[%c0_28, %c768] : memref<128x1280xbf16, #tpu.memory_space<vmem>>, vector<128x256xbf16>
    %cst_29 = arith.constant dense<0.000000e+00> : vector<224x256xf32>
    %27 = tpu.matmul %25, %26, %cst_29 {dimension_numbers = #tpu.dot_dimension_numbers<[1], [0], [0], [1], [0, 0, 1, 1], [], []>} : vector<224x128xbf16>, vector<128x256xbf16>, vector<224x256xf32> -> vector<224x256xf32>
    %28 = arith.addf %23, %27 : vector<224x256xf32>
    %c0_30 = arith.constant 0 : index
    %c0_31 = arith.constant 0 : index
    %29 = vector.load %arg8[%c0_30, %c0_31] : memref<224x256xf32, #tpu.memory_space<vmem>>, vector<224x256xf32>
    tpu.vector_store %arg8[%c0_30, %c0_31], %28 {strides = array<i32>} : memref<224x256xf32, #tpu.memory_space<vmem>>, vector<224x256xf32>,
    %c0_32 = arith.constant 0 : index
    %c0_33 = arith.constant 0 : index
    %30 = vector.load %arg8[%c0_32, %c0_33] : memref<224x256xf32, #tpu.memory_space<vmem>>, vector<224x256xf32>
    %c4 = arith.constant 4 : index
    %c0_34 = arith.constant 0 : index
    %31 = vector.load %arg7[%c4, %c0_34] : memref<232x128xf32, #tpu.memory_space<vmem>>, vector<224x128xf32>
    %32 = arith.truncf %31 : vector<224x128xf32> to vector<224x128xbf16>
    %c0_35 = arith.constant 0 : index
    %c1024 = arith.constant 1024 : index
    %33 = vector.load %arg2[%c0_35, %c1024] : memref<128x1280xbf16, #tpu.memory_space<vmem>>, vector<128x256xbf16>
    %cst_36 = arith.constant dense<0.000000e+00> : vector<224x256xf32>
    %34 = tpu.matmul %32, %33, %cst_36 {dimension_numbers = #tpu.dot_dimension_numbers<[1], [0], [0], [1], [0, 0, 1, 1], [], []>} : vector<224x128xbf16>, vector<128x256xbf16>, vector<224x256xf32> -> vector<224x256xf32>
    %35 = arith.addf %30, %34 : vector<224x256xf32>
    %c0_37 = arith.constant 0 : index
    %c0_38 = arith.constant 0 : index
    %36 = vector.load %arg8[%c0_37, %c0_38] : memref<224x256xf32, #tpu.memory_space<vmem>>, vector<224x256xf32>
    tpu.vector_store %arg8[%c0_37, %c0_38], %35 {strides = array<i32>} : memref<224x256xf32, #tpu.memory_space<vmem>>, vector<224x256xf32>,
    %c0_39 = arith.constant 0 : index
    %c0_40 = arith.constant 0 : index
    %37 = vector.load %arg8[%c0_39, %c0_40] : memref<224x256xf32, #tpu.memory_space<vmem>>, vector<224x128xf32>
    %c0_41 = arith.constant 0 : index
    %c128 = arith.constant 128 : index
    %38 = vector.load %arg8[%c0_41, %c128] : memref<224x256xf32, #tpu.memory_space<vmem>>, vector<224x128xf32>
    %39 = arith.maximumf %37, %38 : vector<224x128xf32>
    %c0_42 = arith.constant 0 : index
    %c0_43 = arith.constant 0 : index
    %40 = vector.load %arg9[%c0_42, %c0_43] : memref<224x128xf32, #tpu.memory_space<vmem>>, vector<224x128xf32>
    tpu.vector_store %arg9[%c0_42, %c0_43], %39 {strides = array<i32>} : memref<224x128xf32, #tpu.memory_space<vmem>>, vector<224x128xf32>,
    %c0_44 = arith.constant 0 : index
    %c0_45 = arith.constant 0 : index
    %41 = tpu.strided_load %arg9[%c0_44, %c0_45] {strides = array<i32: 2, 1>} : memref<224x128xf32, #tpu.memory_space<vmem>>, vector<112x128xf32>
    %c1_46 = arith.constant 1 : index
    %c0_47 = arith.constant 0 : index
    %42 = tpu.strided_load %arg9[%c1_46, %c0_47] {strides = array<i32: 2, 1>} : memref<224x128xf32, #tpu.memory_space<vmem>>, vector<112x128xf32>
    %43 = arith.maximumf %41, %42 : vector<112x128xf32>
    %c0_48 = arith.constant 0 : index
    %c0_49 = arith.constant 0 : index
    %44 = vector.load %arg3[%c0_48, %c0_49] : memref<1x128xf32, #tpu.memory_space<vmem>>, vector<1x128xf32>
    %45 = vector.broadcast %44 : vector<1x128xf32> to vector<112x128xf32>
    %46 = arith.addf %43, %45 : vector<112x128xf32>
    %cst_50 = arith.constant 0.000000e+00 : f32
    %47 = vector.broadcast %cst_50 : f32 to vector<112x128xf32>
    %48 = arith.maximumf %46, %47 : vector<112x128xf32>
    %c0_51 = arith.constant 0 : index
    %c0_52 = arith.constant 0 : index
    %49 = vector.load %arg10[%c0_51, %c0_52] : memref<120x128xf32, #tpu.memory_space<vmem>>, vector<112x128xf32>
    tpu.vector_store %arg10[%c0_51, %c0_52], %48 {strides = array<i32>} : memref<120x128xf32, #tpu.memory_space<vmem>>, vector<112x128xf32>,
    %cst_53 = arith.constant 0.000000e+00 : f32
    %50 = vector.broadcast %cst_53 : f32 to vector<8x128xf32>
    %c112 = arith.constant 112 : index
    %c0_54 = arith.constant 0 : index
    %51 = vector.load %arg10[%c112, %c0_54] : memref<120x128xf32, #tpu.memory_space<vmem>>, vector<8x128xf32>
    tpu.vector_store %arg10[%c112, %c0_54], %50 {strides = array<i32>} : memref<120x128xf32, #tpu.memory_space<vmem>>, vector<8x128xf32>,
    %c0_55 = arith.constant 0 : index
    %c0_56 = arith.constant 0 : index
    %52 = vector.load %arg10[%c0_55, %c0_56] : memref<120x128xf32, #tpu.memory_space<vmem>>, vector<112x128xf32>
    %53 = arith.truncf %52 : vector<112x128xf32> to vector<112x128xbf16>
    %c0_57 = arith.constant 0 : index
    %c0_58 = arith.constant 0 : index
    %54 = vector.load %arg4[%c0_57, %c0_58] : memref<128x1280xbf16, #tpu.memory_space<vmem>>, vector<128x256xbf16>
    %cst_59 = arith.constant dense<0.000000e+00> : vector<112x256xf32>
    %55 = tpu.matmul %53, %54, %cst_59 {dimension_numbers = #tpu.dot_dimension_numbers<[1], [0], [0], [1], [0, 0, 1, 1], [], []>} : vector<112x128xbf16>, vector<128x256xbf16>, vector<112x256xf32> -> vector<112x256xf32>
    %c0_60 = arith.constant 0 : index
    %c0_61 = arith.constant 0 : index
    %56 = vector.load %arg11[%c0_60, %c0_61] : memref<112x256xf32, #tpu.memory_space<vmem>>, vector<112x256xf32>
    tpu.vector_store %arg11[%c0_60, %c0_61], %55 {strides = array<i32>} : memref<112x256xf32, #tpu.memory_space<vmem>>, vector<112x256xf32>,
    %c0_62 = arith.constant 0 : index
    %c0_63 = arith.constant 0 : index
    %57 = vector.load %arg11[%c0_62, %c0_63] : memref<112x256xf32, #tpu.memory_space<vmem>>, vector<112x256xf32>
    %c1_64 = arith.constant 1 : index
    %c0_65 = arith.constant 0 : index
    %58 = vector.load %arg10[%c1_64, %c0_65] : memref<120x128xf32, #tpu.memory_space<vmem>>, vector<112x128xf32>
    %59 = arith.truncf %58 : vector<112x128xf32> to vector<112x128xbf16>
    %c0_66 = arith.constant 0 : index
    %c256_67 = arith.constant 256 : index
    %60 = vector.load %arg4[%c0_66, %c256_67] : memref<128x1280xbf16, #tpu.memory_space<vmem>>, vector<128x256xbf16>
    %cst_68 = arith.constant dense<0.000000e+00> : vector<112x256xf32>
    %61 = tpu.matmul %59, %60, %cst_68 {dimension_numbers = #tpu.dot_dimension_numbers<[1], [0], [0], [1], [0, 0, 1, 1], [], []>} : vector<112x128xbf16>, vector<128x256xbf16>, vector<112x256xf32> -> vector<112x256xf32>
    %62 = arith.addf %57, %61 : vector<112x256xf32>
    %c0_69 = arith.constant 0 : index
    %c0_70 = arith.constant 0 : index
    %63 = vector.load %arg11[%c0_69, %c0_70] : memref<112x256xf32, #tpu.memory_space<vmem>>, vector<112x256xf32>
    tpu.vector_store %arg11[%c0_69, %c0_70], %62 {strides = array<i32>} : memref<112x256xf32, #tpu.memory_space<vmem>>, vector<112x256xf32>,
    %c0_71 = arith.constant 0 : index
    %c0_72 = arith.constant 0 : index
    %64 = vector.load %arg11[%c0_71, %c0_72] : memref<112x256xf32, #tpu.memory_space<vmem>>, vector<112x256xf32>
    %c2_73 = arith.constant 2 : index
    %c0_74 = arith.constant 0 : index
    %65 = vector.load %arg10[%c2_73, %c0_74] : memref<120x128xf32, #tpu.memory_space<vmem>>, vector<112x128xf32>
    %66 = arith.truncf %65 : vector<112x128xf32> to vector<112x128xbf16>
    %c0_75 = arith.constant 0 : index
    %c512_76 = arith.constant 512 : index
    %67 = vector.load %arg4[%c0_75, %c512_76] : memref<128x1280xbf16, #tpu.memory_space<vmem>>, vector<128x256xbf16>
    %cst_77 = arith.constant dense<0.000000e+00> : vector<112x256xf32>
    %68 = tpu.matmul %66, %67, %cst_77 {dimension_numbers = #tpu.dot_dimension_numbers<[1], [0], [0], [1], [0, 0, 1, 1], [], []>} : vector<112x128xbf16>, vector<128x256xbf16>, vector<112x256xf32> -> vector<112x256xf32>
    %69 = arith.addf %64, %68 : vector<112x256xf32>
    %c0_78 = arith.constant 0 : index
    %c0_79 = arith.constant 0 : index
    %70 = vector.load %arg11[%c0_78, %c0_79] : memref<112x256xf32, #tpu.memory_space<vmem>>, vector<112x256xf32>
    tpu.vector_store %arg11[%c0_78, %c0_79], %69 {strides = array<i32>} : memref<112x256xf32, #tpu.memory_space<vmem>>, vector<112x256xf32>,
    %c0_80 = arith.constant 0 : index
    %c0_81 = arith.constant 0 : index
    %71 = vector.load %arg11[%c0_80, %c0_81] : memref<112x256xf32, #tpu.memory_space<vmem>>, vector<112x256xf32>
    %c3_82 = arith.constant 3 : index
    %c0_83 = arith.constant 0 : index
    %72 = vector.load %arg10[%c3_82, %c0_83] : memref<120x128xf32, #tpu.memory_space<vmem>>, vector<112x128xf32>
    %73 = arith.truncf %72 : vector<112x128xf32> to vector<112x128xbf16>
    %c0_84 = arith.constant 0 : index
    %c768_85 = arith.constant 768 : index
    %74 = vector.load %arg4[%c0_84, %c768_85] : memref<128x1280xbf16, #tpu.memory_space<vmem>>, vector<128x256xbf16>
    %cst_86 = arith.constant dense<0.000000e+00> : vector<112x256xf32>
    %75 = tpu.matmul %73, %74, %cst_86 {dimension_numbers = #tpu.dot_dimension_numbers<[1], [0], [0], [1], [0, 0, 1, 1], [], []>} : vector<112x128xbf16>, vector<128x256xbf16>, vector<112x256xf32> -> vector<112x256xf32>
    %76 = arith.addf %71, %75 : vector<112x256xf32>
    %c0_87 = arith.constant 0 : index
    %c0_88 = arith.constant 0 : index
    %77 = vector.load %arg11[%c0_87, %c0_88] : memref<112x256xf32, #tpu.memory_space<vmem>>, vector<112x256xf32>
    tpu.vector_store %arg11[%c0_87, %c0_88], %76 {strides = array<i32>} : memref<112x256xf32, #tpu.memory_space<vmem>>, vector<112x256xf32>,
    %c0_89 = arith.constant 0 : index
    %c0_90 = arith.constant 0 : index
    %78 = vector.load %arg11[%c0_89, %c0_90] : memref<112x256xf32, #tpu.memory_space<vmem>>, vector<112x256xf32>
    %c4_91 = arith.constant 4 : index
    %c0_92 = arith.constant 0 : index
    %79 = vector.load %arg10[%c4_91, %c0_92] : memref<120x128xf32, #tpu.memory_space<vmem>>, vector<112x128xf32>
    %80 = arith.truncf %79 : vector<112x128xf32> to vector<112x128xbf16>
    %c0_93 = arith.constant 0 : index
    %c1024_94 = arith.constant 1024 : index
    %81 = vector.load %arg4[%c0_93, %c1024_94] : memref<128x1280xbf16, #tpu.memory_space<vmem>>, vector<128x256xbf16>
    %cst_95 = arith.constant dense<0.000000e+00> : vector<112x256xf32>
    %82 = tpu.matmul %80, %81, %cst_95 {dimension_numbers = #tpu.dot_dimension_numbers<[1], [0], [0], [1], [0, 0, 1, 1], [], []>} : vector<112x128xbf16>, vector<128x256xbf16>, vector<112x256xf32> -> vector<112x256xf32>
    %83 = arith.addf %78, %82 : vector<112x256xf32>
    %c0_96 = arith.constant 0 : index
    %c0_97 = arith.constant 0 : index
    %84 = vector.load %arg11[%c0_96, %c0_97] : memref<112x256xf32, #tpu.memory_space<vmem>>, vector<112x256xf32>
    tpu.vector_store %arg11[%c0_96, %c0_97], %83 {strides = array<i32>} : memref<112x256xf32, #tpu.memory_space<vmem>>, vector<112x256xf32>,
    %c0_98 = arith.constant 0 : index
    %c0_99 = arith.constant 0 : index
    %85 = vector.load %arg11[%c0_98, %c0_99] : memref<112x256xf32, #tpu.memory_space<vmem>>, vector<112x128xf32>
    %c0_100 = arith.constant 0 : index
    %c128_101 = arith.constant 128 : index
    %86 = vector.load %arg11[%c0_100, %c128_101] : memref<112x256xf32, #tpu.memory_space<vmem>>, vector<112x128xf32>
    %87 = arith.maximumf %85, %86 : vector<112x128xf32>
    %c0_102 = arith.constant 0 : index
    %c0_103 = arith.constant 0 : index
    %88 = vector.load %arg12[%c0_102, %c0_103] : memref<112x128xf32, #tpu.memory_space<vmem>>, vector<112x128xf32>
    tpu.vector_store %arg12[%c0_102, %c0_103], %87 {strides = array<i32>} : memref<112x128xf32, #tpu.memory_space<vmem>>, vector<112x128xf32>,
    %c0_104 = arith.constant 0 : index
    %c0_105 = arith.constant 0 : index
    %89 = tpu.strided_load %arg12[%c0_104, %c0_105] {strides = array<i32: 2, 1>} : memref<112x128xf32, #tpu.memory_space<vmem>>, vector<56x128xf32>
    %c1_106 = arith.constant 1 : index
    %c0_107 = arith.constant 0 : index
    %90 = tpu.strided_load %arg12[%c1_106, %c0_107] {strides = array<i32: 2, 1>} : memref<112x128xf32, #tpu.memory_space<vmem>>, vector<56x128xf32>
    %91 = arith.maximumf %89, %90 : vector<56x128xf32>
    %c0_108 = arith.constant 0 : index
    %c0_109 = arith.constant 0 : index
    %92 = vector.load %arg5[%c0_108, %c0_109] : memref<1x128xf32, #tpu.memory_space<vmem>>, vector<1x128xf32>
    %93 = vector.broadcast %92 : vector<1x128xf32> to vector<56x128xf32>
    %94 = arith.addf %91, %93 : vector<56x128xf32>
    %cst_110 = arith.constant 0.000000e+00 : f32
    %95 = vector.broadcast %cst_110 : f32 to vector<56x128xf32>
    %96 = arith.maximumf %94, %95 : vector<56x128xf32>
    %c0_111 = arith.constant 0 : index
    %c0_112 = arith.constant 0 : index
    %97 = vector.load %arg6[%c0_111, %c0_112] : memref<56x128xf32, #tpu.memory_space<vmem>>, vector<56x128xf32>
    tpu.vector_store %arg6[%c0_111, %c0_112], %96 {strides = array<i32>} : memref<56x128xf32, #tpu.memory_space<vmem>>, vector<56x128xf32>,
    return
  }
  func.func @transform_0(%arg0: i32) -> (i32, i32) {
    %c0_i32 = arith.constant 0 : i32
    %c0_i32_0 = arith.constant 0 : i32
    return %arg0, %c0_i32 : i32, i32
  }
  func.func @transform_1(%arg0: i32) -> (i32, i32) {
    %c0_i32 = arith.constant 0 : i32
    %c0_i32_0 = arith.constant 0 : i32
    %c0_i32_1 = arith.constant 0 : i32
    return %c0_i32, %c0_i32_0 : i32, i32
  }
  func.func @transform_2(%arg0: i32) -> (i32, i32) {
    %c0_i32 = arith.constant 0 : i32
    %c0_i32_0 = arith.constant 0 : i32
    %c0_i32_1 = arith.constant 0 : i32
    return %c0_i32, %c0_i32_0 : i32, i32
  }
  func.func @transform_3(%arg0: i32) -> (i32, i32) {
    %c0_i32 = arith.constant 0 : i32
    %c0_i32_0 = arith.constant 0 : i32
    %c0_i32_1 = arith.constant 0 : i32
    return %c0_i32, %c0_i32_0 : i32, i32
  }
  func.func @transform_4(%arg0: i32) -> (i32, i32) {
    %c0_i32 = arith.constant 0 : i32
    %c0_i32_0 = arith.constant 0 : i32
    %c0_i32_1 = arith.constant 0 : i32
    return %c0_i32, %c0_i32_0 : i32, i32
  }
  func.func @transform_5(%arg0: i32) -> (i32, i32) {
    %c0_i32 = arith.constant 0 : i32
    %c0_i32_0 = arith.constant 0 : i32
    return %arg0, %c0_i32 : i32, i32
  }
}

</mosaic_0001>

<llo_original>
// kernel: network_forward.1
$region0: #{network_forward.1}
  #allocation0 [shape = 'u32[]', space=smem, size = 0x4, offset = 0x4, fixed_abs, tag = 'smem constant byte address 0x4 - core index']
  #allocation1 [shape = 'u32[72,128]{1,0:T(1,128)}', space=vmem, size = 0x9000, scoped, tag = 'internal scratch']
  #allocation2 [shape = 'f32[232,128]{1,0:T(8,128)}', space=vmem, size = 0x1d000, scoped, tag = 'scratch operand']
  #allocation3 [shape = 'f32[224,256]{1,0:T(8,128)}', space=vmem, size = 0x38000, scoped, tag = 'scratch operand']
  #allocation4 [shape = 'f32[224,128]{1,0:T(8,128)}', space=vmem, size = 0x1c000, scoped, tag = 'scratch operand']
  #allocation5 [shape = 'f32[120,128]{1,0:T(8,128)}', space=vmem, size = 0xf000, scoped, tag = 'scratch operand']
  #allocation6 [shape = 'f32[112,256]{1,0:T(8,128)}', space=vmem, size = 0x1c000, scoped, tag = 'scratch operand']
  #allocation7 [shape = 'f32[112,128]{1,0:T(8,128)}', space=vmem, size = 0xe000, scoped, tag = 'scratch operand']
  %s0 = inlined_call_operand.vmem [shape: f32[448,128], index: 0, kind: input, shape index: {}]
  %s1 = inlined_call_operand.vmem [shape: bf16[128,1280], index: 1, kind: input, shape index: {}]
  %s2 = inlined_call_operand.vmem [shape: f32[1,128], index: 2, kind: input, shape index: {}]
  %s3 = inlined_call_operand.hbm [shape: bf16[128,1280], index: 3, kind: input, shape index: {}]
  %s4 = inlined_call_operand.vmem [shape: f32[1,128], index: 4, kind: input, shape index: {}]
  %s5 = inlined_call_operand.vmem [shape: f32[112,128], index: 5, kind: output, shape index: {}]
  %s6 = sld [smem:[#allocation0]]
  $region57: #{network_forward.1} parent=0
    _
  %s8 = ssub.s32 1, %s6
  %s9 = scalar_select 0, %s8, %s6
  $region1: #{network_forward.1} parent=0
    #allocation8 [shape = 'u8[327680]{0}', space=vmem, size = 0x50000, scoped, tag = 'input window, operand 3, single buffered']
    #allocation9 [shape = 's32[2]{0}', space=sflag, size = 0x8, scoped, tag = 'scoped memory for network_forward.1']
    %10 = vsyncpa [#allocation9], 0
    loop: start=0, step=1, limit=4
    $region2: #{network_forward.1} parent=1 // loop_pre_header
      _
    $region3: #{network_forward.1} parent=1 // loop_header
      %s12 = sphi 0, %s16
      %p13 = scmp.ge.s32.totalorder %s12, 4
      %s22 = sphi 0, %s24
      %s25 = sphi 0, %s22
      %s26 = sphi 0, %s25
      %s42 = sphi 0, %s26
      %s46 = sphi 0, %s46
      %s48 = sphi 0, %s46
      %s49 = sphi 0, %s48
      %s63 = sphi 0, %s49
      %s67 = sphi 0, %s67
      %s69 = sphi 0, %s67
      %s70 = sphi 0, %s69
      %s84 = sphi 0, %s70
      %s88 = sphi 0, %s88
      %s90 = sphi 0, %s88
      %s91 = sphi 0, %s90
      %s105 = sphi 0, %s91
      %s109 = sphi 0, %s109
      %s111 = sphi 0, %s109
      %s112 = sphi 0, %s111
      %s126 = sphi 0, %s112
      %s132 = sphi 0, %s134
      %s135 = sphi 0, %s132
      %s136 = sphi 0, %s135
      %s152 = sphi 0, %s136
    $region4: #{network_forward.1} parent=1 // loop_header_branch
      %15 = sbr.rel (%p13) target = $region8
    $region5: #{network_forward.1} parent=1 // loop_body
      %s17 = ssub.s32 %s12, 1
      %s18 = ssub.s32 %s12, 2
      %s19 = sadd.s32 %s12, 1
      %s20 = ssub.s32 %s12, %s19
      %p21 = scmp.eq.s32.totalorder %s20, 0
      %s23 = sadd.s32 %s22, 1
      %s24 = scalar_select %p21, %s22, %s23
      %p27 = pneg %p21
      %p28 = scmp.eq.s32.totalorder %s12, 1
      %p29 = por %p27, %p28
      %p30 = scmp.ne.s32.totalorder %s22, %s25
      %p31 = scmp.eq.s32.totalorder %s12, 0
      %p32 = por %p30, %p31
      %p33 = scmp.ne.s32.totalorder %s22, %s25
      %p34 = scmp.eq.s32.totalorder %s17, 1
      %p35 = por %p33, %p34
      %p36 = scmp.ne.s32.totalorder %s25, %s26
      %p37 = scmp.eq.s32.totalorder %s17, 0
      %p38 = por %p36, %p37
      %p39 = scmp.ne.s32.totalorder %s25, %s26
      %p40 = scmp.eq.s32.totalorder %s18, 1
      %p41 = por %p39, %p40
      %p43 = scmp.ne.s32.totalorder %s26, %s42
      %p44 = scmp.eq.s32.totalorder %s18, 0
      %p45 = por %p43, %p44
      %s47 = sadd.s32 %s46, 1
      %p50 = scmp.eq.s32.totalorder %s12, 1
      %p51 = scmp.ne.s32.totalorder %s46, %s48
      %p52 = scmp.eq.s32.totalorder %s12, 0
      %p53 = por %p51, %p52
      %p54 = scmp.ne.s32.totalorder %s46, %s48
      %p55 = scmp.eq.s32.totalorder %s17, 1
      %p56 = por %p54, %p55
      %p57 = scmp.ne.s32.totalorder %s48, %s49
      %p58 = scmp.eq.s32.totalorder %s17, 0
      %p59 = por %p57, %p58
      %p60 = scmp.ne.s32.totalorder %s48, %s49
      %p61 = scmp.eq.s32.totalorder %s18, 1
      %p62 = por %p60, %p61
      %p64 = scmp.ne.s32.totalorder %s49, %s63
      %p65 = scmp.eq.s32.totalorder %s18, 0
      %p66 = por %p64, %p65
      %s68 = sadd.s32 %s67, 1
      %p71 = scmp.eq.s32.totalorder %s12, 1
      %p72 = scmp.ne.s32.totalorder %s67, %s69
      %p73 = scmp.eq.s32.totalorder %s12, 0
      %p74 = por %p72, %p73
      %p75 = scmp.ne.s32.totalorder %s67, %s69
      %p76 = scmp.eq.s32.totalorder %s17, 1
      %p77 = por %p75, %p76
      %p78 = scmp.ne.s32.totalorder %s69, %s70
      %p79 = scmp.eq.s32.totalorder %s17, 0
      %p80 = por %p78, %p79
      %p81 = scmp.ne.s32.totalorder %s69, %s70
      %p82 = scmp.eq.s32.totalorder %s18, 1
      %p83 = por %p81, %p82
      %p85 = scmp.ne.s32.totalorder %s70, %s84
      %p86 = scmp.eq.s32.totalorder %s18, 0
      %p87 = por %p85, %p86
      %s89 = sadd.s32 %s88, 1
      %p92 = scmp.eq.s32.totalorder %s12, 1
      %p93 = scmp.ne.s32.totalorder %s88, %s90
      %p94 = scmp.eq.s32.totalorder %s12, 0
      %p95 = por %p93, %p94
      %p96 = scmp.ne.s32.totalorder %s88, %s90
      %p97 = scmp.eq.s32.totalorder %s17, 1
      %p98 = por %p96, %p97
      %p99 = scmp.ne.s32.totalorder %s90, %s91
      %p100 = scmp.eq.s32.totalorder %s17, 0
      %p101 = por %p99, %p100
      %p102 = scmp.ne.s32.totalorder %s90, %s91
      %p103 = scmp.eq.s32.totalorder %s18, 1
      %p104 = por %p102, %p103
      %p106 = scmp.ne.s32.totalorder %s91, %s105
      %p107 = scmp.eq.s32.totalorder %s18, 0
      %p108 = por %p106, %p107
      %s110 = sadd.s32 %s109, 1
      %p113 = scmp.eq.s32.totalorder %s12, 1
      %p114 = scmp.ne.s32.totalorder %s109, %s111
      %p115 = scmp.eq.s32.totalorder %s12, 0
      %p116 = por %p114, %p115
      %p117 = scmp.ne.s32.totalorder %s109, %s111
      %p118 = scmp.eq.s32.totalorder %s17, 1
      %p119 = por %p117, %p118
      %p120 = scmp.ne.s32.totalorder %s111, %s112
      %p121 = scmp.eq.s32.totalorder %s17, 0
      %p122 = por %p120, %p121
      %p123 = scmp.ne.s32.totalorder %s111, %s112
      %p124 = scmp.eq.s32.totalorder %s18, 1
      %p125 = por %p123, %p124
      %p127 = scmp.ne.s32.totalorder %s112, %s126
      %p128 = scmp.eq.s32.totalorder %s18, 0
      %p129 = por %p127, %p128
      %s130 = ssub.s32 %s12, %s19
      %p131 = scmp.eq.s32.totalorder %s130, 0
      %s133 = sadd.s32 %s132, 1
      %s134 = scalar_select %p131, %s132, %s133
      %p137 = pneg %p131
      %p138 = scmp.eq.s32.totalorder %s12, 1
      %p139 = por %p137, %p138
      %p140 = scmp.ne.s32.totalorder %s132, %s135
      %p141 = scmp.eq.s32.totalorder %s12, 0
      %p142 = por %p140, %p141
      %p143 = scmp.ne.s32.totalorder %s132, %s135
      %p144 = scmp.eq.s32.totalorder %s17, 1
      %p145 = por %p143, %p144
      %p146 = scmp.ne.s32.totalorder %s135, %s136
      %p147 = scmp.eq.s32.totalorder %s17, 0
      %p148 = por %p146, %p147
      %p149 = scmp.ne.s32.totalorder %s135, %s136
      %p150 = scmp.eq.s32.totalorder %s18, 1
      %p151 = por %p149, %p150
      %p153 = scmp.ne.s32.totalorder %s136, %s152
      %p154 = scmp.eq.s32.totalorder %s18, 0
      %p155 = por %p153, %p154
      %p156 = scmp.le.s32.totalorder 1, %s12
      %p157 = scmp.lt.s32.totalorder %s12, 3
      %p158 = pnand %p156, %p157
      %p159 = pneg %p158
      // Predicated region
      $region9: #{network_forward.1} parent=5 // pred_check
        _
      $region10: #{network_forward.1} parent=5 // pred_check_branch
        %161 = sbr.rel (%p158) target = $region12
      $region11: #{network_forward.1} parent=5 // pred_region
        %s162 = ssub.s32 %s12, 1
        // Predicated region
        $region13: #{network_forward.1} parent=11 // pred_check
          %p163 = pneg %p59
        $region14: #{network_forward.1} parent=11 // pred_check_branch
          %165 = sbr.rel (%p163) target = $region16
        $region15: #{network_forward.1} parent=11 // pred_region
          _
        $region16: #{network_forward.1} parent=11 // pred_fallthru
          _
        // Predicated region
        $region17: #{network_forward.1} parent=11 // pred_check
          %p166 = pneg %p80
        $region18: #{network_forward.1} parent=11 // pred_check_branch
          %168 = sbr.rel (%p166) target = $region20
        $region19: #{network_forward.1} parent=11 // pred_region
          _
        $region20: #{network_forward.1} parent=11 // pred_fallthru
          _
        // Predicated region
        $region21: #{network_forward.1} parent=11 // pred_check
          %p169 = pneg %p101
        $region22: #{network_forward.1} parent=11 // pred_check_branch
          %171 = sbr.rel (%p169) target = $region24
        $region23: #{network_forward.1} parent=11 // pred_region
          %173 = vsyncadd [#allocation9], 0
          %s174 = sshll.u32 %s3, 4
          %s175 = int_to_ptr.hbm [resolvable:$true] %s174
          %s176 = sshll.u32 [#allocation8], 4
          %s177 = int_to_ptr.vmem [resolvable:$true] %s176
          %182 = dma.hbm_to_vmem [thread:$0]  %s175, 10240, %s177, [#allocation9], 640, 640, 40
        $region24: #{network_forward.1} parent=11 // pred_fallthru
          _
        // Predicated region
        $region25: #{network_forward.1} parent=11 // pred_check
          %p183 = pneg %p122
        $region26: #{network_forward.1} parent=11 // pred_check_branch
          %185 = sbr.rel (%p183) target = $region28
        $region27: #{network_forward.1} parent=11 // pred_region
          _
        $region28: #{network_forward.1} parent=11 // pred_fallthru
          _
      $region12: #{network_forward.1} parent=5 // pred_fallthru
        _
      %p186 = scmp.lt.s32.totalorder %s12, 2
      // Predicated region
      $region29: #{network_forward.1} parent=5 // pred_check
        %p187 = pneg %p186
      $region30: #{network_forward.1} parent=5 // pred_check_branch
        %189 = sbr.rel (%p187) target = $region32
      $region31: #{network_forward.1} parent=5 // pred_region
        // Predicated region
        $region33: #{network_forward.1} parent=31 // pred_check
          %p190 = pneg %p32
        $region34: #{network_forward.1} parent=31 // pred_check_branch
          %192 = sbr.rel (%p190) target = $region36
        $region35: #{network_forward.1} parent=31 // pred_region
          %s193 = smul.u32 28, %s12
          %p194 = scmp.lt.s32.totalorder %s193, 55
          %s195 = scalar_select %p194, %s193, 55
          %s196 = smul.addr %s195, 8
          %s197 = scalar_lea.vmem %s0, %s196
          %s198 = smul.u32 28, %s12
        $region36: #{network_forward.1} parent=31 // pred_fallthru
          _
      $region32: #{network_forward.1} parent=5 // pred_fallthru
        _
      %p199 = scmp.le.s32.totalorder 1, %s12
      %p200 = scmp.lt.s32.totalorder %s12, 3
      %p201 = pnand %p199, %p200
      %p202 = pneg %p201
      // Predicated region
      $region37: #{network_forward.1} parent=5 // pred_check
        _
      $region38: #{network_forward.1} parent=5 // pred_check_branch
        %204 = sbr.rel (%p201) target = $region40
      $region39: #{network_forward.1} parent=5 // pred_region
        %s205 = ssub.s32 %s12, 1
        // Predicated region
        $region41: #{network_forward.1} parent=39 // pred_check
          %p206 = pneg %p101
        $region42: #{network_forward.1} parent=39 // pred_check_branch
          %208 = sbr.rel (%p206) target = $region44
        $region43: #{network_forward.1} parent=39 // pred_region
          %210 = dma.done [#allocation9], 10240
        $region44: #{network_forward.1} parent=39 // pred_fallthru
          _
        %s211 = smul.u32 28, %s17
        %p212 = scmp.lt.s32.totalorder %s211, 55
        %s213 = scalar_select %p212, %s211, 55
        %s214 = smul.addr %s213, 8
        %s215 = scalar_lea.vmem %s0, %s214
        %p216 = pneg %p38
        %p217 = pneg %p35
        %p218 = pneg %p59
        %p219 = pneg %p56
        %p220 = pneg %p80
        %p221 = pneg %p77
        %p222 = pneg %p101
        %p223 = pneg %p98
        %p224 = pneg %p122
        %p225 = pneg %p119
        %p226 = pneg %p148
        %p227 = pneg %p145
        %s228 = smul.u32 7, %s17
        %p229 = scmp.lt.s32.totalorder %s228, 13
        %s230 = scalar_select %p229, %s228, 13
        %s231 = smul.addr %s230, 8
        %s232 = scalar_lea.vmem %s5, %s231
        %s233 = smul.u32 28, %s17
        %p234 = scmp.lt.s32.totalorder %s233, 55
        %s235 = scalar_select %p234, %s233, 55
        %s236 = smul.addr %s235, 8
        %s237 = scalar_lea.vmem %s0, %s236
        %s238 = smul.u32 28, %s17
        %s239 = smul.u32 7, %s17
        %p240 = scmp.lt.s32.totalorder %s239, 13
        %s241 = scalar_select %p240, %s239, 13
        %s242 = smul.addr %s241, 8
        %s243 = scalar_lea.vmem %s5, %s242
        %s244 = smul.u32 7, %s17
        %v245 = vld [vmem:[%s237] sm:$0xff]
        %v246 = vld [vmem:[%s237 + $0x8] sm:$0xff]
        %v247 = vld [vmem:[%s237 + $0x10] sm:$0xff]
        %v248 = vld [vmem:[%s237 + $0x18] sm:$0xff]
        %v249 = vld [vmem:[%s237 + $0x20] sm:$0xff]
        %v250 = vld [vmem:[%s237 + $0x28] sm:$0xff]
        %v251 = vld [vmem:[%s237 + $0x30] sm:$0xff]
        %v252 = vld [vmem:[%s237 + $0x38] sm:$0xff]
        %v253 = vld [vmem:[%s237 + $0x40] sm:$0xff]
        %v254 = vld [vmem:[%s237 + $0x48] sm:$0xff]
        %v255 = vld [vmem:[%s237 + $0x50] sm:$0xff]
        %v256 = vld [vmem:[%s237 + $0x58] sm:$0xff]
        %v257 = vld [vmem:[%s237 + $0x60] sm:$0xff]
        %v258 = vld [vmem:[%s237 + $0x68] sm:$0xff]
        %v259 = vld [vmem:[%s237 + $0x70] sm:$0xff]
        %v260 = vld [vmem:[%s237 + $0x78] sm:$0xff]
        %v261 = vld [vmem:[%s237 + $0x80] sm:$0xff]
        %v262 = vld [vmem:[%s237 + $0x88] sm:$0xff]
        %v263 = vld [vmem:[%s237 + $0x90] sm:$0xff]
        %v264 = vld [vmem:[%s237 + $0x98] sm:$0xff]
        %v265 = vld [vmem:[%s237 + $0xa0] sm:$0xff]
        %v266 = vld [vmem:[%s237 + $0xa8] sm:$0xff]
        %v267 = vld [vmem:[%s237 + $0xb0] sm:$0xff]
        %v268 = vld [vmem:[%s237 + $0xb8] sm:$0xff]
        %v269 = vld [vmem:[%s237 + $0xc0] sm:$0xff]
        %v270 = vld [vmem:[%s237 + $0xc8] sm:$0xff]
        %v271 = vld [vmem:[%s237 + $0xd0] sm:$0xff]
        %v272 = vld [vmem:[%s237 + $0xd8] sm:$0xff]
        %273 = vst [vmem:[#allocation2] sm:$0xff] %v245
        %274 = vst [vmem:[#allocation2 + $0x8] sm:$0xff] %v246
        %275 = vst [vmem:[#allocation2 + $0x10] sm:$0xff] %v247
        %276 = vst [vmem:[#allocation2 + $0x18] sm:$0xff] %v248
        %277 = vst [vmem:[#allocation2 + $0x20] sm:$0xff] %v249
        %278 = vst [vmem:[#allocation2 + $0x28] sm:$0xff] %v250
        %279 = vst [vmem:[#allocation2 + $0x30] sm:$0xff] %v251
        %280 = vst [vmem:[#allocation2 + $0x38] sm:$0xff] %v252
        %281 = vst [vmem:[#allocation2 + $0x40] sm:$0xff] %v253
        %282 = vst [vmem:[#allocation2 + $0x48] sm:$0xff] %v254
        %283 = vst [vmem:[#allocation2 + $0x50] sm:$0xff] %v255
        %284 = vst [vmem:[#allocation2 + $0x58] sm:$0xff] %v256
        %285 = vst [vmem:[#allocation2 + $0x60] sm:$0xff] %v257
        %286 = vst [vmem:[#allocation2 + $0x68] sm:$0xff] %v258
        %287 = vst [vmem:[#allocation2 + $0x70] sm:$0xff] %v259
        %288 = vst [vmem:[#allocation2 + $0x78] sm:$0xff] %v260
        %289 = vst [vmem:[#allocation2 + $0x80] sm:$0xff] %v261
        %290 = vst [vmem:[#allocation2 + $0x88] sm:$0xff] %v262
        %291 = vst [vmem:[#allocation2 + $0x90] sm:$0xff] %v263
        %292 = vst [vmem:[#allocation2 + $0x98] sm:$0xff] %v264
        %293 = vst [vmem:[#allocation2 + $0xa0] sm:$0xff] %v265
        %294 = vst [vmem:[#allocation2 + $0xa8] sm:$0xff] %v266
        %295 = vst [vmem:[#allocation2 + $0xb0] sm:$0xff] %v267
        %296 = vst [vmem:[#allocation2 + $0xb8] sm:$0xff] %v268
        %297 = vst [vmem:[#allocation2 + $0xc0] sm:$0xff] %v269
        %298 = vst [vmem:[#allocation2 + $0xc8] sm:$0xff] %v270
        %299 = vst [vmem:[#allocation2 + $0xd0] sm:$0xff] %v271
        %300 = vst [vmem:[#allocation2 + $0xd8] sm:$0xff] %v272
        %301 = vst [vmem:[#allocation2 + $0xe0] sm:$0xff] 0.0
        %v302 = vld [vmem:[#allocation2] sm:$0xff]
        %v303 = vld [vmem:[#allocation2 + $0x8] sm:$0xff]
        %v304 = vld [vmem:[#allocation2 + $0x10] sm:$0xff]
        %v305 = vld [vmem:[#allocation2 + $0x18] sm:$0xff]
        %v306 = vld [vmem:[#allocation2 + $0x20] sm:$0xff]
        %v307 = vld [vmem:[#allocation2 + $0x28] sm:$0xff]
        %v308 = vld [vmem:[#allocation2 + $0x30] sm:$0xff]
        %v309 = vld [vmem:[#allocation2 + $0x38] sm:$0xff]
        %v310 = vld [vmem:[#allocation2 + $0x40] sm:$0xff]
        %v311 = vld [vmem:[#allocation2 + $0x48] sm:$0xff]
        %v312 = vld [vmem:[#allocation2 + $0x50] sm:$0xff]
        %v313 = vld [vmem:[#allocation2 + $0x58] sm:$0xff]
        %v314 = vld [vmem:[#allocation2 + $0x60] sm:$0xff]
        %v315 = vld [vmem:[#allocation2 + $0x68] sm:$0xff]
        %v316 = vld [vmem:[#allocation2 + $0x70] sm:$0xff]
        %v317 = vld [vmem:[#allocation2 + $0x78] sm:$0xff]
        %v318 = vld [vmem:[#allocation2 + $0x80] sm:$0xff]
        %v319 = vld [vmem:[#allocation2 + $0x88] sm:$0xff]
        %v320 = vld [vmem:[#allocation2 + $0x90] sm:$0xff]
        %v321 = vld [vmem:[#allocation2 + $0x98] sm:$0xff]
        %v322 = vld [vmem:[#allocation2 + $0xa0] sm:$0xff]
        %v323 = vld [vmem:[#allocation2 + $0xa8] sm:$0xff]
        %v324 = vld [vmem:[#allocation2 + $0xb0] sm:$0xff]
        %v325 = vld [vmem:[#allocation2 + $0xb8] sm:$0xff]
        %v326 = vld [vmem:[#allocation2 + $0xc0] sm:$0xff]
        %v327 = vld [vmem:[#allocation2 + $0xc8] sm:$0xff]
        %v328 = vld [vmem:[#allocation2 + $0xd0] sm:$0xff]
        %v329 = vld [vmem:[#allocation2 + $0xd8] sm:$0xff]
        %v330 = vpack.c.bf16 %v303, %v302
        %v331 = vpack.c.bf16 %v305, %v304
        %v332 = vpack.c.bf16 %v307, %v306
        %v333 = vpack.c.bf16 %v309, %v308
        %v334 = vpack.c.bf16 %v311, %v310
        %v335 = vpack.c.bf16 %v313, %v312
        %v336 = vpack.c.bf16 %v315, %v314
        %v337 = vpack.c.bf16 %v317, %v316
        %v338 = vpack.c.bf16 %v319, %v318
        %v339 = vpack.c.bf16 %v321, %v320
        %v340 = vpack.c.bf16 %v323, %v322
        %v341 = vpack.c.bf16 %v325, %v324
        %v342 = vpack.c.bf16 %v327, %v326
        %v343 = vpack.c.bf16 %v329, %v328
        %v344 = vld [vmem:[%s1] sm:$0xff]
        %v345 = vld [vmem:[%s1 + $0x28] sm:$0xff]
        %v346 = vld [vmem:[%s1 + $0x50] sm:$0xff]
        %v347 = vld [vmem:[%s1 + $0x78] sm:$0xff]
        %v348 = vld [vmem:[%s1 + $0xa0] sm:$0xff]
        %v349 = vld [vmem:[%s1 + $0xc8] sm:$0xff]
        %v350 = vld [vmem:[%s1 + $0xf0] sm:$0xff]
        %v351 = vld [vmem:[%s1 + $0x118] sm:$0xff]
        %v352 = vld [vmem:[%s1 + $0x140] sm:$0xff]
        %v353 = vld [vmem:[%s1 + $0x168] sm:$0xff]
        %v354 = vld [vmem:[%s1 + $0x190] sm:$0xff]
        %v355 = vld [vmem:[%s1 + $0x1b8] sm:$0xff]
        %v356 = vld [vmem:[%s1 + $0x1e0] sm:$0xff]
        %v357 = vld [vmem:[%s1 + $0x208] sm:$0xff]
        %v358 = vld [vmem:[%s1 + $0x230] sm:$0xff]
        %v359 = vld [vmem:[%s1 + $0x258] sm:$0xff]
        %v376 = vunpack.c.l.b16 %v344
        %v377 = vunpack.c.h.b16 %v344
        %v378 = vunpack.c.l.b16 %v345
        %v379 = vunpack.c.h.b16 %v345
        %v380 = vunpack.c.l.b16 %v346
        %v381 = vunpack.c.h.b16 %v346
        %v382 = vunpack.c.l.b16 %v347
        %v383 = vunpack.c.h.b16 %v347
        %v384 = vunpack.c.l.b16 %v348
        %v385 = vunpack.c.h.b16 %v348
        %v386 = vunpack.c.l.b16 %v349
        %v387 = vunpack.c.h.b16 %v349
        %v388 = vunpack.c.l.b16 %v350
        %v389 = vunpack.c.h.b16 %v350
        %v390 = vunpack.c.l.b16 %v351
        %v391 = vunpack.c.h.b16 %v351
        %v392 = vunpack.c.l.b16 %v352
        %v393 = vunpack.c.h.b16 %v352
        %v394 = vunpack.c.l.b16 %v353
        %v395 = vunpack.c.h.b16 %v353
        %v396 = vunpack.c.l.b16 %v354
        %v397 = vunpack.c.h.b16 %v354
        %v398 = vunpack.c.l.b16 %v355
        %v399 = vunpack.c.h.b16 %v355
        %v400 = vunpack.c.l.b16 %v356
        %v401 = vunpack.c.h.b16 %v356
        %v402 = vunpack.c.l.b16 %v357
        %v403 = vunpack.c.h.b16 %v357
        %v404 = vunpack.c.l.b16 %v358
        %v405 = vunpack.c.h.b16 %v358
        %v406 = vunpack.c.l.b16 %v359
        %v407 = vunpack.c.h.b16 %v359
        %v408 = vpack.c.b16 %v378, %v376
        %v409 = vpack.c.b16 %v379, %v377
        %v410 = vpack.c.b16 %v382, %v380
        %v411 = vpack.c.b16 %v383, %v381
        %v412 = vpack.c.b16 %v386, %v384
        %v413 = vpack.c.b16 %v387, %v385
        %v414 = vpack.c.b16 %v390, %v388
        %v415 = vpack.c.b16 %v391, %v389
        %v416 = vpack.c.b16 %v394, %v392
        %v417 = vpack.c.b16 %v395, %v393
        %v418 = vpack.c.b16 %v398, %v396
        %v419 = vpack.c.b16 %v399, %v397
        %v420 = vpack.c.b16 %v402, %v400
        %v421 = vpack.c.b16 %v403, %v401
        %v422 = vpack.c.b16 %v406, %v404
        %v423 = vpack.c.b16 %v407, %v405
        %440 = vmatpush.bf16.msra.mxu0 %v422
        %441 = vmatpush.bf16.msra.mxu0 %v420
        %442 = vmatpush.bf16.msra.mxu0 %v418
        %443 = vmatpush.bf16.msra.mxu0 %v416
        %444 = vmatpush.bf16.msra.mxu0 %v414
        %445 = vmatpush.bf16.msra.mxu0 %v412
        %446 = vmatpush.bf16.msra.mxu0 %v410
        %447 = vmatpush.bf16.msra.mxu0 %v408
        %448 = vmatmul.bf16.gmra.mxu0 %v330
        %v449 = vpop.f32.mrf.mxu0
        %v450 = vadd.f32 0.0, %v449
        %v451 = vpop.f32.mrf.mxu0
        %v452 = vadd.f32 0.0, %v451
        %453 = vmatmul.bf16.gmra.mxu0 %v331
        %v454 = vpop.f32.mrf.mxu0
        %v455 = vadd.f32 0.0, %v454
        %v456 = vpop.f32.mrf.mxu0
        %v457 = vadd.f32 0.0, %v456
        %458 = vmatmul.bf16.gmra.mxu0 %v332
        %v459 = vpop.f32.mrf.mxu0
        %v460 = vadd.f32 0.0, %v459
        %v461 = vpop.f32.mrf.mxu0
        %v462 = vadd.f32 0.0, %v461
        %463 = vmatmul.bf16.gmra.mxu0 %v333
        %v464 = vpop.f32.mrf.mxu0
        %v465 = vadd.f32 0.0, %v464
        %v466 = vpop.f32.mrf.mxu0
        %v467 = vadd.f32 0.0, %v466
        %468 = vmatmul.bf16.gmra.mxu0 %v334
        %v469 = vpop.f32.mrf.mxu0
        %v470 = vadd.f32 0.0, %v469
        %v471 = vpop.f32.mrf.mxu0
        %v472 = vadd.f32 0.0, %v471
        %473 = vmatmul.bf16.gmra.mxu0 %v335
        %v474 = vpop.f32.mrf.mxu0
        %v475 = vadd.f32 0.0, %v474
        %v476 = vpop.f32.mrf.mxu0
        %v477 = vadd.f32 0.0, %v476
        %478 = vmatmul.bf16.gmra.mxu0 %v336
        %v479 = vpop.f32.mrf.mxu0
        %v480 = vadd.f32 0.0, %v479
        %v481 = vpop.f32.mrf.mxu0
        %v482 = vadd.f32 0.0, %v481
        %483 = vmatmul.bf16.gmra.mxu0 %v337
        %v484 = vpop.f32.mrf.mxu0
        %v485 = vadd.f32 0.0, %v484
        %v486 = vpop.f32.mrf.mxu0
        %v487 = vadd.f32 0.0, %v486
        %488 = vmatmul.bf16.gmra.mxu0 %v338
        %v489 = vpop.f32.mrf.mxu0
        %v490 = vadd.f32 0.0, %v489
        %v491 = vpop.f32.mrf.mxu0
        %v492 = vadd.f32 0.0, %v491
        %493 = vmatmul.bf16.gmra.mxu0 %v339
        %v494 = vpop.f32.mrf.mxu0
        %v495 = vadd.f32 0.0, %v494
        %v496 = vpop.f32.mrf.mxu0
        %v497 = vadd.f32 0.0, %v496
        %498 = vmatmul.bf16.gmra.mxu0 %v340
        %v499 = vpop.f32.mrf.mxu0
        %v500 = vadd.f32 0.0, %v499
        %v501 = vpop.f32.mrf.mxu0
        %v502 = vadd.f32 0.0, %v501
        %503 = vmatmul.bf16.gmra.mxu0 %v341
        %v504 = vpop.f32.mrf.mxu0
        %v505 = vadd.f32 0.0, %v504
        %v506 = vpop.f32.mrf.mxu0
        %v507 = vadd.f32 0.0, %v506
        %508 = vmatmul.bf16.gmra.mxu0 %v342
        %v509 = vpop.f32.mrf.mxu0
        %v510 = vadd.f32 0.0, %v509
        %v511 = vpop.f32.mrf.mxu0
        %v512 = vadd.f32 0.0, %v511
        %513 = vmatmul.bf16.gmra.mxu0 %v343
        %v514 = vpop.f32.mrf.mxu0
        %v515 = vadd.f32 0.0, %v514
        %v516 = vpop.f32.mrf.mxu0
        %v517 = vadd.f32 0.0, %v516
        %518 = vdwg.mxu0
        %519 = vmatpush.bf16.msra.mxu0 %v423
        %520 = vmatpush.bf16.msra.mxu0 %v421
        %521 = vmatpush.bf16.msra.mxu0 %v419
        %522 = vmatpush.bf16.msra.mxu0 %v417
        %523 = vmatpush.bf16.msra.mxu0 %v415
        %524 = vmatpush.bf16.msra.mxu0 %v413
        %525 = vmatpush.bf16.msra.mxu0 %v411
        %526 = vmatpush.bf16.msra.mxu0 %v409
        %527 = vmatmul.bf16.gmra.mxu0 %v330
        %v528 = vpop.f32.mrf.mxu0
        %v529 = vadd.f32 0.0, %v528
        %v530 = vpop.f32.mrf.mxu0
        %v531 = vadd.f32 0.0, %v530
        %532 = vmatmul.bf16.gmra.mxu0 %v331
        %v533 = vpop.f32.mrf.mxu0
        %v534 = vadd.f32 0.0, %v533
        %v535 = vpop.f32.mrf.mxu0
        %v536 = vadd.f32 0.0, %v535
        %537 = vmatmul.bf16.gmra.mxu0 %v332
        %v538 = vpop.f32.mrf.mxu0
        %v539 = vadd.f32 0.0, %v538
        %v540 = vpop.f32.mrf.mxu0
        %v541 = vadd.f32 0.0, %v540
        %542 = vmatmul.bf16.gmra.mxu0 %v333
        %v543 = vpop.f32.mrf.mxu0
        %v544 = vadd.f32 0.0, %v543
        %v545 = vpop.f32.mrf.mxu0
        %v546 = vadd.f32 0.0, %v545
        %547 = vmatmul.bf16.gmra.mxu0 %v334
        %v548 = vpop.f32.mrf.mxu0
        %v549 = vadd.f32 0.0, %v548
        %v550 = vpop.f32.mrf.mxu0
        %v551 = vadd.f32 0.0, %v550
        %552 = vmatmul.bf16.gmra.mxu0 %v335
        %v553 = vpop.f32.mrf.mxu0
        %v554 = vadd.f32 0.0, %v553
        %v555 = vpop.f32.mrf.mxu0
        %v556 = vadd.f32 0.0, %v555
        %557 = vmatmul.bf16.gmra.mxu0 %v336
        %v558 = vpop.f32.mrf.mxu0
        %v559 = vadd.f32 0.0, %v558
        %v560 = vpop.f32.mrf.mxu0
        %v561 = vadd.f32 0.0, %v560
        %562 = vmatmul.bf16.gmra.mxu0 %v337
        %v563 = vpop.f32.mrf.mxu0
        %v564 = vadd.f32 0.0, %v563
        %v565 = vpop.f32.mrf.mxu0
        %v566 = vadd.f32 0.0, %v565
        %567 = vmatmul.bf16.gmra.mxu0 %v338
        %v568 = vpop.f32.mrf.mxu0
        %v569 = vadd.f32 0.0, %v568
        %v570 = vpop.f32.mrf.mxu0
        %v571 = vadd.f32 0.0, %v570
        %572 = vmatmul.bf16.gmra.mxu0 %v339
        %v573 = vpop.f32.mrf.mxu0
        %v574 = vadd.f32 0.0, %v573
        %v575 = vpop.f32.mrf.mxu0
        %v576 = vadd.f32 0.0, %v575
        %577 = vmatmul.bf16.gmra.mxu0 %v340
        %v578 = vpop.f32.mrf.mxu0
        %v579 = vadd.f32 0.0, %v578
        %v580 = vpop.f32.mrf.mxu0
        %v581 = vadd.f32 0.0, %v580
        %582 = vmatmul.bf16.gmra.mxu0 %v341
        %v583 = vpop.f32.mrf.mxu0
        %v584 = vadd.f32 0.0, %v583
        %v585 = vpop.f32.mrf.mxu0
        %v586 = vadd.f32 0.0, %v585
        %587 = vmatmul.bf16.gmra.mxu0 %v342
        %v588 = vpop.f32.mrf.mxu0
        %v589 = vadd.f32 0.0, %v588
        %v590 = vpop.f32.mrf.mxu0
        %v591 = vadd.f32 0.0, %v590
        %592 = vmatmul.bf16.gmra.mxu0 %v343
        %v593 = vpop.f32.mrf.mxu0
        %v594 = vadd.f32 0.0, %v593
        %v595 = vpop.f32.mrf.mxu0
        %v596 = vadd.f32 0.0, %v595
        %597 = vdwg.mxu0
        %598 = vst [vmem:[#allocation3] sm:$0xff] %v450
        %599 = vst [vmem:[#allocation3 + $0x8] sm:$0xff] %v529
        %600 = vst [vmem:[#allocation3 + $0x10] sm:$0xff] %v452
        %601 = vst [vmem:[#allocation3 + $0x18] sm:$0xff] %v531
        %602 = vst [vmem:[#allocation3 + $0x20] sm:$0xff] %v455
        %603 = vst [vmem:[#allocation3 + $0x28] sm:$0xff] %v534
        %604 = vst [vmem:[#allocation3 + $0x30] sm:$0xff] %v457
        %605 = vst [vmem:[#allocation3 + $0x38] sm:$0xff] %v536
        %606 = vst [vmem:[#allocation3 + $0x40] sm:$0xff] %v460
        %607 = vst [vmem:[#allocation3 + $0x48] sm:$0xff] %v539
        %608 = vst [vmem:[#allocation3 + $0x50] sm:$0xff] %v462
        %609 = vst [vmem:[#allocation3 + $0x58] sm:$0xff] %v541
        %610 = vst [vmem:[#allocation3 + $0x60] sm:$0xff] %v465
        %611 = vst [vmem:[#allocation3 + $0x68] sm:$0xff] %v544
        %612 = vst [vmem:[#allocation3 + $0x70] sm:$0xff] %v467
        %613 = vst [vmem:[#allocation3 + $0x78] sm:$0xff] %v546
        %614 = vst [vmem:[#allocation3 + $0x80] sm:$0xff] %v470
        %615 = vst [vmem:[#allocation3 + $0x88] sm:$0xff] %v549
        %616 = vst [vmem:[#allocation3 + $0x90] sm:$0xff] %v472
        %617 = vst [vmem:[#allocation3 + $0x98] sm:$0xff] %v551
        %618 = vst [vmem:[#allocation3 + $0xa0] sm:$0xff] %v475
        %619 = vst [vmem:[#allocation3 + $0xa8] sm:$0xff] %v554
        %620 = vst [vmem:[#allocation3 + $0xb0] sm:$0xff] %v477
        %621 = vst [vmem:[#allocation3 + $0xb8] sm:$0xff] %v556
        %622 = vst [vmem:[#allocation3 + $0xc0] sm:$0xff] %v480
        %623 = vst [vmem:[#allocation3 + $0xc8] sm:$0xff] %v559
        %624 = vst [vmem:[#allocation3 + $0xd0] sm:$0xff] %v482
        %625 = vst [vmem:[#allocation3 + $0xd8] sm:$0xff] %v561
        %626 = vst [vmem:[#allocation3 + $0xe0] sm:$0xff] %v485
        %627 = vst [vmem:[#allocation3 + $0xe8] sm:$0xff] %v564
        %628 = vst [vmem:[#allocation3 + $0xf0] sm:$0xff] %v487
        %629 = vst [vmem:[#allocation3 + $0xf8] sm:$0xff] %v566
        %630 = vst [vmem:[#allocation3 + $0x100] sm:$0xff] %v490
        %631 = vst [vmem:[#allocation3 + $0x108] sm:$0xff] %v569
        %632 = vst [vmem:[#allocation3 + $0x110] sm:$0xff] %v492
        %633 = vst [vmem:[#allocation3 + $0x118] sm:$0xff] %v571
        %634 = vst [vmem:[#allocation3 + $0x120] sm:$0xff] %v495
        %635 = vst [vmem:[#allocation3 + $0x128] sm:$0xff] %v574
        %636 = vst [vmem:[#allocation3 + $0x130] sm:$0xff] %v497
        %637 = vst [vmem:[#allocation3 + $0x138] sm:$0xff] %v576
        %638 = vst [vmem:[#allocation3 + $0x140] sm:$0xff] %v500
        %639 = vst [vmem:[#allocation3 + $0x148] sm:$0xff] %v579
        %640 = vst [vmem:[#allocation3 + $0x150] sm:$0xff] %v502
        %641 = vst [vmem:[#allocation3 + $0x158] sm:$0xff] %v581
        %642 = vst [vmem:[#allocation3 + $0x160] sm:$0xff] %v505
        %643 = vst [vmem:[#allocation3 + $0x168] sm:$0xff] %v584
        %644 = vst [vmem:[#allocation3 + $0x170] sm:$0xff] %v507
        %645 = vst [vmem:[#allocation3 + $0x178] sm:$0xff] %v586
        %646 = vst [vmem:[#allocation3 + $0x180] sm:$0xff] %v510
        %647 = vst [vmem:[#allocation3 + $0x188] sm:$0xff] %v589
        %648 = vst [vmem:[#allocation3 + $0x190] sm:$0xff] %v512
        %649 = vst [vmem:[#allocation3 + $0x198] sm:$0xff] %v591
        %650 = vst [vmem:[#allocation3 + $0x1a0] sm:$0xff] %v515
        %651 = vst [vmem:[#allocation3 + $0x1a8] sm:$0xff] %v594
        %652 = vst [vmem:[#allocation3 + $0x1b0] sm:$0xff] %v517
        %653 = vst [vmem:[#allocation3 + $0x1b8] sm:$0xff] %v596
        %v654 = vld [vmem:[#allocation3] sm:$0xff]
        %v655 = vld [vmem:[#allocation3 + $0x8] sm:$0xff]
        %v656 = vld [vmem:[#allocation3 + $0x10] sm:$0xff]
        %v657 = vld [vmem:[#allocation3 + $0x18] sm:$0xff]
        %v658 = vld [vmem:[#allocation3 + $0x20] sm:$0xff]
        %v659 = vld [vmem:[#allocation3 + $0x28] sm:$0xff]
        %v660 = vld [vmem:[#allocation3 + $0x30] sm:$0xff]
        %v661 = vld [vmem:[#allocation3 + $0x38] sm:$0xff]
        %v662 = vld [vmem:[#allocation3 + $0x40] sm:$0xff]
        %v663 = vld [vmem:[#allocation3 + $0x48] sm:$0xff]
        %v664 = vld [vmem:[#allocation3 + $0x50] sm:$0xff]
        %v665 = vld [vmem:[#allocation3 + $0x58] sm:$0xff]
        %v666 = vld [vmem:[#allocation3 + $0x60] sm:$0xff]
        %v667 = vld [vmem:[#allocation3 + $0x68] sm:$0xff]
        %v668 = vld [vmem:[#allocation3 + $0x70] sm:$0xff]
        %v669 = vld [vmem:[#allocation3 + $0x78] sm:$0xff]
        %v670 = vld [vmem:[#allocation3 + $0x80] sm:$0xff]
        %v671 = vld [vmem:[#allocation3 + $0x88] sm:$0xff]
        %v672 = vld [vmem:[#allocation3 + $0x90] sm:$0xff]
        %v673 = vld [vmem:[#allocation3 + $0x98] sm:$0xff]
        %v674 = vld [vmem:[#allocation3 + $0xa0] sm:$0xff]
        %v675 = vld [vmem:[#allocation3 + $0xa8] sm:$0xff]
        %v676 = vld [vmem:[#allocation3 + $0xb0] sm:$0xff]
        %v677 = vld [vmem:[#allocation3 + $0xb8] sm:$0xff]
        %v678 = vld [vmem:[#allocation3 + $0xc0] sm:$0xff]
        %v679 = vld [vmem:[#allocation3 + $0xc8] sm:$0xff]
        %v680 = vld [vmem:[#allocation3 + $0xd0] sm:$0xff]
        %v681 = vld [vmem:[#allocation3 + $0xd8] sm:$0xff]
        %v682 = vld [vmem:[#allocation3 + $0xe0] sm:$0xff]
        %v683 = vld [vmem:[#allocation3 + $0xe8] sm:$0xff]
        %v684 = vld [vmem:[#allocation3 + $0xf0] sm:$0xff]
        %v685 = vld [vmem:[#allocation3 + $0xf8] sm:$0xff]
        %v686 = vld [vmem:[#allocation3 + $0x100] sm:$0xff]
        %v687 = vld [vmem:[#allocation3 + $0x108] sm:$0xff]
        %v688 = vld [vmem:[#allocation3 + $0x110] sm:$0xff]
        %v689 = vld [vmem:[#allocation3 + $0x118] sm:$0xff]
        %v690 = vld [vmem:[#allocation3 + $0x120] sm:$0xff]
        %v691 = vld [vmem:[#allocation3 + $0x128] sm:$0xff]
        %v692 = vld [vmem:[#allocation3 + $0x130] sm:$0xff]
        %v693 = vld [vmem:[#allocation3 + $0x138] sm:$0xff]
        %v694 = vld [vmem:[#allocation3 + $0x140] sm:$0xff]
        %v695 = vld [vmem:[#allocation3 + $0x148] sm:$0xff]
        %v696 = vld [vmem:[#allocation3 + $0x150] sm:$0xff]
        %v697 = vld [vmem:[#allocation3 + $0x158] sm:$0xff]
        %v698 = vld [vmem:[#allocation3 + $0x160] sm:$0xff]
        %v699 = vld [vmem:[#allocation3 + $0x168] sm:$0xff]
        %v700 = vld [vmem:[#allocation3 + $0x170] sm:$0xff]
        %v701 = vld [vmem:[#allocation3 + $0x178] sm:$0xff]
        %v702 = vld [vmem:[#allocation3 + $0x180] sm:$0xff]
        %v703 = vld [vmem:[#allocation3 + $0x188] sm:$0xff]
        %v704 = vld [vmem:[#allocation3 + $0x190] sm:$0xff]
        %v705 = vld [vmem:[#allocation3 + $0x198] sm:$0xff]
        %v706 = vld [vmem:[#allocation3 + $0x1a0] sm:$0xff]
        %v707 = vld [vmem:[#allocation3 + $0x1a8] sm:$0xff]
        %v708 = vld [vmem:[#allocation3 + $0x1b0] sm:$0xff]
        %v709 = vld [vmem:[#allocation3 + $0x1b8] sm:$0xff]
        %v710 = vld [vmem:[#allocation2 + $0x1] sm:$0xff]
        %v711 = vld [vmem:[#allocation2 + $0x9] sm:$0xff]
        %v712 = vld [vmem:[#allocation2 + $0x11] sm:$0xff]
        %v713 = vld [vmem:[#allocation2 + $0x19] sm:$0xff]
        %v714 = vld [vmem:[#allocation2 + $0x21] sm:$0xff]
        %v715 = vld [vmem:[#allocation2 + $0x29] sm:$0xff]
        %v716 = vld [vmem:[#allocation2 + $0x31] sm:$0xff]
        %v717 = vld [vmem:[#allocation2 + $0x39] sm:$0xff]
        %v718 = vld [vmem:[#allocation2 + $0x41] sm:$0xff]
        %v719 = vld [vmem:[#allocation2 + $0x49] sm:$0xff]
        %v720 = vld [vmem:[#allocation2 + $0x51] sm:$0xff]
        %v721 = vld [vmem:[#allocation2 + $0x59] sm:$0xff]
        %v722 = vld [vmem:[#allocation2 + $0x61] sm:$0xff]
        %v723 = vld [vmem:[#allocation2 + $0x69] sm:$0xff]
        %v724 = vld [vmem:[#allocation2 + $0x71] sm:$0xff]
        %v725 = vld [vmem:[#allocation2 + $0x79] sm:$0xff]
        %v726 = vld [vmem:[#allocation2 + $0x81] sm:$0xff]
        %v727 = vld [vmem:[#allocation2 + $0x89] sm:$0xff]
        %v728 = vld [vmem:[#allocation2 + $0x91] sm:$0xff]
        %v729 = vld [vmem:[#allocation2 + $0x99] sm:$0xff]
        %v730 = vld [vmem:[#allocation2 + $0xa1] sm:$0xff]
        %v731 = vld [vmem:[#allocation2 + $0xa9] sm:$0xff]
        %v732 = vld [vmem:[#allocation2 + $0xb1] sm:$0xff]
        %v733 = vld [vmem:[#allocation2 + $0xb9] sm:$0xff]
        %v734 = vld [vmem:[#allocation2 + $0xc1] sm:$0xff]
        %v735 = vld [vmem:[#allocation2 + $0xc9] sm:$0xff]
        %v736 = vld [vmem:[#allocation2 + $0xd1] sm:$0xff]
        %v737 = vld [vmem:[#allocation2 + $0xd9] sm:$0xff]
        %v738 = vpack.c.bf16 %v711, %v710
        %v739 = vpack.c.bf16 %v713, %v712
        %v740 = vpack.c.bf16 %v715, %v714
        %v741 = vpack.c.bf16 %v717, %v716
        %v742 = vpack.c.bf16 %v719, %v718
        %v743 = vpack.c.bf16 %v721, %v720
        %v744 = vpack.c.bf16 %v723, %v722
        %v745 = vpack.c.bf16 %v725, %v724
        %v746 = vpack.c.bf16 %v727, %v726
        %v747 = vpack.c.bf16 %v729, %v728
        %v748 = vpack.c.bf16 %v731, %v730
        %v749 = vpack.c.bf16 %v733, %v732
        %v750 = vpack.c.bf16 %v735, %v734
        %v751 = vpack.c.bf16 %v737, %v736
        %v752 = vld [vmem:[%s1 + $0x8] sm:$0xff]
        %v753 = vld [vmem:[%s1 + $0x30] sm:$0xff]
        %v754 = vld [vmem:[%s1 + $0x58] sm:$0xff]
        %v755 = vld [vmem:[%s1 + $0x80] sm:$0xff]
        %v756 = vld [vmem:[%s1 + $0xa8] sm:$0xff]
        %v757 = vld [vmem:[%s1 + $0xd0] sm:$0xff]
        %v758 = vld [vmem:[%s1 + $0xf8] sm:$0xff]
        %v759 = vld [vmem:[%s1 + $0x120] sm:$0xff]
        %v760 = vld [vmem:[%s1 + $0x148] sm:$0xff]
        %v761 = vld [vmem:[%s1 + $0x170] sm:$0xff]
        %v762 = vld [vmem:[%s1 + $0x198] sm:$0xff]
        %v763 = vld [vmem:[%s1 + $0x1c0] sm:$0xff]
        %v764 = vld [vmem:[%s1 + $0x1e8] sm:$0xff]
        %v765 = vld [vmem:[%s1 + $0x210] sm:$0xff]
        %v766 = vld [vmem:[%s1 + $0x238] sm:$0xff]
        %v767 = vld [vmem:[%s1 + $0x260] sm:$0xff]
        %v784 = vunpack.c.l.b16 %v752
        %v785 = vunpack.c.h.b16 %v752
        %v786 = vunpack.c.l.b16 %v753
        %v787 = vunpack.c.h.b16 %v753
        %v788 = vunpack.c.l.b16 %v754
        %v789 = vunpack.c.h.b16 %v754
        %v790 = vunpack.c.l.b16 %v755
        %v791 = vunpack.c.h.b16 %v755
        %v792 = vunpack.c.l.b16 %v756
        %v793 = vunpack.c.h.b16 %v756
        %v794 = vunpack.c.l.b16 %v757
        %v795 = vunpack.c.h.b16 %v757
        %v796 = vunpack.c.l.b16 %v758
        %v797 = vunpack.c.h.b16 %v758
        %v798 = vunpack.c.l.b16 %v759
        %v799 = vunpack.c.h.b16 %v759
        %v800 = vunpack.c.l.b16 %v760
        %v801 = vunpack.c.h.b16 %v760
        %v802 = vunpack.c.l.b16 %v761
        %v803 = vunpack.c.h.b16 %v761
        %v804 = vunpack.c.l.b16 %v762
        %v805 = vunpack.c.h.b16 %v762
        %v806 = vunpack.c.l.b16 %v763
        %v807 = vunpack.c.h.b16 %v763
        %v808 = vunpack.c.l.b16 %v764
        %v809 = vunpack.c.h.b16 %v764
        %v810 = vunpack.c.l.b16 %v765
        %v811 = vunpack.c.h.b16 %v765
        %v812 = vunpack.c.l.b16 %v766
        %v813 = vunpack.c.h.b16 %v766
        %v814 = vunpack.c.l.b16 %v767
        %v815 = vunpack.c.h.b16 %v767
        %v816 = vpack.c.b16 %v786, %v784
        %v817 = vpack.c.b16 %v787, %v785
        %v818 = vpack.c.b16 %v790, %v788
        %v819 = vpack.c.b16 %v791, %v789
        %v820 = vpack.c.b16 %v794, %v792
        %v821 = vpack.c.b16 %v795, %v793
        %v822 = vpack.c.b16 %v798, %v796
        %v823 = vpack.c.b16 %v799, %v797
        %v824 = vpack.c.b16 %v802, %v800
        %v825 = vpack.c.b16 %v803, %v801
        %v826 = vpack.c.b16 %v806, %v804
        %v827 = vpack.c.b16 %v807, %v805
        %v828 = vpack.c.b16 %v810, %v808
        %v829 = vpack.c.b16 %v811, %v809
        %v830 = vpack.c.b16 %v814, %v812
        %v831 = vpack.c.b16 %v815, %v813
        %848 = vmatpush.bf16.msra.mxu0 %v830
        %849 = vmatpush.bf16.msra.mxu0 %v828
        %850 = vmatpush.bf16.msra.mxu0 %v826
        %851 = vmatpush.bf16.msra.mxu0 %v824
        %852 = vmatpush.bf16.msra.mxu0 %v822
        %853 = vmatpush.bf16.msra.mxu0 %v820
        %854 = vmatpush.bf16.msra.mxu0 %v818
        %855 = vmatpush.bf16.msra.mxu0 %v816
        %856 = vmatmul.bf16.gmra.mxu0 %v738
        %v857 = vpop.f32.mrf.mxu0
        %v858 = vadd.f32 0.0, %v857
        %v859 = vpop.f32.mrf.mxu0
        %v860 = vadd.f32 0.0, %v859
        %861 = vmatmul.bf16.gmra.mxu0 %v739
        %v862 = vpop.f32.mrf.mxu0
        %v863 = vadd.f32 0.0, %v862
        %v864 = vpop.f32.mrf.mxu0
        %v865 = vadd.f32 0.0, %v864
        %866 = vmatmul.bf16.gmra.mxu0 %v740
        %v867 = vpop.f32.mrf.mxu0
        %v868 = vadd.f32 0.0, %v867
        %v869 = vpop.f32.mrf.mxu0
        %v870 = vadd.f32 0.0, %v869
        %871 = vmatmul.bf16.gmra.mxu0 %v741
        %v872 = vpop.f32.mrf.mxu0
        %v873 = vadd.f32 0.0, %v872
        %v874 = vpop.f32.mrf.mxu0
        %v875 = vadd.f32 0.0, %v874
        %876 = vmatmul.bf16.gmra.mxu0 %v742
        %v877 = vpop.f32.mrf.mxu0
        %v878 = vadd.f32 0.0, %v877
        %v879 = vpop.f32.mrf.mxu0
        %v880 = vadd.f32 0.0, %v879
        %881 = vmatmul.bf16.gmra.mxu0 %v743
        %v882 = vpop.f32.mrf.mxu0
        %v883 = vadd.f32 0.0, %v882
        %v884 = vpop.f32.mrf.mxu0
        %v885 = vadd.f32 0.0, %v884
        %886 = vmatmul.bf16.gmra.mxu0 %v744
        %v887 = vpop.f32.mrf.mxu0
        %v888 = vadd.f32 0.0, %v887
        %v889 = vpop.f32.mrf.mxu0
        %v890 = vadd.f32 0.0, %v889
        %891 = vmatmul.bf16.gmra.mxu0 %v745
        %v892 = vpop.f32.mrf.mxu0
        %v893 = vadd.f32 0.0, %v892
        %v894 = vpop.f32.mrf.mxu0
        %v895 = vadd.f32 0.0, %v894
        %896 = vmatmul.bf16.gmra.mxu0 %v746
        %v897 = vpop.f32.mrf.mxu0
        %v898 = vadd.f32 0.0, %v897
        %v899 = vpop.f32.mrf.mxu0
        %v900 = vadd.f32 0.0, %v899
        %901 = vmatmul.bf16.gmra.mxu0 %v747
        %v902 = vpop.f32.mrf.mxu0
        %v903 = vadd.f32 0.0, %v902
        %v904 = vpop.f32.mrf.mxu0
        %v905 = vadd.f32 0.0, %v904
        %906 = vmatmul.bf16.gmra.mxu0 %v748
        %v907 = vpop.f32.mrf.mxu0
        %v908 = vadd.f32 0.0, %v907
        %v909 = vpop.f32.mrf.mxu0
        %v910 = vadd.f32 0.0, %v909
        %911 = vmatmul.bf16.gmra.mxu0 %v749
        %v912 = vpop.f32.mrf.mxu0
        %v913 = vadd.f32 0.0, %v912
        %v914 = vpop.f32.mrf.mxu0
        %v915 = vadd.f32 0.0, %v914
        %916 = vmatmul.bf16.gmra.mxu0 %v750
        %v917 = vpop.f32.mrf.mxu0
        %v918 = vadd.f32 0.0, %v917
        %v919 = vpop.f32.mrf.mxu0
        %v920 = vadd.f32 0.0, %v919
        %921 = vmatmul.bf16.gmra.mxu0 %v751
        %v922 = vpop.f32.mrf.mxu0
        %v923 = vadd.f32 0.0, %v922
        %v924 = vpop.f32.mrf.mxu0
        %v925 = vadd.f32 0.0, %v924
        %926 = vdwg.mxu0
        %927 = vmatpush.bf16.msra.mxu0 %v831
        %928 = vmatpush.bf16.msra.mxu0 %v829
        %929 = vmatpush.bf16.msra.mxu0 %v827
        %930 = vmatpush.bf16.msra.mxu0 %v825
        %931 = vmatpush.bf16.msra.mxu0 %v823
        %932 = vmatpush.bf16.msra.mxu0 %v821
        %933 = vmatpush.bf16.msra.mxu0 %v819
        %934 = vmatpush.bf16.msra.mxu0 %v817
        %935 = vmatmul.bf16.gmra.mxu0 %v738
        %v936 = vpop.f32.mrf.mxu0
        %v937 = vadd.f32 0.0, %v936
        %v938 = vpop.f32.mrf.mxu0
        %v939 = vadd.f32 0.0, %v938
        %940 = vmatmul.bf16.gmra.mxu0 %v739
        %v941 = vpop.f32.mrf.mxu0
        %v942 = vadd.f32 0.0, %v941
        %v943 = vpop.f32.mrf.mxu0
        %v944 = vadd.f32 0.0, %v943
        %945 = vmatmul.bf16.gmra.mxu0 %v740
        %v946 = vpop.f32.mrf.mxu0
        %v947 = vadd.f32 0.0, %v946
        %v948 = vpop.f32.mrf.mxu0
        %v949 = vadd.f32 0.0, %v948
        %950 = vmatmul.bf16.gmra.mxu0 %v741
        %v951 = vpop.f32.mrf.mxu0
        %v952 = vadd.f32 0.0, %v951
        %v953 = vpop.f32.mrf.mxu0
        %v954 = vadd.f32 0.0, %v953
        %955 = vmatmul.bf16.gmra.mxu0 %v742
        %v956 = vpop.f32.mrf.mxu0
        %v957 = vadd.f32 0.0, %v956
        %v958 = vpop.f32.mrf.mxu0
        %v959 = vadd.f32 0.0, %v958
        %960 = vmatmul.bf16.gmra.mxu0 %v743
        %v961 = vpop.f32.mrf.mxu0
        %v962 = vadd.f32 0.0, %v961
        %v963 = vpop.f32.mrf.mxu0
        %v964 = vadd.f32 0.0, %v963
        %965 = vmatmul.bf16.gmra.mxu0 %v744
        %v966 = vpop.f32.mrf.mxu0
        %v967 = vadd.f32 0.0, %v966
        %v968 = vpop.f32.mrf.mxu0
        %v969 = vadd.f32 0.0, %v968
        %970 = vmatmul.bf16.gmra.mxu0 %v745
        %v971 = vpop.f32.mrf.mxu0
        %v972 = vadd.f32 0.0, %v971
        %v973 = vpop.f32.mrf.mxu0
        %v974 = vadd.f32 0.0, %v973
        %975 = vmatmul.bf16.gmra.mxu0 %v746
        %v976 = vpop.f32.mrf.mxu0
        %v977 = vadd.f32 0.0, %v976
        %v978 = vpop.f32.mrf.mxu0
        %v979 = vadd.f32 0.0, %v978
        %980 = vmatmul.bf16.gmra.mxu0 %v747
        %v981 = vpop.f32.mrf.mxu0
        %v982 = vadd.f32 0.0, %v981
        %v983 = vpop.f32.mrf.mxu0
        %v984 = vadd.f32 0.0, %v983
        %985 = vmatmul.bf16.gmra.mxu0 %v748
        %v986 = vpop.f32.mrf.mxu0
        %v987 = vadd.f32 0.0, %v986
        %v988 = vpop.f32.mrf.mxu0
        %v989 = vadd.f32 0.0, %v988
        %990 = vmatmul.bf16.gmra.mxu0 %v749
        %v991 = vpop.f32.mrf.mxu0
        %v992 = vadd.f32 0.0, %v991
        %v993 = vpop.f32.mrf.mxu0
        %v994 = vadd.f32 0.0, %v993
        %995 = vmatmul.bf16.gmra.mxu0 %v750
        %v996 = vpop.f32.mrf.mxu0
        %v997 = vadd.f32 0.0, %v996
        %v998 = vpop.f32.mrf.mxu0
        %v999 = vadd.f32 0.0, %v998
        %1000 = vmatmul.bf16.gmra.mxu0 %v751
        %v1001 = vpop.f32.mrf.mxu0
        %v1002 = vadd.f32 0.0, %v1001
        %v1003 = vpop.f32.mrf.mxu0
        %v1004 = vadd.f32 0.0, %v1003
        %1005 = vdwg.mxu0
        %v1006 = vadd.f32 %v654, %v858
        %v1007 = vadd.f32 %v655, %v937
        %v1008 = vadd.f32 %v656, %v860
        %v1009 = vadd.f32 %v657, %v939
        %v1010 = vadd.f32 %v658, %v863
        %v1011 = vadd.f32 %v659, %v942
        %v1012 = vadd.f32 %v660, %v865
        %v1013 = vadd.f32 %v661, %v944
        %v1014 = vadd.f32 %v662, %v868
        %v1015 = vadd.f32 %v663, %v947
        %v1016 = vadd.f32 %v664, %v870
        %v1017 = vadd.f32 %v665, %v949
        %v1018 = vadd.f32 %v666, %v873
        %v1019 = vadd.f32 %v667, %v952
        %v1020 = vadd.f32 %v668, %v875
        %v1021 = vadd.f32 %v669, %v954
        %v1022 = vadd.f32 %v670, %v878
        %v1023 = vadd.f32 %v671, %v957
        %v1024 = vadd.f32 %v672, %v880
        %v1025 = vadd.f32 %v673, %v959
        %v1026 = vadd.f32 %v674, %v883
        %v1027 = vadd.f32 %v675, %v962
        %v1028 = vadd.f32 %v676, %v885
        %v1029 = vadd.f32 %v677, %v964
        %v1030 = vadd.f32 %v678, %v888
        %v1031 = vadd.f32 %v679, %v967
        %v1032 = vadd.f32 %v680, %v890
        %v1033 = vadd.f32 %v681, %v969
        %v1034 = vadd.f32 %v682, %v893
        %v1035 = vadd.f32 %v683, %v972
        %v1036 = vadd.f32 %v684, %v895
        %v1037 = vadd.f32 %v685, %v974
        %v1038 = vadd.f32 %v686, %v898
        %v1039 = vadd.f32 %v687, %v977
        %v1040 = vadd.f32 %v688, %v900
        %v1041 = vadd.f32 %v689, %v979
        %v1042 = vadd.f32 %v690, %v903
        %v1043 = vadd.f32 %v691, %v982
        %v1044 = vadd.f32 %v692, %v905
        %v1045 = vadd.f32 %v693, %v984
        %v1046 = vadd.f32 %v694, %v908
        %v1047 = vadd.f32 %v695, %v987
        %v1048 = vadd.f32 %v696, %v910
        %v1049 = vadd.f32 %v697, %v989
        %v1050 = vadd.f32 %v698, %v913
        %v1051 = vadd.f32 %v699, %v992
        %v1052 = vadd.f32 %v700, %v915
        %v1053 = vadd.f32 %v701, %v994
        %v1054 = vadd.f32 %v702, %v918
        %v1055 = vadd.f32 %v703, %v997
        %v1056 = vadd.f32 %v704, %v920
        %v1057 = vadd.f32 %v705, %v999
        %v1058 = vadd.f32 %v706, %v923
        %v1059 = vadd.f32 %v707, %v1002
        %v1060 = vadd.f32 %v708, %v925
        %v1061 = vadd.f32 %v709, %v1004
        %1062 = vst [vmem:[#allocation3] sm:$0xff] %v1006
        %1063 = vst [vmem:[#allocation3 + $0x8] sm:$0xff] %v1007
        %1064 = vst [vmem:[#allocation3 + $0x10] sm:$0xff] %v1008
        %1065 = vst [vmem:[#allocation3 + $0x18] sm:$0xff] %v1009
        %1066 = vst [vmem:[#allocation3 + $0x20] sm:$0xff] %v1010
        %1067 = vst [vmem:[#allocation3 + $0x28] sm:$0xff] %v1011
        %1068 = vst [vmem:[#allocation3 + $0x30] sm:$0xff] %v1012
        %1069 = vst [vmem:[#allocation3 + $0x38] sm:$0xff] %v1013
        %1070 = vst [vmem:[#allocation3 + $0x40] sm:$0xff] %v1014
        %1071 = vst [vmem:[#allocation3 + $0x48] sm:$0xff] %v1015
        %1072 = vst [vmem:[#allocation3 + $0x50] sm:$0xff] %v1016
        %1073 = vst [vmem:[#allocation3 + $0x58] sm:$0xff] %v1017
        %1074 = vst [vmem:[#allocation3 + $0x60] sm:$0xff] %v1018
        %1075 = vst [vmem:[#allocation3 + $0x68] sm:$0xff] %v1019
        %1076 = vst [vmem:[#allocation3 + $0x70] sm:$0xff] %v1020
        %1077 = vst [vmem:[#allocation3 + $0x78] sm:$0xff] %v1021
        %1078 = vst [vmem:[#allocation3 + $0x80] sm:$0xff] %v1022
        %1079 = vst [vmem:[#allocation3 + $0x88] sm:$0xff] %v1023
        %1080 = vst [vmem:[#allocation3 + $0x90] sm:$0xff] %v1024
        %1081 = vst [vmem:[#allocation3 + $0x98] sm:$0xff] %v1025
        %1082 = vst [vmem:[#allocation3 + $0xa0] sm:$0xff] %v1026
        %1083 = vst [vmem:[#allocation3 + $0xa8] sm:$0xff] %v1027
        %1084 = vst [vmem:[#allocation3 + $0xb0] sm:$0xff] %v1028
        %1085 = vst [vmem:[#allocation3 + $0xb8] sm:$0xff] %v1029
        %1086 = vst [vmem:[#allocation3 + $0xc0] sm:$0xff] %v1030
        %1087 = vst [vmem:[#allocation3 + $0xc8] sm:$0xff] %v1031
        %1088 = vst [vmem:[#allocation3 + $0xd0] sm:$0xff] %v1032
        %1089 = vst [vmem:[#allocation3 + $0xd8] sm:$0xff] %v1033
        %1090 = vst [vmem:[#allocation3 + $0xe0] sm:$0xff] %v1034
        %1091 = vst [vmem:[#allocation3 + $0xe8] sm:$0xff] %v1035
        %1092 = vst [vmem:[#allocation3 + $0xf0] sm:$0xff] %v1036
        %1093 = vst [vmem:[#allocation3 + $0xf8] sm:$0xff] %v1037
        %1094 = vst [vmem:[#allocation3 + $0x100] sm:$0xff] %v1038
        %1095 = vst [vmem:[#allocation3 + $0x108] sm:$0xff] %v1039
        %1096 = vst [vmem:[#allocation3 + $0x110] sm:$0xff] %v1040
        %1097 = vst [vmem:[#allocation3 + $0x118] sm:$0xff] %v1041
        %1098 = vst [vmem:[#allocation3 + $0x120] sm:$0xff] %v1042
        %1099 = vst [vmem:[#allocation3 + $0x128] sm:$0xff] %v1043
        %1100 = vst [vmem:[#allocation3 + $0x130] sm:$0xff] %v1044
        %1101 = vst [vmem:[#allocation3 + $0x138] sm:$0xff] %v1045
        %1102 = vst [vmem:[#allocation3 + $0x140] sm:$0xff] %v1046
        %1103 = vst [vmem:[#allocation3 + $0x148] sm:$0xff] %v1047
        %1104 = vst [vmem:[#allocation3 + $0x150] sm:$0xff] %v1048
        %1105 = vst [vmem:[#allocation3 + $0x158] sm:$0xff] %v1049
        %1106 = vst [vmem:[#allocation3 + $0x160] sm:$0xff] %v1050
        %1107 = vst [vmem:[#allocation3 + $0x168] sm:$0xff] %v1051
        %1108 = vst [vmem:[#allocation3 + $0x170] sm:$0xff] %v1052
        %1109 = vst [vmem:[#allocation3 + $0x178] sm:$0xff] %v1053
        %1110 = vst [vmem:[#allocation3 + $0x180] sm:$0xff] %v1054
        %1111 = vst [vmem:[#allocation3 + $0x188] sm:$0xff] %v1055
        %1112 = vst [vmem:[#allocation3 + $0x190] sm:$0xff] %v1056
        %1113 = vst [vmem:[#allocation3 + $0x198] sm:$0xff] %v1057
        %1114 = vst [vmem:[#allocation3 + $0x1a0] sm:$0xff] %v1058
        %1115 = vst [vmem:[#allocation3 + $0x1a8] sm:$0xff] %v1059
        %1116 = vst [vmem:[#allocation3 + $0x1b0] sm:$0xff] %v1060
        %1117 = vst [vmem:[#allocation3 + $0x1b8] sm:$0xff] %v1061
        %v1118 = vld [vmem:[#allocation3] sm:$0xff]
        %v1119 = vld [vmem:[#allocation3 + $0x8] sm:$0xff]
        %v1120 = vld [vmem:[#allocation3 + $0x10] sm:$0xff]
        %v1121 = vld [vmem:[#allocation3 + $0x18] sm:$0xff]
        %v1122 = vld [vmem:[#allocation3 + $0x20] sm:$0xff]
        %v1123 = vld [vmem:[#allocation3 + $0x28] sm:$0xff]
        %v1124 = vld [vmem:[#allocation3 + $0x30] sm:$0xff]
        %v1125 = vld [vmem:[#allocation3 + $0x38] sm:$0xff]
        %v1126 = vld [vmem:[#allocation3 + $0x40] sm:$0xff]
        %v1127 = vld [vmem:[#allocation3 + $0x48] sm:$0xff]
        %v1128 = vld [vmem:[#allocation3 + $0x50] sm:$0xff]
        %v1129 = vld [vmem:[#allocation3 + $0x58] sm:$0xff]
        %v1130 = vld [vmem:[#allocation3 + $0x60] sm:$0xff]
        %v1131 = vld [vmem:[#allocation3 + $0x68] sm:$0xff]
        %v1132 = vld [vmem:[#allocation3 + $0x70] sm:$0xff]
        %v1133 = vld [vmem:[#allocation3 + $0x78] sm:$0xff]
        %v1134 = vld [vmem:[#allocation3 + $0x80] sm:$0xff]
        %v1135 = vld [vmem:[#allocation3 + $0x88] sm:$0xff]
        %v1136 = vld [vmem:[#allocation3 + $0x90] sm:$0xff]
        %v1137 = vld [vmem:[#allocation3 + $0x98] sm:$0xff]
        %v1138 = vld [vmem:[#allocation3 + $0xa0] sm:$0xff]
        %v1139 = vld [vmem:[#allocation3 + $0xa8] sm:$0xff]
        %v1140 = vld [vmem:[#allocation3 + $0xb0] sm:$0xff]
        %v1141 = vld [vmem:[#allocation3 + $0xb8] sm:$0xff]
        %v1142 = vld [vmem:[#allocation3 + $0xc0] sm:$0xff]
        %v1143 = vld [vmem:[#allocation3 + $0xc8] sm:$0xff]
        %v1144 = vld [vmem:[#allocation3 + $0xd0] sm:$0xff]
        %v1145 = vld [vmem:[#allocation3 + $0xd8] sm:$0xff]
        %v1146 = vld [vmem:[#allocation3 + $0xe0] sm:$0xff]
        %v1147 = vld [vmem:[#allocation3 + $0xe8] sm:$0xff]
        %v1148 = vld [vmem:[#allocation3 + $0xf0] sm:$0xff]
        %v1149 = vld [vmem:[#allocation3 + $0xf8] sm:$0xff]
        %v1150 = vld [vmem:[#allocation3 + $0x100] sm:$0xff]
        %v1151 = vld [vmem:[#allocation3 + $0x108] sm:$0xff]
        %v1152 = vld [vmem:[#allocation3 + $0x110] sm:$0xff]
        %v1153 = vld [vmem:[#allocation3 + $0x118] sm:$0xff]
        %v1154 = vld [vmem:[#allocation3 + $0x120] sm:$0xff]
        %v1155 = vld [vmem:[#allocation3 + $0x128] sm:$0xff]
        %v1156 = vld [vmem:[#allocation3 + $0x130] sm:$0xff]
        %v1157 = vld [vmem:[#allocation3 + $0x138] sm:$0xff]
        %v1158 = vld [vmem:[#allocation3 + $0x140] sm:$0xff]
        %v1159 = vld [vmem:[#allocation3 + $0x148] sm:$0xff]
        %v1160 = vld [vmem:[#allocation3 + $0x150] sm:$0xff]
        %v1161 = vld [vmem:[#allocation3 + $0x158] sm:$0xff]
        %v1162 = vld [vmem:[#allocation3 + $0x160] sm:$0xff]
        %v1163 = vld [vmem:[#allocation3 + $0x168] sm:$0xff]
        %v1164 = vld [vmem:[#allocation3 + $0x170] sm:$0xff]
        %v1165 = vld [vmem:[#allocation3 + $0x178] sm:$0xff]
        %v1166 = vld [vmem:[#allocation3 + $0x180] sm:$0xff]
        %v1167 = vld [vmem:[#allocation3 + $0x188] sm:$0xff]
        %v1168 = vld [vmem:[#allocation3 + $0x190] sm:$0xff]
        %v1169 = vld [vmem:[#allocation3 + $0x198] sm:$0xff]
        %v1170 = vld [vmem:[#allocation3 + $0x1a0] sm:$0xff]
        %v1171 = vld [vmem:[#allocation3 + $0x1a8] sm:$0xff]
        %v1172 = vld [vmem:[#allocation3 + $0x1b0] sm:$0xff]
        %v1173 = vld [vmem:[#allocation3 + $0x1b8] sm:$0xff]
        %v1174 = vld [vmem:[#allocation2 + $0x2] sm:$0xff]
        %v1175 = vld [vmem:[#allocation2 + $0xa] sm:$0xff]
        %v1176 = vld [vmem:[#allocation2 + $0x12] sm:$0xff]
        %v1177 = vld [vmem:[#allocation2 + $0x1a] sm:$0xff]
        %v1178 = vld [vmem:[#allocation2 + $0x22] sm:$0xff]
        %v1179 = vld [vmem:[#allocation2 + $0x2a] sm:$0xff]
        %v1180 = vld [vmem:[#allocation2 + $0x32] sm:$0xff]
        %v1181 = vld [vmem:[#allocation2 + $0x3a] sm:$0xff]
        %v1182 = vld [vmem:[#allocation2 + $0x42] sm:$0xff]
        %v1183 = vld [vmem:[#allocation2 + $0x4a] sm:$0xff]
        %v1184 = vld [vmem:[#allocation2 + $0x52] sm:$0xff]
        %v1185 = vld [vmem:[#allocation2 + $0x5a] sm:$0xff]
        %v1186 = vld [vmem:[#allocation2 + $0x62] sm:$0xff]
        %v1187 = vld [vmem:[#allocation2 + $0x6a] sm:$0xff]
        %v1188 = vld [vmem:[#allocation2 + $0x72] sm:$0xff]
        %v1189 = vld [vmem:[#allocation2 + $0x7a] sm:$0xff]
        %v1190 = vld [vmem:[#allocation2 + $0x82] sm:$0xff]
        %v1191 = vld [vmem:[#allocation2 + $0x8a] sm:$0xff]
        %v1192 = vld [vmem:[#allocation2 + $0x92] sm:$0xff]
        %v1193 = vld [vmem:[#allocation2 + $0x9a] sm:$0xff]
        %v1194 = vld [vmem:[#allocation2 + $0xa2] sm:$0xff]
        %v1195 = vld [vmem:[#allocation2 + $0xaa] sm:$0xff]
        %v1196 = vld [vmem:[#allocation2 + $0xb2] sm:$0xff]
        %v1197 = vld [vmem:[#allocation2 + $0xba] sm:$0xff]
        %v1198 = vld [vmem:[#allocation2 + $0xc2] sm:$0xff]
        %v1199 = vld [vmem:[#allocation2 + $0xca] sm:$0xff]
        %v1200 = vld [vmem:[#allocation2 + $0xd2] sm:$0xff]
        %v1201 = vld [vmem:[#allocation2 + $0xda] sm:$0xff]
        %v1202 = vpack.c.bf16 %v1175, %v1174
        %v1203 = vpack.c.bf16 %v1177, %v1176
        %v1204 = vpack.c.bf16 %v1179, %v1178
        %v1205 = vpack.c.bf16 %v1181, %v1180
        %v1206 = vpack.c.bf16 %v1183, %v1182
        %v1207 = vpack.c.bf16 %v1185, %v1184
        %v1208 = vpack.c.bf16 %v1187, %v1186
        %v1209 = vpack.c.bf16 %v1189, %v1188
        %v1210 = vpack.c.bf16 %v1191, %v1190
        %v1211 = vpack.c.bf16 %v1193, %v1192
        %v1212 = vpack.c.bf16 %v1195, %v1194
        %v1213 = vpack.c.bf16 %v1197, %v1196
        %v1214 = vpack.c.bf16 %v1199, %v1198
        %v1215 = vpack.c.bf16 %v1201, %v1200
        %v1216 = vld [vmem:[%s1 + $0x10] sm:$0xff]
        %v1217 = vld [vmem:[%s1 + $0x38] sm:$0xff]
        %v1218 = vld [vmem:[%s1 + $0x60] sm:$0xff]
        %v1219 = vld [vmem:[%s1 + $0x88] sm:$0xff]
        %v1220 = vld [vmem:[%s1 + $0xb0] sm:$0xff]
        %v1221 = vld [vmem:[%s1 + $0xd8] sm:$0xff]
        %v1222 = vld [vmem:[%s1 + $0x100] sm:$0xff]
        %v1223 = vld [vmem:[%s1 + $0x128] sm:$0xff]
        %v1224 = vld [vmem:[%s1 + $0x150] sm:$0xff]
        %v1225 = vld [vmem:[%s1 + $0x178] sm:$0xff]
        %v1226 = vld [vmem:[%s1 + $0x1a0] sm:$0xff]
        %v1227 = vld [vmem:[%s1 + $0x1c8] sm:$0xff]
        %v1228 = vld [vmem:[%s1 + $0x1f0] sm:$0xff]
        %v1229 = vld [vmem:[%s1 + $0x218] sm:$0xff]
        %v1230 = vld [vmem:[%s1 + $0x240] sm:$0xff]
        %v1231 = vld [vmem:[%s1 + $0x268] sm:$0xff]
        %v1248 = vunpack.c.l.b16 %v1216
        %v1249 = vunpack.c.h.b16 %v1216
        %v1250 = vunpack.c.l.b16 %v1217
        %v1251 = vunpack.c.h.b16 %v1217
        %v1252 = vunpack.c.l.b16 %v1218
        %v1253 = vunpack.c.h.b16 %v1218
        %v1254 = vunpack.c.l.b16 %v1219
        %v1255 = vunpack.c.h.b16 %v1219
        %v1256 = vunpack.c.l.b16 %v1220
        %v1257 = vunpack.c.h.b16 %v1220
        %v1258 = vunpack.c.l.b16 %v1221
        %v1259 = vunpack.c.h.b16 %v1221
        %v1260 = vunpack.c.l.b16 %v1222
        %v1261 = vunpack.c.h.b16 %v1222
        %v1262 = vunpack.c.l.b16 %v1223
        %v1263 = vunpack.c.h.b16 %v1223
        %v1264 = vunpack.c.l.b16 %v1224
        %v1265 = vunpack.c.h.b16 %v1224
        %v1266 = vunpack.c.l.b16 %v1225
        %v1267 = vunpack.c.h.b16 %v1225
        %v1268 = vunpack.c.l.b16 %v1226
        %v1269 = vunpack.c.h.b16 %v1226
        %v1270 = vunpack.c.l.b16 %v1227
        %v1271 = vunpack.c.h.b16 %v1227
        %v1272 = vunpack.c.l.b16 %v1228
        %v1273 = vunpack.c.h.b16 %v1228
        %v1274 = vunpack.c.l.b16 %v1229
        %v1275 = vunpack.c.h.b16 %v1229
        %v1276 = vunpack.c.l.b16 %v1230
        %v1277 = vunpack.c.h.b16 %v1230
        %v1278 = vunpack.c.l.b16 %v1231
        %v1279 = vunpack.c.h.b16 %v1231
        %v1280 = vpack.c.b16 %v1250, %v1248
        %v1281 = vpack.c.b16 %v1251, %v1249
        %v1282 = vpack.c.b16 %v1254, %v1252
        %v1283 = vpack.c.b16 %v1255, %v1253
        %v1284 = vpack.c.b16 %v1258, %v1256
        %v1285 = vpack.c.b16 %v1259, %v1257
        %v1286 = vpack.c.b16 %v1262, %v1260
        %v1287 = vpack.c.b16 %v1263, %v1261
        %v1288 = vpack.c.b16 %v1266, %v1264
        %v1289 = vpack.c.b16 %v1267, %v1265
        %v1290 = vpack.c.b16 %v1270, %v1268
        %v1291 = vpack.c.b16 %v1271, %v1269
        %v1292 = vpack.c.b16 %v1274, %v1272
        %v1293 = vpack.c.b16 %v1275, %v1273
        %v1294 = vpack.c.b16 %v1278, %v1276
        %v1295 = vpack.c.b16 %v1279, %v1277
        %1312 = vmatpush.bf16.msra.mxu0 %v1294
        %1313 = vmatpush.bf16.msra.mxu0 %v1292
        %1314 = vmatpush.bf16.msra.mxu0 %v1290
        %1315 = vmatpush.bf16.msra.mxu0 %v1288
        %1316 = vmatpush.bf16.msra.mxu0 %v1286
        %1317 = vmatpush.bf16.msra.mxu0 %v1284
        %1318 = vmatpush.bf16.msra.mxu0 %v1282
        %1319 = vmatpush.bf16.msra.mxu0 %v1280
        %1320 = vmatmul.bf16.gmra.mxu0 %v1202
        %v1321 = vpop.f32.mrf.mxu0
        %v1322 = vadd.f32 0.0, %v1321
        %v1323 = vpop.f32.mrf.mxu0
        %v1324 = vadd.f32 0.0, %v1323
        %1325 = vmatmul.bf16.gmra.mxu0 %v1203
        %v1326 = vpop.f32.mrf.mxu0
        %v1327 = vadd.f32 0.0, %v1326
        %v1328 = vpop.f32.mrf.mxu0
        %v1329 = vadd.f32 0.0, %v1328
        %1330 = vmatmul.bf16.gmra.mxu0 %v1204
        %v1331 = vpop.f32.mrf.mxu0
        %v1332 = vadd.f32 0.0, %v1331
        %v1333 = vpop.f32.mrf.mxu0
        %v1334 = vadd.f32 0.0, %v1333
        %1335 = vmatmul.bf16.gmra.mxu0 %v1205
        %v1336 = vpop.f32.mrf.mxu0
        %v1337 = vadd.f32 0.0, %v1336
        %v1338 = vpop.f32.mrf.mxu0
        %v1339 = vadd.f32 0.0, %v1338
        %1340 = vmatmul.bf16.gmra.mxu0 %v1206
        %v1341 = vpop.f32.mrf.mxu0
        %v1342 = vadd.f32 0.0, %v1341
        %v1343 = vpop.f32.mrf.mxu0
        %v1344 = vadd.f32 0.0, %v1343
        %1345 = vmatmul.bf16.gmra.mxu0 %v1207
        %v1346 = vpop.f32.mrf.mxu0
        %v1347 = vadd.f32 0.0, %v1346
        %v1348 = vpop.f32.mrf.mxu0
        %v1349 = vadd.f32 0.0, %v1348
        %1350 = vmatmul.bf16.gmra.mxu0 %v1208
        %v1351 = vpop.f32.mrf.mxu0
        %v1352 = vadd.f32 0.0, %v1351
        %v1353 = vpop.f32.mrf.mxu0
        %v1354 = vadd.f32 0.0, %v1353
        %1355 = vmatmul.bf16.gmra.mxu0 %v1209
        %v1356 = vpop.f32.mrf.mxu0
        %v1357 = vadd.f32 0.0, %v1356
        %v1358 = vpop.f32.mrf.mxu0
        %v1359 = vadd.f32 0.0, %v1358
        %1360 = vmatmul.bf16.gmra.mxu0 %v1210
        %v1361 = vpop.f32.mrf.mxu0
        %v1362 = vadd.f32 0.0, %v1361
        %v1363 = vpop.f32.mrf.mxu0
        %v1364 = vadd.f32 0.0, %v1363
        %1365 = vmatmul.bf16.gmra.mxu0 %v1211
        %v1366 = vpop.f32.mrf.mxu0
        %v1367 = vadd.f32 0.0, %v1366
        %v1368 = vpop.f32.mrf.mxu0
        %v1369 = vadd.f32 0.0, %v1368
        %1370 = vmatmul.bf16.gmra.mxu0 %v1212
        %v1371 = vpop.f32.mrf.mxu0
        %v1372 = vadd.f32 0.0, %v1371
        %v1373 = vpop.f32.mrf.mxu0
        %v1374 = vadd.f32 0.0, %v1373
        %1375 = vmatmul.bf16.gmra.mxu0 %v1213
        %v1376 = vpop.f32.mrf.mxu0
        %v1377 = vadd.f32 0.0, %v1376
        %v1378 = vpop.f32.mrf.mxu0
        %v1379 = vadd.f32 0.0, %v1378
        %1380 = vmatmul.bf16.gmra.mxu0 %v1214
        %v1381 = vpop.f32.mrf.mxu0
        %v1382 = vadd.f32 0.0, %v1381
        %v1383 = vpop.f32.mrf.mxu0
        %v1384 = vadd.f32 0.0, %v1383
        %1385 = vmatmul.bf16.gmra.mxu0 %v1215
        %v1386 = vpop.f32.mrf.mxu0
        %v1387 = vadd.f32 0.0, %v1386
        %v1388 = vpop.f32.mrf.mxu0
        %v1389 = vadd.f32 0.0, %v1388
        %1390 = vdwg.mxu0
        %1391 = vmatpush.bf16.msra.mxu0 %v1295
        %1392 = vmatpush.bf16.msra.mxu0 %v1293
        %1393 = vmatpush.bf16.msra.mxu0 %v1291
        %1394 = vmatpush.bf16.msra.mxu0 %v1289
        %1395 = vmatpush.bf16.msra.mxu0 %v1287
        %1396 = vmatpush.bf16.msra.mxu0 %v1285
        %1397 = vmatpush.bf16.msra.mxu0 %v1283
        %1398 = vmatpush.bf16.msra.mxu0 %v1281
        %1399 = vmatmul.bf16.gmra.mxu0 %v1202
        %v1400 = vpop.f32.mrf.mxu0
        %v1401 = vadd.f32 0.0, %v1400
        %v1402 = vpop.f32.mrf.mxu0
        %v1403 = vadd.f32 0.0, %v1402
        %1404 = vmatmul.bf16.gmra.mxu0 %v1203
        %v1405 = vpop.f32.mrf.mxu0
        %v1406 = vadd.f32 0.0, %v1405
        %v1407 = vpop.f32.mrf.mxu0
        %v1408 = vadd.f32 0.0, %v1407
        %1409 = vmatmul.bf16.gmra.mxu0 %v1204
        %v1410 = vpop.f32.mrf.mxu0
        %v1411 = vadd.f32 0.0, %v1410
        %v1412 = vpop.f32.mrf.mxu0
        %v1413 = vadd.f32 0.0, %v1412
        %1414 = vmatmul.bf16.gmra.mxu0 %v1205
        %v1415 = vpop.f32.mrf.mxu0
        %v1416 = vadd.f32 0.0, %v1415
        %v1417 = vpop.f32.mrf.mxu0
        %v1418 = vadd.f32 0.0, %v1417
        %1419 = vmatmul.bf16.gmra.mxu0 %v1206
        %v1420 = vpop.f32.mrf.mxu0
        %v1421 = vadd.f32 0.0, %v1420
        %v1422 = vpop.f32.mrf.mxu0
        %v1423 = vadd.f32 0.0, %v1422
        %1424 = vmatmul.bf16.gmra.mxu0 %v1207
        %v1425 = vpop.f32.mrf.mxu0
        %v1426 = vadd.f32 0.0, %v1425
        %v1427 = vpop.f32.mrf.mxu0
        %v1428 = vadd.f32 0.0, %v1427
        %1429 = vmatmul.bf16.gmra.mxu0 %v1208
        %v1430 = vpop.f32.mrf.mxu0
        %v1431 = vadd.f32 0.0, %v1430
        %v1432 = vpop.f32.mrf.mxu0
        %v1433 = vadd.f32 0.0, %v1432
        %1434 = vmatmul.bf16.gmra.mxu0 %v1209
        %v1435 = vpop.f32.mrf.mxu0
        %v1436 = vadd.f32 0.0, %v1435
        %v1437 = vpop.f32.mrf.mxu0
        %v1438 = vadd.f32 0.0, %v1437
        %1439 = vmatmul.bf16.gmra.mxu0 %v1210
        %v1440 = vpop.f32.mrf.mxu0
        %v1441 = vadd.f32 0.0, %v1440
        %v1442 = vpop.f32.mrf.mxu0
        %v1443 = vadd.f32 0.0, %v1442
        %1444 = vmatmul.bf16.gmra.mxu0 %v1211
        %v1445 = vpop.f32.mrf.mxu0
        %v1446 = vadd.f32 0.0, %v1445
        %v1447 = vpop.f32.mrf.mxu0
        %v1448 = vadd.f32 0.0, %v1447
        %1449 = vmatmul.bf16.gmra.mxu0 %v1212
        %v1450 = vpop.f32.mrf.mxu0
        %v1451 = vadd.f32 0.0, %v1450
        %v1452 = vpop.f32.mrf.mxu0
        %v1453 = vadd.f32 0.0, %v1452
        %1454 = vmatmul.bf16.gmra.mxu0 %v1213
        %v1455 = vpop.f32.mrf.mxu0
        %v1456 = vadd.f32 0.0, %v1455
        %v1457 = vpop.f32.mrf.mxu0
        %v1458 = vadd.f32 0.0, %v1457
        %1459 = vmatmul.bf16.gmra.mxu0 %v1214
        %v1460 = vpop.f32.mrf.mxu0
        %v1461 = vadd.f32 0.0, %v1460
        %v1462 = vpop.f32.mrf.mxu0
        %v1463 = vadd.f32 0.0, %v1462
        %1464 = vmatmul.bf16.gmra.mxu0 %v1215
        %v1465 = vpop.f32.mrf.mxu0
        %v1466 = vadd.f32 0.0, %v1465
        %v1467 = vpop.f32.mrf.mxu0
        %v1468 = vadd.f32 0.0, %v1467
        %1469 = vdwg.mxu0
        %v1470 = vadd.f32 %v1118, %v1322
        %v1471 = vadd.f32 %v1119, %v1401
        %v1472 = vadd.f32 %v1120, %v1324
        %v1473 = vadd.f32 %v1121, %v1403
        %v1474 = vadd.f32 %v1122, %v1327
        %v1475 = vadd.f32 %v1123, %v1406
        %v1476 = vadd.f32 %v1124, %v1329
        %v1477 = vadd.f32 %v1125, %v1408
        %v1478 = vadd.f32 %v1126, %v1332
        %v1479 = vadd.f32 %v1127, %v1411
        %v1480 = vadd.f32 %v1128, %v1334
        %v1481 = vadd.f32 %v1129, %v1413
        %v1482 = vadd.f32 %v1130, %v1337
        %v1483 = vadd.f32 %v1131, %v1416
        %v1484 = vadd.f32 %v1132, %v1339
        %v1485 = vadd.f32 %v1133, %v1418
        %v1486 = vadd.f32 %v1134, %v1342
        %v1487 = vadd.f32 %v1135, %v1421
        %v1488 = vadd.f32 %v1136, %v1344
        %v1489 = vadd.f32 %v1137, %v1423
        %v1490 = vadd.f32 %v1138, %v1347
        %v1491 = vadd.f32 %v1139, %v1426
        %v1492 = vadd.f32 %v1140, %v1349
        %v1493 = vadd.f32 %v1141, %v1428
        %v1494 = vadd.f32 %v1142, %v1352
        %v1495 = vadd.f32 %v1143, %v1431
        %v1496 = vadd.f32 %v1144, %v1354
        %v1497 = vadd.f32 %v1145, %v1433
        %v1498 = vadd.f32 %v1146, %v1357
        %v1499 = vadd.f32 %v1147, %v1436
        %v1500 = vadd.f32 %v1148, %v1359
        %v1501 = vadd.f32 %v1149, %v1438
        %v1502 = vadd.f32 %v1150, %v1362
        %v1503 = vadd.f32 %v1151, %v1441
        %v1504 = vadd.f32 %v1152, %v1364
        %v1505 = vadd.f32 %v1153, %v1443
        %v1506 = vadd.f32 %v1154, %v1367
        %v1507 = vadd.f32 %v1155, %v1446
        %v1508 = vadd.f32 %v1156, %v1369
        %v1509 = vadd.f32 %v1157, %v1448
        %v1510 = vadd.f32 %v1158, %v1372
        %v1511 = vadd.f32 %v1159, %v1451
        %v1512 = vadd.f32 %v1160, %v1374
        %v1513 = vadd.f32 %v1161, %v1453
        %v1514 = vadd.f32 %v1162, %v1377
        %v1515 = vadd.f32 %v1163, %v1456
        %v1516 = vadd.f32 %v1164, %v1379
        %v1517 = vadd.f32 %v1165, %v1458
        %v1518 = vadd.f32 %v1166, %v1382
        %v1519 = vadd.f32 %v1167, %v1461
        %v1520 = vadd.f32 %v1168, %v1384
        %v1521 = vadd.f32 %v1169, %v1463
        %v1522 = vadd.f32 %v1170, %v1387
        %v1523 = vadd.f32 %v1171, %v1466
        %v1524 = vadd.f32 %v1172, %v1389
        %v1525 = vadd.f32 %v1173, %v1468
        %1526 = vst [vmem:[#allocation3] sm:$0xff] %v1470
        %1527 = vst [vmem:[#allocation3 + $0x8] sm:$0xff] %v1471
        %1528 = vst [vmem:[#allocation3 + $0x10] sm:$0xff] %v1472
        %1529 = vst [vmem:[#allocation3 + $0x18] sm:$0xff] %v1473
        %1530 = vst [vmem:[#allocation3 + $0x20] sm:$0xff] %v1474
        %1531 = vst [vmem:[#allocation3 + $0x28] sm:$0xff] %v1475
        %1532 = vst [vmem:[#allocation3 + $0x30] sm:$0xff] %v1476
        %1533 = vst [vmem:[#allocation3 + $0x38] sm:$0xff] %v1477
        %1534 = vst [vmem:[#allocation3 + $0x40] sm:$0xff] %v1478
        %1535 = vst [vmem:[#allocation3 + $0x48] sm:$0xff] %v1479
        %1536 = vst [vmem:[#allocation3 + $0x50] sm:$0xff] %v1480
        %1537 = vst [vmem:[#allocation3 + $0x58] sm:$0xff] %v1481
        %1538 = vst [vmem:[#allocation3 + $0x60] sm:$0xff] %v1482
        %1539 = vst [vmem:[#allocation3 + $0x68] sm:$0xff] %v1483
        %1540 = vst [vmem:[#allocation3 + $0x70] sm:$0xff] %v1484
        %1541 = vst [vmem:[#allocation3 + $0x78] sm:$0xff] %v1485
        %1542 = vst [vmem:[#allocation3 + $0x80] sm:$0xff] %v1486
        %1543 = vst [vmem:[#allocation3 + $0x88] sm:$0xff] %v1487
        %1544 = vst [vmem:[#allocation3 + $0x90] sm:$0xff] %v1488
        %1545 = vst [vmem:[#allocation3 + $0x98] sm:$0xff] %v1489
        %1546 = vst [vmem:[#allocation3 + $0xa0] sm:$0xff] %v1490
        %1547 = vst [vmem:[#allocation3 + $0xa8] sm:$0xff] %v1491
        %1548 = vst [vmem:[#allocation3 + $0xb0] sm:$0xff] %v1492
        %1549 = vst [vmem:[#allocation3 + $0xb8] sm:$0xff] %v1493
        %1550 = vst [vmem:[#allocation3 + $0xc0] sm:$0xff] %v1494
        %1551 = vst [vmem:[#allocation3 + $0xc8] sm:$0xff] %v1495
        %1552 = vst [vmem:[#allocation3 + $0xd0] sm:$0xff] %v1496
        %1553 = vst [vmem:[#allocation3 + $0xd8] sm:$0xff] %v1497
        %1554 = vst [vmem:[#allocation3 + $0xe0] sm:$0xff] %v1498
        %1555 = vst [vmem:[#allocation3 + $0xe8] sm:$0xff] %v1499
        %1556 = vst [vmem:[#allocation3 + $0xf0] sm:$0xff] %v1500
        %1557 = vst [vmem:[#allocation3 + $0xf8] sm:$0xff] %v1501
        %1558 = vst [vmem:[#allocation3 + $0x100] sm:$0xff] %v1502
        %1559 = vst [vmem:[#allocation3 + $0x108] sm:$0xff] %v1503
        %1560 = vst [vmem:[#allocation3 + $0x110] sm:$0xff] %v1504
        %1561 = vst [vmem:[#allocation3 + $0x118] sm:$0xff] %v1505
        %1562 = vst [vmem:[#allocation3 + $0x120] sm:$0xff] %v1506
        %1563 = vst [vmem:[#allocation3 + $0x128] sm:$0xff] %v1507
        %1564 = vst [vmem:[#allocation3 + $0x130] sm:$0xff] %v1508
        %1565 = vst [vmem:[#allocation3 + $0x138] sm:$0xff] %v1509
        %1566 = vst [vmem:[#allocation3 + $0x140] sm:$0xff] %v1510
        %1567 = vst [vmem:[#allocation3 + $0x148] sm:$0xff] %v1511
        %1568 = vst [vmem:[#allocation3 + $0x150] sm:$0xff] %v1512
        %1569 = vst [vmem:[#allocation3 + $0x158] sm:$0xff] %v1513
        %1570 = vst [vmem:[#allocation3 + $0x160] sm:$0xff] %v1514
        %1571 = vst [vmem:[#allocation3 + $0x168] sm:$0xff] %v1515
        %1572 = vst [vmem:[#allocation3 + $0x170] sm:$0xff] %v1516
        %1573 = vst [vmem:[#allocation3 + $0x178] sm:$0xff] %v1517
        %1574 = vst [vmem:[#allocation3 + $0x180] sm:$0xff] %v1518
        %1575 = vst [vmem:[#allocation3 + $0x188] sm:$0xff] %v1519
        %1576 = vst [vmem:[#allocation3 + $0x190] sm:$0xff] %v1520
        %1577 = vst [vmem:[#allocation3 + $0x198] sm:$0xff] %v1521
        %1578 = vst [vmem:[#allocation3 + $0x1a0] sm:$0xff] %v1522
        %1579 = vst [vmem:[#allocation3 + $0x1a8] sm:$0xff] %v1523
        %1580 = vst [vmem:[#allocation3 + $0x1b0] sm:$0xff] %v1524
        %1581 = vst [vmem:[#allocation3 + $0x1b8] sm:$0xff] %v1525
        %v1582 = vld [vmem:[#allocation3] sm:$0xff]
        %v1583 = vld [vmem:[#allocation3 + $0x8] sm:$0xff]
        %v1584 = vld [vmem:[#allocation3 + $0x10] sm:$0xff]
        %v1585 = vld [vmem:[#allocation3 + $0x18] sm:$0xff]
        %v1586 = vld [vmem:[#allocation3 + $0x20] sm:$0xff]
        %v1587 = vld [vmem:[#allocation3 + $0x28] sm:$0xff]
        %v1588 = vld [vmem:[#allocation3 + $0x30] sm:$0xff]
        %v1589 = vld [vmem:[#allocation3 + $0x38] sm:$0xff]
        %v1590 = vld [vmem:[#allocation3 + $0x40] sm:$0xff]
        %v1591 = vld [vmem:[#allocation3 + $0x48] sm:$0xff]
        %v1592 = vld [vmem:[#allocation3 + $0x50] sm:$0xff]
        %v1593 = vld [vmem:[#allocation3 + $0x58] sm:$0xff]
        %v1594 = vld [vmem:[#allocation3 + $0x60] sm:$0xff]
        %v1595 = vld [vmem:[#allocation3 + $0x68] sm:$0xff]
        %v1596 = vld [vmem:[#allocation3 + $0x70] sm:$0xff]
        %v1597 = vld [vmem:[#allocation3 + $0x78] sm:$0xff]
        %v1598 = vld [vmem:[#allocation3 + $0x80] sm:$0xff]
        %v1599 = vld [vmem:[#allocation3 + $0x88] sm:$0xff]
        %v1600 = vld [vmem:[#allocation3 + $0x90] sm:$0xff]
        %v1601 = vld [vmem:[#allocation3 + $0x98] sm:$0xff]
        %v1602 = vld [vmem:[#allocation3 + $0xa0] sm:$0xff]
        %v1603 = vld [vmem:[#allocation3 + $0xa8] sm:$0xff]
        %v1604 = vld [vmem:[#allocation3 + $0xb0] sm:$0xff]
        %v1605 = vld [vmem:[#allocation3 + $0xb8] sm:$0xff]
        %v1606 = vld [vmem:[#allocation3 + $0xc0] sm:$0xff]
        %v1607 = vld [vmem:[#allocation3 + $0xc8] sm:$0xff]
        %v1608 = vld [vmem:[#allocation3 + $0xd0] sm:$0xff]
        %v1609 = vld [vmem:[#allocation3 + $0xd8] sm:$0xff]
        %v1610 = vld [vmem:[#allocation3 + $0xe0] sm:$0xff]
        %v1611 = vld [vmem:[#allocation3 + $0xe8] sm:$0xff]
        %v1612 = vld [vmem:[#allocation3 + $0xf0] sm:$0xff]
        %v1613 = vld [vmem:[#allocation3 + $0xf8] sm:$0xff]
        %v1614 = vld [vmem:[#allocation3 + $0x100] sm:$0xff]
        %v1615 = vld [vmem:[#allocation3 + $0x108] sm:$0xff]
        %v1616 = vld [vmem:[#allocation3 + $0x110] sm:$0xff]
        %v1617 = vld [vmem:[#allocation3 + $0x118] sm:$0xff]
        %v1618 = vld [vmem:[#allocation3 + $0x120] sm:$0xff]
        %v1619 = vld [vmem:[#allocation3 + $0x128] sm:$0xff]
        %v1620 = vld [vmem:[#allocation3 + $0x130] sm:$0xff]
        %v1621 = vld [vmem:[#allocation3 + $0x138] sm:$0xff]
        %v1622 = vld [vmem:[#allocation3 + $0x140] sm:$0xff]
        %v1623 = vld [vmem:[#allocation3 + $0x148] sm:$0xff]
        %v1624 = vld [vmem:[#allocation3 + $0x150] sm:$0xff]
        %v1625 = vld [vmem:[#allocation3 + $0x158] sm:$0xff]
        %v1626 = vld [vmem:[#allocation3 + $0x160] sm:$0xff]
        %v1627 = vld [vmem:[#allocation3 + $0x168] sm:$0xff]
        %v1628 = vld [vmem:[#allocation3 + $0x170] sm:$0xff]
        %v1629 = vld [vmem:[#allocation3 + $0x178] sm:$0xff]
        %v1630 = vld [vmem:[#allocation3 + $0x180] sm:$0xff]
        %v1631 = vld [vmem:[#allocation3 + $0x188] sm:$0xff]
        %v1632 = vld [vmem:[#allocation3 + $0x190] sm:$0xff]
        %v1633 = vld [vmem:[#allocation3 + $0x198] sm:$0xff]
        %v1634 = vld [vmem:[#allocation3 + $0x1a0] sm:$0xff]
        %v1635 = vld [vmem:[#allocation3 + $0x1a8] sm:$0xff]
        %v1636 = vld [vmem:[#allocation3 + $0x1b0] sm:$0xff]
        %v1637 = vld [vmem:[#allocation3 + $0x1b8] sm:$0xff]
        %v1638 = vld [vmem:[#allocation2 + $0x3] sm:$0xff]
        %v1639 = vld [vmem:[#allocation2 + $0xb] sm:$0xff]
        %v1640 = vld [vmem:[#allocation2 + $0x13] sm:$0xff]
        %v1641 = vld [vmem:[#allocation2 + $0x1b] sm:$0xff]
        %v1642 = vld [vmem:[#allocation2 + $0x23] sm:$0xff]
        %v1643 = vld [vmem:[#allocation2 + $0x2b] sm:$0xff]
        %v1644 = vld [vmem:[#allocation2 + $0x33] sm:$0xff]
        %v1645 = vld [vmem:[#allocation2 + $0x3b] sm:$0xff]
        %v1646 = vld [vmem:[#allocation2 + $0x43] sm:$0xff]
        %v1647 = vld [vmem:[#allocation2 + $0x4b] sm:$0xff]
        %v1648 = vld [vmem:[#allocation2 + $0x53] sm:$0xff]
        %v1649 = vld [vmem:[#allocation2 + $0x5b] sm:$0xff]
        %v1650 = vld [vmem:[#allocation2 + $0x63] sm:$0xff]
        %v1651 = vld [vmem:[#allocation2 + $0x6b] sm:$0xff]
        %v1652 = vld [vmem:[#allocation2 + $0x73] sm:$0xff]
        %v1653 = vld [vmem:[#allocation2 + $0x7b] sm:$0xff]
        %v1654 = vld [vmem:[#allocation2 + $0x83] sm:$0xff]
        %v1655 = vld [vmem:[#allocation2 + $0x8b] sm:$0xff]
        %v1656 = vld [vmem:[#allocation2 + $0x93] sm:$0xff]
        %v1657 = vld [vmem:[#allocation2 + $0x9b] sm:$0xff]
        %v1658 = vld [vmem:[#allocation2 + $0xa3] sm:$0xff]
        %v1659 = vld [vmem:[#allocation2 + $0xab] sm:$0xff]
        %v1660 = vld [vmem:[#allocation2 + $0xb3] sm:$0xff]
        %v1661 = vld [vmem:[#allocation2 + $0xbb] sm:$0xff]
        %v1662 = vld [vmem:[#allocation2 + $0xc3] sm:$0xff]
        %v1663 = vld [vmem:[#allocation2 + $0xcb] sm:$0xff]
        %v1664 = vld [vmem:[#allocation2 + $0xd3] sm:$0xff]
        %v1665 = vld [vmem:[#allocation2 + $0xdb] sm:$0xff]
        %v1666 = vpack.c.bf16 %v1639, %v1638
        %v1667 = vpack.c.bf16 %v1641, %v1640
        %v1668 = vpack.c.bf16 %v1643, %v1642
        %v1669 = vpack.c.bf16 %v1645, %v1644
        %v1670 = vpack.c.bf16 %v1647, %v1646
        %v1671 = vpack.c.bf16 %v1649, %v1648
        %v1672 = vpack.c.bf16 %v1651, %v1650
        %v1673 = vpack.c.bf16 %v1653, %v1652
        %v1674 = vpack.c.bf16 %v1655, %v1654
        %v1675 = vpack.c.bf16 %v1657, %v1656
        %v1676 = vpack.c.bf16 %v1659, %v1658
        %v1677 = vpack.c.bf16 %v1661, %v1660
        %v1678 = vpack.c.bf16 %v1663, %v1662
        %v1679 = vpack.c.bf16 %v1665, %v1664
        %v1680 = vld [vmem:[%s1 + $0x18] sm:$0xff]
        %v1681 = vld [vmem:[%s1 + $0x40] sm:$0xff]
        %v1682 = vld [vmem:[%s1 + $0x68] sm:$0xff]
        %v1683 = vld [vmem:[%s1 + $0x90] sm:$0xff]
        %v1684 = vld [vmem:[%s1 + $0xb8] sm:$0xff]
        %v1685 = vld [vmem:[%s1 + $0xe0] sm:$0xff]
        %v1686 = vld [vmem:[%s1 + $0x108] sm:$0xff]
        %v1687 = vld [vmem:[%s1 + $0x130] sm:$0xff]
        %v1688 = vld [vmem:[%s1 + $0x158] sm:$0xff]
        %v1689 = vld [vmem:[%s1 + $0x180] sm:$0xff]
        %v1690 = vld [vmem:[%s1 + $0x1a8] sm:$0xff]
        %v1691 = vld [vmem:[%s1 + $0x1d0] sm:$0xff]
        %v1692 = vld [vmem:[%s1 + $0x1f8] sm:$0xff]
        %v1693 = vld [vmem:[%s1 + $0x220] sm:$0xff]
        %v1694 = vld [vmem:[%s1 + $0x248] sm:$0xff]
        %v1695 = vld [vmem:[%s1 + $0x270] sm:$0xff]
        %v1712 = vunpack.c.l.b16 %v1680
        %v1713 = vunpack.c.h.b16 %v1680
        %v1714 = vunpack.c.l.b16 %v1681
        %v1715 = vunpack.c.h.b16 %v1681
        %v1716 = vunpack.c.l.b16 %v1682
        %v1717 = vunpack.c.h.b16 %v1682
        %v1718 = vunpack.c.l.b16 %v1683
        %v1719 = vunpack.c.h.b16 %v1683
        %v1720 = vunpack.c.l.b16 %v1684
        %v1721 = vunpack.c.h.b16 %v1684
        %v1722 = vunpack.c.l.b16 %v1685
        %v1723 = vunpack.c.h.b16 %v1685
        %v1724 = vunpack.c.l.b16 %v1686
        %v1725 = vunpack.c.h.b16 %v1686
        %v1726 = vunpack.c.l.b16 %v1687
        %v1727 = vunpack.c.h.b16 %v1687
        %v1728 = vunpack.c.l.b16 %v1688
        %v1729 = vunpack.c.h.b16 %v1688
        %v1730 = vunpack.c.l.b16 %v1689
        %v1731 = vunpack.c.h.b16 %v1689
        %v1732 = vunpack.c.l.b16 %v1690
        %v1733 = vunpack.c.h.b16 %v1690
        %v1734 = vunpack.c.l.b16 %v1691
        %v1735 = vunpack.c.h.b16 %v1691
        %v1736 = vunpack.c.l.b16 %v1692
        %v1737 = vunpack.c.h.b16 %v1692
        %v1738 = vunpack.c.l.b16 %v1693
        %v1739 = vunpack.c.h.b16 %v1693
        %v1740 = vunpack.c.l.b16 %v1694
        %v1741 = vunpack.c.h.b16 %v1694
        %v1742 = vunpack.c.l.b16 %v1695
        %v1743 = vunpack.c.h.b16 %v1695
        %v1744 = vpack.c.b16 %v1714, %v1712
        %v1745 = vpack.c.b16 %v1715, %v1713
        %v1746 = vpack.c.b16 %v1718, %v1716
        %v1747 = vpack.c.b16 %v1719, %v1717
        %v1748 = vpack.c.b16 %v1722, %v1720
        %v1749 = vpack.c.b16 %v1723, %v1721
        %v1750 = vpack.c.b16 %v1726, %v1724
        %v1751 = vpack.c.b16 %v1727, %v1725
        %v1752 = vpack.c.b16 %v1730, %v1728
        %v1753 = vpack.c.b16 %v1731, %v1729
        %v1754 = vpack.c.b16 %v1734, %v1732
        %v1755 = vpack.c.b16 %v1735, %v1733
        %v1756 = vpack.c.b16 %v1738, %v1736
        %v1757 = vpack.c.b16 %v1739, %v1737
        %v1758 = vpack.c.b16 %v1742, %v1740
        %v1759 = vpack.c.b16 %v1743, %v1741
        %1776 = vmatpush.bf16.msra.mxu0 %v1758
        %1777 = vmatpush.bf16.msra.mxu0 %v1756
        %1778 = vmatpush.bf16.msra.mxu0 %v1754
        %1779 = vmatpush.bf16.msra.mxu0 %v1752
        %1780 = vmatpush.bf16.msra.mxu0 %v1750
        %1781 = vmatpush.bf16.msra.mxu0 %v1748
        %1782 = vmatpush.bf16.msra.mxu0 %v1746
        %1783 = vmatpush.bf16.msra.mxu0 %v1744
        %1784 = vmatmul.bf16.gmra.mxu0 %v1666
        %v1785 = vpop.f32.mrf.mxu0
        %v1786 = vadd.f32 0.0, %v1785
        %v1787 = vpop.f32.mrf.mxu0
        %v1788 = vadd.f32 0.0, %v1787
        %1789 = vmatmul.bf16.gmra.mxu0 %v1667
        %v1790 = vpop.f32.mrf.mxu0
        %v1791 = vadd.f32 0.0, %v1790
        %v1792 = vpop.f32.mrf.mxu0
        %v1793 = vadd.f32 0.0, %v1792
        %1794 = vmatmul.bf16.gmra.mxu0 %v1668
        %v1795 = vpop.f32.mrf.mxu0
        %v1796 = vadd.f32 0.0, %v1795
        %v1797 = vpop.f32.mrf.mxu0
        %v1798 = vadd.f32 0.0, %v1797
        %1799 = vmatmul.bf16.gmra.mxu0 %v1669
        %v1800 = vpop.f32.mrf.mxu0
        %v1801 = vadd.f32 0.0, %v1800
        %v1802 = vpop.f32.mrf.mxu0
        %v1803 = vadd.f32 0.0, %v1802
        %1804 = vmatmul.bf16.gmra.mxu0 %v1670
        %v1805 = vpop.f32.mrf.mxu0
        %v1806 = vadd.f32 0.0, %v1805
        %v1807 = vpop.f32.mrf.mxu0
        %v1808 = vadd.f32 0.0, %v1807
        %1809 = vmatmul.bf16.gmra.mxu0 %v1671
        %v1810 = vpop.f32.mrf.mxu0
        %v1811 = vadd.f32 0.0, %v1810
        %v1812 = vpop.f32.mrf.mxu0
        %v1813 = vadd.f32 0.0, %v1812
        %1814 = vmatmul.bf16.gmra.mxu0 %v1672
        %v1815 = vpop.f32.mrf.mxu0
        %v1816 = vadd.f32 0.0, %v1815
        %v1817 = vpop.f32.mrf.mxu0
        %v1818 = vadd.f32 0.0, %v1817
        %1819 = vmatmul.bf16.gmra.mxu0 %v1673
        %v1820 = vpop.f32.mrf.mxu0
        %v1821 = vadd.f32 0.0, %v1820
        %v1822 = vpop.f32.mrf.mxu0
        %v1823 = vadd.f32 0.0, %v1822
        %1824 = vmatmul.bf16.gmra.mxu0 %v1674
        %v1825 = vpop.f32.mrf.mxu0
        %v1826 = vadd.f32 0.0, %v1825
        %v1827 = vpop.f32.mrf.mxu0
        %v1828 = vadd.f32 0.0, %v1827
        %1829 = vmatmul.bf16.gmra.mxu0 %v1675
        %v1830 = vpop.f32.mrf.mxu0
        %v1831 = vadd.f32 0.0, %v1830
        %v1832 = vpop.f32.mrf.mxu0
        %v1833 = vadd.f32 0.0, %v1832
        %1834 = vmatmul.bf16.gmra.mxu0 %v1676
        %v1835 = vpop.f32.mrf.mxu0
        %v1836 = vadd.f32 0.0, %v1835
        %v1837 = vpop.f32.mrf.mxu0
        %v1838 = vadd.f32 0.0, %v1837
        %1839 = vmatmul.bf16.gmra.mxu0 %v1677
        %v1840 = vpop.f32.mrf.mxu0
        %v1841 = vadd.f32 0.0, %v1840
        %v1842 = vpop.f32.mrf.mxu0
        %v1843 = vadd.f32 0.0, %v1842
        %1844 = vmatmul.bf16.gmra.mxu0 %v1678
        %v1845 = vpop.f32.mrf.mxu0
        %v1846 = vadd.f32 0.0, %v1845
        %v1847 = vpop.f32.mrf.mxu0
        %v1848 = vadd.f32 0.0, %v1847
        %1849 = vmatmul.bf16.gmra.mxu0 %v1679
        %v1850 = vpop.f32.mrf.mxu0
        %v1851 = vadd.f32 0.0, %v1850
        %v1852 = vpop.f32.mrf.mxu0
        %v1853 = vadd.f32 0.0, %v1852
        %1854 = vdwg.mxu0
        %1855 = vmatpush.bf16.msra.mxu0 %v1759
        %1856 = vmatpush.bf16.msra.mxu0 %v1757
        %1857 = vmatpush.bf16.msra.mxu0 %v1755
        %1858 = vmatpush.bf16.msra.mxu0 %v1753
        %1859 = vmatpush.bf16.msra.mxu0 %v1751
        %1860 = vmatpush.bf16.msra.mxu0 %v1749
        %1861 = vmatpush.bf16.msra.mxu0 %v1747
        %1862 = vmatpush.bf16.msra.mxu0 %v1745
        %1863 = vmatmul.bf16.gmra.mxu0 %v1666
        %v1864 = vpop.f32.mrf.mxu0
        %v1865 = vadd.f32 0.0, %v1864
        %v1866 = vpop.f32.mrf.mxu0
        %v1867 = vadd.f32 0.0, %v1866
        %1868 = vmatmul.bf16.gmra.mxu0 %v1667
        %v1869 = vpop.f32.mrf.mxu0
        %v1870 = vadd.f32 0.0, %v1869
        %v1871 = vpop.f32.mrf.mxu0
        %v1872 = vadd.f32 0.0, %v1871
        %1873 = vmatmul.bf16.gmra.mxu0 %v1668
        %v1874 = vpop.f32.mrf.mxu0
        %v1875 = vadd.f32 0.0, %v1874
        %v1876 = vpop.f32.mrf.mxu0
        %v1877 = vadd.f32 0.0, %v1876
        %1878 = vmatmul.bf16.gmra.mxu0 %v1669
        %v1879 = vpop.f32.mrf.mxu0
        %v1880 = vadd.f32 0.0, %v1879
        %v1881 = vpop.f32.mrf.mxu0
        %v1882 = vadd.f32 0.0, %v1881
        %1883 = vmatmul.bf16.gmra.mxu0 %v1670
        %v1884 = vpop.f32.mrf.mxu0
        %v1885 = vadd.f32 0.0, %v1884
        %v1886 = vpop.f32.mrf.mxu0
        %v1887 = vadd.f32 0.0, %v1886
        %1888 = vmatmul.bf16.gmra.mxu0 %v1671
        %v1889 = vpop.f32.mrf.mxu0
        %v1890 = vadd.f32 0.0, %v1889
        %v1891 = vpop.f32.mrf.mxu0
        %v1892 = vadd.f32 0.0, %v1891
        %1893 = vmatmul.bf16.gmra.mxu0 %v1672
        %v1894 = vpop.f32.mrf.mxu0
        %v1895 = vadd.f32 0.0, %v1894
        %v1896 = vpop.f32.mrf.mxu0
        %v1897 = vadd.f32 0.0, %v1896
        %1898 = vmatmul.bf16.gmra.mxu0 %v1673
        %v1899 = vpop.f32.mrf.mxu0
        %v1900 = vadd.f32 0.0, %v1899
        %v1901 = vpop.f32.mrf.mxu0
        %v1902 = vadd.f32 0.0, %v1901
        %1903 = vmatmul.bf16.gmra.mxu0 %v1674
        %v1904 = vpop.f32.mrf.mxu0
        %v1905 = vadd.f32 0.0, %v1904
        %v1906 = vpop.f32.mrf.mxu0
        %v1907 = vadd.f32 0.0, %v1906
        %1908 = vmatmul.bf16.gmra.mxu0 %v1675
        %v1909 = vpop.f32.mrf.mxu0
        %v1910 = vadd.f32 0.0, %v1909
        %v1911 = vpop.f32.mrf.mxu0
        %v1912 = vadd.f32 0.0, %v1911
        %1913 = vmatmul.bf16.gmra.mxu0 %v1676
        %v1914 = vpop.f32.mrf.mxu0
        %v1915 = vadd.f32 0.0, %v1914
        %v1916 = vpop.f32.mrf.mxu0
        %v1917 = vadd.f32 0.0, %v1916
        %1918 = vmatmul.bf16.gmra.mxu0 %v1677
        %v1919 = vpop.f32.mrf.mxu0
        %v1920 = vadd.f32 0.0, %v1919
        %v1921 = vpop.f32.mrf.mxu0
        %v1922 = vadd.f32 0.0, %v1921
        %1923 = vmatmul.bf16.gmra.mxu0 %v1678
        %v1924 = vpop.f32.mrf.mxu0
        %v1925 = vadd.f32 0.0, %v1924
        %v1926 = vpop.f32.mrf.mxu0
        %v1927 = vadd.f32 0.0, %v1926
        %1928 = vmatmul.bf16.gmra.mxu0 %v1679
        %v1929 = vpop.f32.mrf.mxu0
        %v1930 = vadd.f32 0.0, %v1929
        %v1931 = vpop.f32.mrf.mxu0
        %v1932 = vadd.f32 0.0, %v1931
        %1933 = vdwg.mxu0
        %v1934 = vadd.f32 %v1582, %v1786
        %v1935 = vadd.f32 %v1583, %v1865
        %v1936 = vadd.f32 %v1584, %v1788
        %v1937 = vadd.f32 %v1585, %v1867
        %v1938 = vadd.f32 %v1586, %v1791
        %v1939 = vadd.f32 %v1587, %v1870
        %v1940 = vadd.f32 %v1588, %v1793
        %v1941 = vadd.f32 %v1589, %v1872
        %v1942 = vadd.f32 %v1590, %v1796
        %v1943 = vadd.f32 %v1591, %v1875
        %v1944 = vadd.f32 %v1592, %v1798
        %v1945 = vadd.f32 %v1593, %v1877
        %v1946 = vadd.f32 %v1594, %v1801
        %v1947 = vadd.f32 %v1595, %v1880
        %v1948 = vadd.f32 %v1596, %v1803
        %v1949 = vadd.f32 %v1597, %v1882
        %v1950 = vadd.f32 %v1598, %v1806
        %v1951 = vadd.f32 %v1599, %v1885
        %v1952 = vadd.f32 %v1600, %v1808
        %v1953 = vadd.f32 %v1601, %v1887
        %v1954 = vadd.f32 %v1602, %v1811
        %v1955 = vadd.f32 %v1603, %v1890
        %v1956 = vadd.f32 %v1604, %v1813
        %v1957 = vadd.f32 %v1605, %v1892
        %v1958 = vadd.f32 %v1606, %v1816
        %v1959 = vadd.f32 %v1607, %v1895
        %v1960 = vadd.f32 %v1608, %v1818
        %v1961 = vadd.f32 %v1609, %v1897
        %v1962 = vadd.f32 %v1610, %v1821
        %v1963 = vadd.f32 %v1611, %v1900
        %v1964 = vadd.f32 %v1612, %v1823
        %v1965 = vadd.f32 %v1613, %v1902
        %v1966 = vadd.f32 %v1614, %v1826
        %v1967 = vadd.f32 %v1615, %v1905
        %v1968 = vadd.f32 %v1616, %v1828
        %v1969 = vadd.f32 %v1617, %v1907
        %v1970 = vadd.f32 %v1618, %v1831
        %v1971 = vadd.f32 %v1619, %v1910
        %v1972 = vadd.f32 %v1620, %v1833
        %v1973 = vadd.f32 %v1621, %v1912
        %v1974 = vadd.f32 %v1622, %v1836
        %v1975 = vadd.f32 %v1623, %v1915
        %v1976 = vadd.f32 %v1624, %v1838
        %v1977 = vadd.f32 %v1625, %v1917
        %v1978 = vadd.f32 %v1626, %v1841
        %v1979 = vadd.f32 %v1627, %v1920
        %v1980 = vadd.f32 %v1628, %v1843
        %v1981 = vadd.f32 %v1629, %v1922
        %v1982 = vadd.f32 %v1630, %v1846
        %v1983 = vadd.f32 %v1631, %v1925
        %v1984 = vadd.f32 %v1632, %v1848
        %v1985 = vadd.f32 %v1633, %v1927
        %v1986 = vadd.f32 %v1634, %v1851
        %v1987 = vadd.f32 %v1635, %v1930
        %v1988 = vadd.f32 %v1636, %v1853
        %v1989 = vadd.f32 %v1637, %v1932
        %1990 = vst [vmem:[#allocation3] sm:$0xff] %v1934
        %1991 = vst [vmem:[#allocation3 + $0x8] sm:$0xff] %v1935
        %1992 = vst [vmem:[#allocation3 + $0x10] sm:$0xff] %v1936
        %1993 = vst [vmem:[#allocation3 + $0x18] sm:$0xff] %v1937
        %1994 = vst [vmem:[#allocation3 + $0x20] sm:$0xff] %v1938
        %1995 = vst [vmem:[#allocation3 + $0x28] sm:$0xff] %v1939
        %1996 = vst [vmem:[#allocation3 + $0x30] sm:$0xff] %v1940
        %1997 = vst [vmem:[#allocation3 + $0x38] sm:$0xff] %v1941
        %1998 = vst [vmem:[#allocation3 + $0x40] sm:$0xff] %v1942
        %1999 = vst [vmem:[#allocation3 + $0x48] sm:$0xff] %v1943
        %2000 = vst [vmem:[#allocation3 + $0x50] sm:$0xff] %v1944
        %2001 = vst [vmem:[#allocation3 + $0x58] sm:$0xff] %v1945
        %2002 = vst [vmem:[#allocation3 + $0x60] sm:$0xff] %v1946
        %2003 = vst [vmem:[#allocation3 + $0x68] sm:$0xff] %v1947
        %2004 = vst [vmem:[#allocation3 + $0x70] sm:$0xff] %v1948
        %2005 = vst [vmem:[#allocation3 + $0x78] sm:$0xff] %v1949
        %2006 = vst [vmem:[#allocation3 + $0x80] sm:$0xff] %v1950
        %2007 = vst [vmem:[#allocation3 + $0x88] sm:$0xff] %v1951
        %2008 = vst [vmem:[#allocation3 + $0x90] sm:$0xff] %v1952
        %2009 = vst [vmem:[#allocation3 + $0x98] sm:$0xff] %v1953
        %2010 = vst [vmem:[#allocation3 + $0xa0] sm:$0xff] %v1954
        %2011 = vst [vmem:[#allocation3 + $0xa8] sm:$0xff] %v1955
        %2012 = vst [vmem:[#allocation3 + $0xb0] sm:$0xff] %v1956
        %2013 = vst [vmem:[#allocation3 + $0xb8] sm:$0xff] %v1957
        %2014 = vst [vmem:[#allocation3 + $0xc0] sm:$0xff] %v1958
        %2015 = vst [vmem:[#allocation3 + $0xc8] sm:$0xff] %v1959
        %2016 = vst [vmem:[#allocation3 + $0xd0] sm:$0xff] %v1960
        %2017 = vst [vmem:[#allocation3 + $0xd8] sm:$0xff] %v1961
        %2018 = vst [vmem:[#allocation3 + $0xe0] sm:$0xff] %v1962
        %2019 = vst [vmem:[#allocation3 + $0xe8] sm:$0xff] %v1963
        %2020 = vst [vmem:[#allocation3 + $0xf0] sm:$0xff] %v1964
        %2021 = vst [vmem:[#allocation3 + $0xf8] sm:$0xff] %v1965
        %2022 = vst [vmem:[#allocation3 + $0x100] sm:$0xff] %v1966
        %2023 = vst [vmem:[#allocation3 + $0x108] sm:$0xff] %v1967
        %2024 = vst [vmem:[#allocation3 + $0x110] sm:$0xff] %v1968
        %2025 = vst [vmem:[#allocation3 + $0x118] sm:$0xff] %v1969
        %2026 = vst [vmem:[#allocation3 + $0x120] sm:$0xff] %v1970
        %2027 = vst [vmem:[#allocation3 + $0x128] sm:$0xff] %v1971
        %2028 = vst [vmem:[#allocation3 + $0x130] sm:$0xff] %v1972
        %2029 = vst [vmem:[#allocation3 + $0x138] sm:$0xff] %v1973
        %2030 = vst [vmem:[#allocation3 + $0x140] sm:$0xff] %v1974
        %2031 = vst [vmem:[#allocation3 + $0x148] sm:$0xff] %v1975
        %2032 = vst [vmem:[#allocation3 + $0x150] sm:$0xff] %v1976
        %2033 = vst [vmem:[#allocation3 + $0x158] sm:$0xff] %v1977
        %2034 = vst [vmem:[#allocation3 + $0x160] sm:$0xff] %v1978
        %2035 = vst [vmem:[#allocation3 + $0x168] sm:$0xff] %v1979
        %2036 = vst [vmem:[#allocation3 + $0x170] sm:$0xff] %v1980
        %2037 = vst [vmem:[#allocation3 + $0x178] sm:$0xff] %v1981
        %2038 = vst [vmem:[#allocation3 + $0x180] sm:$0xff] %v1982
        %2039 = vst [vmem:[#allocation3 + $0x188] sm:$0xff] %v1983
        %2040 = vst [vmem:[#allocation3 + $0x190] sm:$0xff] %v1984
        %2041 = vst [vmem:[#allocation3 + $0x198] sm:$0xff] %v1985
        %2042 = vst [vmem:[#allocation3 + $0x1a0] sm:$0xff] %v1986
        %2043 = vst [vmem:[#allocation3 + $0x1a8] sm:$0xff] %v1987
        %2044 = vst [vmem:[#allocation3 + $0x1b0] sm:$0xff] %v1988
        %2045 = vst [vmem:[#allocation3 + $0x1b8] sm:$0xff] %v1989
        %v2046 = vld [vmem:[#allocation3] sm:$0xff]
        %v2047 = vld [vmem:[#allocation3 + $0x8] sm:$0xff]
        %v2048 = vld [vmem:[#allocation3 + $0x10] sm:$0xff]
        %v2049 = vld [vmem:[#allocation3 + $0x18] sm:$0xff]
        %v2050 = vld [vmem:[#allocation3 + $0x20] sm:$0xff]
        %v2051 = vld [vmem:[#allocation3 + $0x28] sm:$0xff]
        %v2052 = vld [vmem:[#allocation3 + $0x30] sm:$0xff]
        %v2053 = vld [vmem:[#allocation3 + $0x38] sm:$0xff]
        %v2054 = vld [vmem:[#allocation3 + $0x40] sm:$0xff]
        %v2055 = vld [vmem:[#allocation3 + $0x48] sm:$0xff]
        %v2056 = vld [vmem:[#allocation3 + $0x50] sm:$0xff]
        %v2057 = vld [vmem:[#allocation3 + $0x58] sm:$0xff]
        %v2058 = vld [vmem:[#allocation3 + $0x60] sm:$0xff]
        %v2059 = vld [vmem:[#allocation3 + $0x68] sm:$0xff]
        %v2060 = vld [vmem:[#allocation3 + $0x70] sm:$0xff]
        %v2061 = vld [vmem:[#allocation3 + $0x78] sm:$0xff]
        %v2062 = vld [vmem:[#allocation3 + $0x80] sm:$0xff]
        %v2063 = vld [vmem:[#allocation3 + $0x88] sm:$0xff]
        %v2064 = vld [vmem:[#allocation3 + $0x90] sm:$0xff]
        %v2065 = vld [vmem:[#allocation3 + $0x98] sm:$0xff]
        %v2066 = vld [vmem:[#allocation3 + $0xa0] sm:$0xff]
        %v2067 = vld [vmem:[#allocation3 + $0xa8] sm:$0xff]
        %v2068 = vld [vmem:[#allocation3 + $0xb0] sm:$0xff]
        %v2069 = vld [vmem:[#allocation3 + $0xb8] sm:$0xff]
        %v2070 = vld [vmem:[#allocation3 + $0xc0] sm:$0xff]
        %v2071 = vld [vmem:[#allocation3 + $0xc8] sm:$0xff]
        %v2072 = vld [vmem:[#allocation3 + $0xd0] sm:$0xff]
        %v2073 = vld [vmem:[#allocation3 + $0xd8] sm:$0xff]
        %v2074 = vld [vmem:[#allocation3 + $0xe0] sm:$0xff]
        %v2075 = vld [vmem:[#allocation3 + $0xe8] sm:$0xff]
        %v2076 = vld [vmem:[#allocation3 + $0xf0] sm:$0xff]
        %v2077 = vld [vmem:[#allocation3 + $0xf8] sm:$0xff]
        %v2078 = vld [vmem:[#allocation3 + $0x100] sm:$0xff]
        %v2079 = vld [vmem:[#allocation3 + $0x108] sm:$0xff]
        %v2080 = vld [vmem:[#allocation3 + $0x110] sm:$0xff]
        %v2081 = vld [vmem:[#allocation3 + $0x118] sm:$0xff]
        %v2082 = vld [vmem:[#allocation3 + $0x120] sm:$0xff]
        %v2083 = vld [vmem:[#allocation3 + $0x128] sm:$0xff]
        %v2084 = vld [vmem:[#allocation3 + $0x130] sm:$0xff]
        %v2085 = vld [vmem:[#allocation3 + $0x138] sm:$0xff]
        %v2086 = vld [vmem:[#allocation3 + $0x140] sm:$0xff]
        %v2087 = vld [vmem:[#allocation3 + $0x148] sm:$0xff]
        %v2088 = vld [vmem:[#allocation3 + $0x150] sm:$0xff]
        %v2089 = vld [vmem:[#allocation3 + $0x158] sm:$0xff]
        %v2090 = vld [vmem:[#allocation3 + $0x160] sm:$0xff]
        %v2091 = vld [vmem:[#allocation3 + $0x168] sm:$0xff]
        %v2092 = vld [vmem:[#allocation3 + $0x170] sm:$0xff]
        %v2093 = vld [vmem:[#allocation3 + $0x178] sm:$0xff]
        %v2094 = vld [vmem:[#allocation3 + $0x180] sm:$0xff]
        %v2095 = vld [vmem:[#allocation3 + $0x188] sm:$0xff]
        %v2096 = vld [vmem:[#allocation3 + $0x190] sm:$0xff]
        %v2097 = vld [vmem:[#allocation3 + $0x198] sm:$0xff]
        %v2098 = vld [vmem:[#allocation3 + $0x1a0] sm:$0xff]
        %v2099 = vld [vmem:[#allocation3 + $0x1a8] sm:$0xff]
        %v2100 = vld [vmem:[#allocation3 + $0x1b0] sm:$0xff]
        %v2101 = vld [vmem:[#allocation3 + $0x1b8] sm:$0xff]
        %v2102 = vld [vmem:[#allocation2 + $0x4] sm:$0xff]
        %v2103 = vld [vmem:[#allocation2 + $0xc] sm:$0xff]
        %v2104 = vld [vmem:[#allocation2 + $0x14] sm:$0xff]
        %v2105 = vld [vmem:[#allocation2 + $0x1c] sm:$0xff]
        %v2106 = vld [vmem:[#allocation2 + $0x24] sm:$0xff]
        %v2107 = vld [vmem:[#allocation2 + $0x2c] sm:$0xff]
        %v2108 = vld [vmem:[#allocation2 + $0x34] sm:$0xff]
        %v2109 = vld [vmem:[#allocation2 + $0x3c] sm:$0xff]
        %v2110 = vld [vmem:[#allocation2 + $0x44] sm:$0xff]
        %v2111 = vld [vmem:[#allocation2 + $0x4c] sm:$0xff]
        %v2112 = vld [vmem:[#allocation2 + $0x54] sm:$0xff]
        %v2113 = vld [vmem:[#allocation2 + $0x5c] sm:$0xff]
        %v2114 = vld [vmem:[#allocation2 + $0x64] sm:$0xff]
        %v2115 = vld [vmem:[#allocation2 + $0x6c] sm:$0xff]
        %v2116 = vld [vmem:[#allocation2 + $0x74] sm:$0xff]
        %v2117 = vld [vmem:[#allocation2 + $0x7c] sm:$0xff]
        %v2118 = vld [vmem:[#allocation2 + $0x84] sm:$0xff]
        %v2119 = vld [vmem:[#allocation2 + $0x8c] sm:$0xff]
        %v2120 = vld [vmem:[#allocation2 + $0x94] sm:$0xff]
        %v2121 = vld [vmem:[#allocation2 + $0x9c] sm:$0xff]
        %v2122 = vld [vmem:[#allocation2 + $0xa4] sm:$0xff]
        %v2123 = vld [vmem:[#allocation2 + $0xac] sm:$0xff]
        %v2124 = vld [vmem:[#allocation2 + $0xb4] sm:$0xff]
        %v2125 = vld [vmem:[#allocation2 + $0xbc] sm:$0xff]
        %v2126 = vld [vmem:[#allocation2 + $0xc4] sm:$0xff]
        %v2127 = vld [vmem:[#allocation2 + $0xcc] sm:$0xff]
        %v2128 = vld [vmem:[#allocation2 + $0xd4] sm:$0xff]
        %v2129 = vld [vmem:[#allocation2 + $0xdc] sm:$0xff]
        %v2130 = vpack.c.bf16 %v2103, %v2102
        %v2131 = vpack.c.bf16 %v2105, %v2104
        %v2132 = vpack.c.bf16 %v2107, %v2106
        %v2133 = vpack.c.bf16 %v2109, %v2108
        %v2134 = vpack.c.bf16 %v2111, %v2110
        %v2135 = vpack.c.bf16 %v2113, %v2112
        %v2136 = vpack.c.bf16 %v2115, %v2114
        %v2137 = vpack.c.bf16 %v2117, %v2116
        %v2138 = vpack.c.bf16 %v2119, %v2118
        %v2139 = vpack.c.bf16 %v2121, %v2120
        %v2140 = vpack.c.bf16 %v2123, %v2122
        %v2141 = vpack.c.bf16 %v2125, %v2124
        %v2142 = vpack.c.bf16 %v2127, %v2126
        %v2143 = vpack.c.bf16 %v2129, %v2128
        %v2144 = vld [vmem:[%s1 + $0x20] sm:$0xff]
        %v2145 = vld [vmem:[%s1 + $0x48] sm:$0xff]
        %v2146 = vld [vmem:[%s1 + $0x70] sm:$0xff]
        %v2147 = vld [vmem:[%s1 + $0x98] sm:$0xff]
        %v2148 = vld [vmem:[%s1 + $0xc0] sm:$0xff]
        %v2149 = vld [vmem:[%s1 + $0xe8] sm:$0xff]
        %v2150 = vld [vmem:[%s1 + $0x110] sm:$0xff]
        %v2151 = vld [vmem:[%s1 + $0x138] sm:$0xff]
        %v2152 = vld [vmem:[%s1 + $0x160] sm:$0xff]
        %v2153 = vld [vmem:[%s1 + $0x188] sm:$0xff]
        %v2154 = vld [vmem:[%s1 + $0x1b0] sm:$0xff]
        %v2155 = vld [vmem:[%s1 + $0x1d8] sm:$0xff]
        %v2156 = vld [vmem:[%s1 + $0x200] sm:$0xff]
        %v2157 = vld [vmem:[%s1 + $0x228] sm:$0xff]
        %v2158 = vld [vmem:[%s1 + $0x250] sm:$0xff]
        %v2159 = vld [vmem:[%s1 + $0x278] sm:$0xff]
        %v2176 = vunpack.c.l.b16 %v2144
        %v2177 = vunpack.c.h.b16 %v2144
        %v2178 = vunpack.c.l.b16 %v2145
        %v2179 = vunpack.c.h.b16 %v2145
        %v2180 = vunpack.c.l.b16 %v2146
        %v2181 = vunpack.c.h.b16 %v2146
        %v2182 = vunpack.c.l.b16 %v2147
        %v2183 = vunpack.c.h.b16 %v2147
        %v2184 = vunpack.c.l.b16 %v2148
        %v2185 = vunpack.c.h.b16 %v2148
        %v2186 = vunpack.c.l.b16 %v2149
        %v2187 = vunpack.c.h.b16 %v2149
        %v2188 = vunpack.c.l.b16 %v2150
        %v2189 = vunpack.c.h.b16 %v2150
        %v2190 = vunpack.c.l.b16 %v2151
        %v2191 = vunpack.c.h.b16 %v2151
        %v2192 = vunpack.c.l.b16 %v2152
        %v2193 = vunpack.c.h.b16 %v2152
        %v2194 = vunpack.c.l.b16 %v2153
        %v2195 = vunpack.c.h.b16 %v2153
        %v2196 = vunpack.c.l.b16 %v2154
        %v2197 = vunpack.c.h.b16 %v2154
        %v2198 = vunpack.c.l.b16 %v2155
        %v2199 = vunpack.c.h.b16 %v2155
        %v2200 = vunpack.c.l.b16 %v2156
        %v2201 = vunpack.c.h.b16 %v2156
        %v2202 = vunpack.c.l.b16 %v2157
        %v2203 = vunpack.c.h.b16 %v2157
        %v2204 = vunpack.c.l.b16 %v2158
        %v2205 = vunpack.c.h.b16 %v2158
        %v2206 = vunpack.c.l.b16 %v2159
        %v2207 = vunpack.c.h.b16 %v2159
        %v2208 = vpack.c.b16 %v2178, %v2176
        %v2209 = vpack.c.b16 %v2179, %v2177
        %v2210 = vpack.c.b16 %v2182, %v2180
        %v2211 = vpack.c.b16 %v2183, %v2181
        %v2212 = vpack.c.b16 %v2186, %v2184
        %v2213 = vpack.c.b16 %v2187, %v2185
        %v2214 = vpack.c.b16 %v2190, %v2188
        %v2215 = vpack.c.b16 %v2191, %v2189
        %v2216 = vpack.c.b16 %v2194, %v2192
        %v2217 = vpack.c.b16 %v2195, %v2193
        %v2218 = vpack.c.b16 %v2198, %v2196
        %v2219 = vpack.c.b16 %v2199, %v2197
        %v2220 = vpack.c.b16 %v2202, %v2200
        %v2221 = vpack.c.b16 %v2203, %v2201
        %v2222 = vpack.c.b16 %v2206, %v2204
        %v2223 = vpack.c.b16 %v2207, %v2205
        %2240 = vmatpush.bf16.msra.mxu0 %v2222
        %2241 = vmatpush.bf16.msra.mxu0 %v2220
        %2242 = vmatpush.bf16.msra.mxu0 %v2218
        %2243 = vmatpush.bf16.msra.mxu0 %v2216
        %2244 = vmatpush.bf16.msra.mxu0 %v2214
        %2245 = vmatpush.bf16.msra.mxu0 %v2212
        %2246 = vmatpush.bf16.msra.mxu0 %v2210
        %2247 = vmatpush.bf16.msra.mxu0 %v2208
        %2248 = vmatmul.bf16.gmra.mxu0 %v2130
        %v2249 = vpop.f32.mrf.mxu0
        %v2250 = vadd.f32 0.0, %v2249
        %v2251 = vpop.f32.mrf.mxu0
        %v2252 = vadd.f32 0.0, %v2251
        %2253 = vmatmul.bf16.gmra.mxu0 %v2131
        %v2254 = vpop.f32.mrf.mxu0
        %v2255 = vadd.f32 0.0, %v2254
        %v2256 = vpop.f32.mrf.mxu0
        %v2257 = vadd.f32 0.0, %v2256
        %2258 = vmatmul.bf16.gmra.mxu0 %v2132
        %v2259 = vpop.f32.mrf.mxu0
        %v2260 = vadd.f32 0.0, %v2259
        %v2261 = vpop.f32.mrf.mxu0
        %v2262 = vadd.f32 0.0, %v2261
        %2263 = vmatmul.bf16.gmra.mxu0 %v2133
        %v2264 = vpop.f32.mrf.mxu0
        %v2265 = vadd.f32 0.0, %v2264
        %v2266 = vpop.f32.mrf.mxu0
        %v2267 = vadd.f32 0.0, %v2266
        %2268 = vmatmul.bf16.gmra.mxu0 %v2134
        %v2269 = vpop.f32.mrf.mxu0
        %v2270 = vadd.f32 0.0, %v2269
        %v2271 = vpop.f32.mrf.mxu0
        %v2272 = vadd.f32 0.0, %v2271
        %2273 = vmatmul.bf16.gmra.mxu0 %v2135
        %v2274 = vpop.f32.mrf.mxu0
        %v2275 = vadd.f32 0.0, %v2274
        %v2276 = vpop.f32.mrf.mxu0
        %v2277 = vadd.f32 0.0, %v2276
        %2278 = vmatmul.bf16.gmra.mxu0 %v2136
        %v2279 = vpop.f32.mrf.mxu0
        %v2280 = vadd.f32 0.0, %v2279
        %v2281 = vpop.f32.mrf.mxu0
        %v2282 = vadd.f32 0.0, %v2281
        %2283 = vmatmul.bf16.gmra.mxu0 %v2137
        %v2284 = vpop.f32.mrf.mxu0
        %v2285 = vadd.f32 0.0, %v2284
        %v2286 = vpop.f32.mrf.mxu0
        %v2287 = vadd.f32 0.0, %v2286
        %2288 = vmatmul.bf16.gmra.mxu0 %v2138
        %v2289 = vpop.f32.mrf.mxu0
        %v2290 = vadd.f32 0.0, %v2289
        %v2291 = vpop.f32.mrf.mxu0
        %v2292 = vadd.f32 0.0, %v2291
        %2293 = vmatmul.bf16.gmra.mxu0 %v2139
        %v2294 = vpop.f32.mrf.mxu0
        %v2295 = vadd.f32 0.0, %v2294
        %v2296 = vpop.f32.mrf.mxu0
        %v2297 = vadd.f32 0.0, %v2296
        %2298 = vmatmul.bf16.gmra.mxu0 %v2140
        %v2299 = vpop.f32.mrf.mxu0
        %v2300 = vadd.f32 0.0, %v2299
        %v2301 = vpop.f32.mrf.mxu0
        %v2302 = vadd.f32 0.0, %v2301
        %2303 = vmatmul.bf16.gmra.mxu0 %v2141
        %v2304 = vpop.f32.mrf.mxu0
        %v2305 = vadd.f32 0.0, %v2304
        %v2306 = vpop.f32.mrf.mxu0
        %v2307 = vadd.f32 0.0, %v2306
        %2308 = vmatmul.bf16.gmra.mxu0 %v2142
        %v2309 = vpop.f32.mrf.mxu0
        %v2310 = vadd.f32 0.0, %v2309
        %v2311 = vpop.f32.mrf.mxu0
        %v2312 = vadd.f32 0.0, %v2311
        %2313 = vmatmul.bf16.gmra.mxu0 %v2143
        %v2314 = vpop.f32.mrf.mxu0
        %v2315 = vadd.f32 0.0, %v2314
        %v2316 = vpop.f32.mrf.mxu0
        %v2317 = vadd.f32 0.0, %v2316
        %2318 = vdwg.mxu0
        %2319 = vmatpush.bf16.msra.mxu0 %v2223
        %2320 = vmatpush.bf16.msra.mxu0 %v2221
        %2321 = vmatpush.bf16.msra.mxu0 %v2219
        %2322 = vmatpush.bf16.msra.mxu0 %v2217
        %2323 = vmatpush.bf16.msra.mxu0 %v2215
        %2324 = vmatpush.bf16.msra.mxu0 %v2213
        %2325 = vmatpush.bf16.msra.mxu0 %v2211
        %2326 = vmatpush.bf16.msra.mxu0 %v2209
        %2327 = vmatmul.bf16.gmra.mxu0 %v2130
        %v2328 = vpop.f32.mrf.mxu0
        %v2329 = vadd.f32 0.0, %v2328
        %v2330 = vpop.f32.mrf.mxu0
        %v2331 = vadd.f32 0.0, %v2330
        %2332 = vmatmul.bf16.gmra.mxu0 %v2131
        %v2333 = vpop.f32.mrf.mxu0
        %v2334 = vadd.f32 0.0, %v2333
        %v2335 = vpop.f32.mrf.mxu0
        %v2336 = vadd.f32 0.0, %v2335
        %2337 = vmatmul.bf16.gmra.mxu0 %v2132
        %v2338 = vpop.f32.mrf.mxu0
        %v2339 = vadd.f32 0.0, %v2338
        %v2340 = vpop.f32.mrf.mxu0
        %v2341 = vadd.f32 0.0, %v2340
        %2342 = vmatmul.bf16.gmra.mxu0 %v2133
        %v2343 = vpop.f32.mrf.mxu0
        %v2344 = vadd.f32 0.0, %v2343
        %v2345 = vpop.f32.mrf.mxu0
        %v2346 = vadd.f32 0.0, %v2345
        %2347 = vmatmul.bf16.gmra.mxu0 %v2134
        %v2348 = vpop.f32.mrf.mxu0
        %v2349 = vadd.f32 0.0, %v2348
        %v2350 = vpop.f32.mrf.mxu0
        %v2351 = vadd.f32 0.0, %v2350
        %2352 = vmatmul.bf16.gmra.mxu0 %v2135
        %v2353 = vpop.f32.mrf.mxu0
        %v2354 = vadd.f32 0.0, %v2353
        %v2355 = vpop.f32.mrf.mxu0
        %v2356 = vadd.f32 0.0, %v2355
        %2357 = vmatmul.bf16.gmra.mxu0 %v2136
        %v2358 = vpop.f32.mrf.mxu0
        %v2359 = vadd.f32 0.0, %v2358
        %v2360 = vpop.f32.mrf.mxu0
        %v2361 = vadd.f32 0.0, %v2360
        %2362 = vmatmul.bf16.gmra.mxu0 %v2137
        %v2363 = vpop.f32.mrf.mxu0
        %v2364 = vadd.f32 0.0, %v2363
        %v2365 = vpop.f32.mrf.mxu0
        %v2366 = vadd.f32 0.0, %v2365
        %2367 = vmatmul.bf16.gmra.mxu0 %v2138
        %v2368 = vpop.f32.mrf.mxu0
        %v2369 = vadd.f32 0.0, %v2368
        %v2370 = vpop.f32.mrf.mxu0
        %v2371 = vadd.f32 0.0, %v2370
        %2372 = vmatmul.bf16.gmra.mxu0 %v2139
        %v2373 = vpop.f32.mrf.mxu0
        %v2374 = vadd.f32 0.0, %v2373
        %v2375 = vpop.f32.mrf.mxu0
        %v2376 = vadd.f32 0.0, %v2375
        %2377 = vmatmul.bf16.gmra.mxu0 %v2140
        %v2378 = vpop.f32.mrf.mxu0
        %v2379 = vadd.f32 0.0, %v2378
        %v2380 = vpop.f32.mrf.mxu0
        %v2381 = vadd.f32 0.0, %v2380
        %2382 = vmatmul.bf16.gmra.mxu0 %v2141
        %v2383 = vpop.f32.mrf.mxu0
        %v2384 = vadd.f32 0.0, %v2383
        %v2385 = vpop.f32.mrf.mxu0
        %v2386 = vadd.f32 0.0, %v2385
        %2387 = vmatmul.bf16.gmra.mxu0 %v2142
        %v2388 = vpop.f32.mrf.mxu0
        %v2389 = vadd.f32 0.0, %v2388
        %v2390 = vpop.f32.mrf.mxu0
        %v2391 = vadd.f32 0.0, %v2390
        %2392 = vmatmul.bf16.gmra.mxu0 %v2143
        %v2393 = vpop.f32.mrf.mxu0
        %v2394 = vadd.f32 0.0, %v2393
        %v2395 = vpop.f32.mrf.mxu0
        %v2396 = vadd.f32 0.0, %v2395
        %2397 = vdwg.mxu0
        %v2398 = vadd.f32 %v2046, %v2250
        %v2399 = vadd.f32 %v2047, %v2329
        %v2400 = vadd.f32 %v2048, %v2252
        %v2401 = vadd.f32 %v2049, %v2331
        %v2402 = vadd.f32 %v2050, %v2255
        %v2403 = vadd.f32 %v2051, %v2334
        %v2404 = vadd.f32 %v2052, %v2257
        %v2405 = vadd.f32 %v2053, %v2336
        %v2406 = vadd.f32 %v2054, %v2260
        %v2407 = vadd.f32 %v2055, %v2339
        %v2408 = vadd.f32 %v2056, %v2262
        %v2409 = vadd.f32 %v2057, %v2341
        %v2410 = vadd.f32 %v2058, %v2265
        %v2411 = vadd.f32 %v2059, %v2344
        %v2412 = vadd.f32 %v2060, %v2267
        %v2413 = vadd.f32 %v2061, %v2346
        %v2414 = vadd.f32 %v2062, %v2270
        %v2415 = vadd.f32 %v2063, %v2349
        %v2416 = vadd.f32 %v2064, %v2272
        %v2417 = vadd.f32 %v2065, %v2351
        %v2418 = vadd.f32 %v2066, %v2275
        %v2419 = vadd.f32 %v2067, %v2354
        %v2420 = vadd.f32 %v2068, %v2277
        %v2421 = vadd.f32 %v2069, %v2356
        %v2422 = vadd.f32 %v2070, %v2280
        %v2423 = vadd.f32 %v2071, %v2359
        %v2424 = vadd.f32 %v2072, %v2282
        %v2425 = vadd.f32 %v2073, %v2361
        %v2426 = vadd.f32 %v2074, %v2285
        %v2427 = vadd.f32 %v2075, %v2364
        %v2428 = vadd.f32 %v2076, %v2287
        %v2429 = vadd.f32 %v2077, %v2366
        %v2430 = vadd.f32 %v2078, %v2290
        %v2431 = vadd.f32 %v2079, %v2369
        %v2432 = vadd.f32 %v2080, %v2292
        %v2433 = vadd.f32 %v2081, %v2371
        %v2434 = vadd.f32 %v2082, %v2295
        %v2435 = vadd.f32 %v2083, %v2374
        %v2436 = vadd.f32 %v2084, %v2297
        %v2437 = vadd.f32 %v2085, %v2376
        %v2438 = vadd.f32 %v2086, %v2300
        %v2439 = vadd.f32 %v2087, %v2379
        %v2440 = vadd.f32 %v2088, %v2302
        %v2441 = vadd.f32 %v2089, %v2381
        %v2442 = vadd.f32 %v2090, %v2305
        %v2443 = vadd.f32 %v2091, %v2384
        %v2444 = vadd.f32 %v2092, %v2307
        %v2445 = vadd.f32 %v2093, %v2386
        %v2446 = vadd.f32 %v2094, %v2310
        %v2447 = vadd.f32 %v2095, %v2389
        %v2448 = vadd.f32 %v2096, %v2312
        %v2449 = vadd.f32 %v2097, %v2391
        %v2450 = vadd.f32 %v2098, %v2315
        %v2451 = vadd.f32 %v2099, %v2394
        %v2452 = vadd.f32 %v2100, %v2317
        %v2453 = vadd.f32 %v2101, %v2396
        %2454 = vst [vmem:[#allocation3] sm:$0xff] %v2398
        %2455 = vst [vmem:[#allocation3 + $0x8] sm:$0xff] %v2399
        %2456 = vst [vmem:[#allocation3 + $0x10] sm:$0xff] %v2400
        %2457 = vst [vmem:[#allocation3 + $0x18] sm:$0xff] %v2401
        %2458 = vst [vmem:[#allocation3 + $0x20] sm:$0xff] %v2402
        %2459 = vst [vmem:[#allocation3 + $0x28] sm:$0xff] %v2403
        %2460 = vst [vmem:[#allocation3 + $0x30] sm:$0xff] %v2404
        %2461 = vst [vmem:[#allocation3 + $0x38] sm:$0xff] %v2405
        %2462 = vst [vmem:[#allocation3 + $0x40] sm:$0xff] %v2406
        %2463 = vst [vmem:[#allocation3 + $0x48] sm:$0xff] %v2407
        %2464 = vst [vmem:[#allocation3 + $0x50] sm:$0xff] %v2408
        %2465 = vst [vmem:[#allocation3 + $0x58] sm:$0xff] %v2409
        %2466 = vst [vmem:[#allocation3 + $0x60] sm:$0xff] %v2410
        %2467 = vst [vmem:[#allocation3 + $0x68] sm:$0xff] %v2411
        %2468 = vst [vmem:[#allocation3 + $0x70] sm:$0xff] %v2412
        %2469 = vst [vmem:[#allocation3 + $0x78] sm:$0xff] %v2413
        %2470 = vst [vmem:[#allocation3 + $0x80] sm:$0xff] %v2414
        %2471 = vst [vmem:[#allocation3 + $0x88] sm:$0xff] %v2415
        %2472 = vst [vmem:[#allocation3 + $0x90] sm:$0xff] %v2416
        %2473 = vst [vmem:[#allocation3 + $0x98] sm:$0xff] %v2417
        %2474 = vst [vmem:[#allocation3 + $0xa0] sm:$0xff] %v2418
        %2475 = vst [vmem:[#allocation3 + $0xa8] sm:$0xff] %v2419
        %2476 = vst [vmem:[#allocation3 + $0xb0] sm:$0xff] %v2420
        %2477 = vst [vmem:[#allocation3 + $0xb8] sm:$0xff] %v2421
        %2478 = vst [vmem:[#allocation3 + $0xc0] sm:$0xff] %v2422
        %2479 = vst [vmem:[#allocation3 + $0xc8] sm:$0xff] %v2423
        %2480 = vst [vmem:[#allocation3 + $0xd0] sm:$0xff] %v2424
        %2481 = vst [vmem:[#allocation3 + $0xd8] sm:$0xff] %v2425
        %2482 = vst [vmem:[#allocation3 + $0xe0] sm:$0xff] %v2426
        %2483 = vst [vmem:[#allocation3 + $0xe8] sm:$0xff] %v2427
        %2484 = vst [vmem:[#allocation3 + $0xf0] sm:$0xff] %v2428
        %2485 = vst [vmem:[#allocation3 + $0xf8] sm:$0xff] %v2429
        %2486 = vst [vmem:[#allocation3 + $0x100] sm:$0xff] %v2430
        %2487 = vst [vmem:[#allocation3 + $0x108] sm:$0xff] %v2431
        %2488 = vst [vmem:[#allocation3 + $0x110] sm:$0xff] %v2432
        %2489 = vst [vmem:[#allocation3 + $0x118] sm:$0xff] %v2433
        %2490 = vst [vmem:[#allocation3 + $0x120] sm:$0xff] %v2434
        %2491 = vst [vmem:[#allocation3 + $0x128] sm:$0xff] %v2435
        %2492 = vst [vmem:[#allocation3 + $0x130] sm:$0xff] %v2436
        %2493 = vst [vmem:[#allocation3 + $0x138] sm:$0xff] %v2437
        %2494 = vst [vmem:[#allocation3 + $0x140] sm:$0xff] %v2438
        %2495 = vst [vmem:[#allocation3 + $0x148] sm:$0xff] %v2439
        %2496 = vst [vmem:[#allocation3 + $0x150] sm:$0xff] %v2440
        %2497 = vst [vmem:[#allocation3 + $0x158] sm:$0xff] %v2441
        %2498 = vst [vmem:[#allocation3 + $0x160] sm:$0xff] %v2442
        %2499 = vst [vmem:[#allocation3 + $0x168] sm:$0xff] %v2443
        %2500 = vst [vmem:[#allocation3 + $0x170] sm:$0xff] %v2444
        %2501 = vst [vmem:[#allocation3 + $0x178] sm:$0xff] %v2445
        %2502 = vst [vmem:[#allocation3 + $0x180] sm:$0xff] %v2446
        %2503 = vst [vmem:[#allocation3 + $0x188] sm:$0xff] %v2447
        %2504 = vst [vmem:[#allocation3 + $0x190] sm:$0xff] %v2448
        %2505 = vst [vmem:[#allocation3 + $0x198] sm:$0xff] %v2449
        %2506 = vst [vmem:[#allocation3 + $0x1a0] sm:$0xff] %v2450
        %2507 = vst [vmem:[#allocation3 + $0x1a8] sm:$0xff] %v2451
        %2508 = vst [vmem:[#allocation3 + $0x1b0] sm:$0xff] %v2452
        %2509 = vst [vmem:[#allocation3 + $0x1b8] sm:$0xff] %v2453
        %v2510 = vld [vmem:[#allocation3] sm:$0xff]
        %v2511 = vld [vmem:[#allocation3 + $0x10] sm:$0xff]
        %v2512 = vld [vmem:[#allocation3 + $0x20] sm:$0xff]
        %v2513 = vld [vmem:[#allocation3 + $0x30] sm:$0xff]
        %v2514 = vld [vmem:[#allocation3 + $0x40] sm:$0xff]
        %v2515 = vld [vmem:[#allocation3 + $0x50] sm:$0xff]
        %v2516 = vld [vmem:[#allocation3 + $0x60] sm:$0xff]
        %v2517 = vld [vmem:[#allocation3 + $0x70] sm:$0xff]
        %v2518 = vld [vmem:[#allocation3 + $0x80] sm:$0xff]
        %v2519 = vld [vmem:[#allocation3 + $0x90] sm:$0xff]
        %v2520 = vld [vmem:[#allocation3 + $0xa0] sm:$0xff]
        %v2521 = vld [vmem:[#allocation3 + $0xb0] sm:$0xff]
        %v2522 = vld [vmem:[#allocation3 + $0xc0] sm:$0xff]
        %v2523 = vld [vmem:[#allocation3 + $0xd0] sm:$0xff]
        %v2524 = vld [vmem:[#allocation3 + $0xe0] sm:$0xff]
        %v2525 = vld [vmem:[#allocation3 + $0xf0] sm:$0xff]
        %v2526 = vld [vmem:[#allocation3 + $0x100] sm:$0xff]
        %v2527 = vld [vmem:[#allocation3 + $0x110] sm:$0xff]
        %v2528 = vld [vmem:[#allocation3 + $0x120] sm:$0xff]
        %v2529 = vld [vmem:[#allocation3 + $0x130] sm:$0xff]
        %v2530 = vld [vmem:[#allocation3 + $0x140] sm:$0xff]
        %v2531 = vld [vmem:[#allocation3 + $0x150] sm:$0xff]
        %v2532 = vld [vmem:[#allocation3 + $0x160] sm:$0xff]
        %v2533 = vld [vmem:[#allocation3 + $0x170] sm:$0xff]
        %v2534 = vld [vmem:[#allocation3 + $0x180] sm:$0xff]
        %v2535 = vld [vmem:[#allocation3 + $0x190] sm:$0xff]
        %v2536 = vld [vmem:[#allocation3 + $0x1a0] sm:$0xff]
        %v2537 = vld [vmem:[#allocation3 + $0x1b0] sm:$0xff]
        %v2538 = vld [vmem:[#allocation3 + $0x8] sm:$0xff]
        %v2539 = vld [vmem:[#allocation3 + $0x18] sm:$0xff]
        %v2540 = vld [vmem:[#allocation3 + $0x28] sm:$0xff]
        %v2541 = vld [vmem:[#allocation3 + $0x38] sm:$0xff]
        %v2542 = vld [vmem:[#allocation3 + $0x48] sm:$0xff]
        %v2543 = vld [vmem:[#allocation3 + $0x58] sm:$0xff]
        %v2544 = vld [vmem:[#allocation3 + $0x68] sm:$0xff]
        %v2545 = vld [vmem:[#allocation3 + $0x78] sm:$0xff]
        %v2546 = vld [vmem:[#allocation3 + $0x88] sm:$0xff]
        %v2547 = vld [vmem:[#allocation3 + $0x98] sm:$0xff]
        %v2548 = vld [vmem:[#allocation3 + $0xa8] sm:$0xff]
        %v2549 = vld [vmem:[#allocation3 + $0xb8] sm:$0xff]
        %v2550 = vld [vmem:[#allocation3 + $0xc8] sm:$0xff]
        %v2551 = vld [vmem:[#allocation3 + $0xd8] sm:$0xff]
        %v2552 = vld [vmem:[#allocation3 + $0xe8] sm:$0xff]
        %v2553 = vld [vmem:[#allocation3 + $0xf8] sm:$0xff]
        %v2554 = vld [vmem:[#allocation3 + $0x108] sm:$0xff]
        %v2555 = vld [vmem:[#allocation3 + $0x118] sm:$0xff]
        %v2556 = vld [vmem:[#allocation3 + $0x128] sm:$0xff]
        %v2557 = vld [vmem:[#allocation3 + $0x138] sm:$0xff]
        %v2558 = vld [vmem:[#allocation3 + $0x148] sm:$0xff]
        %v2559 = vld [vmem:[#allocation3 + $0x158] sm:$0xff]
        %v2560 = vld [vmem:[#allocation3 + $0x168] sm:$0xff]
        %v2561 = vld [vmem:[#allocation3 + $0x178] sm:$0xff]
        %v2562 = vld [vmem:[#allocation3 + $0x188] sm:$0xff]
        %v2563 = vld [vmem:[#allocation3 + $0x198] sm:$0xff]
        %v2564 = vld [vmem:[#allocation3 + $0x1a8] sm:$0xff]
        %v2565 = vld [vmem:[#allocation3 + $0x1b8] sm:$0xff]
        %v2566 = vmax.f32 %v2510, %v2538
        %v2567 = vmax.f32 %v2511, %v2539
        %v2568 = vmax.f32 %v2512, %v2540
        %v2569 = vmax.f32 %v2513, %v2541
        %v2570 = vmax.f32 %v2514, %v2542
        %v2571 = vmax.f32 %v2515, %v2543
        %v2572 = vmax.f32 %v2516, %v2544
        %v2573 = vmax.f32 %v2517, %v2545
        %v2574 = vmax.f32 %v2518, %v2546
        %v2575 = vmax.f32 %v2519, %v2547
        %v2576 = vmax.f32 %v2520, %v2548
        %v2577 = vmax.f32 %v2521, %v2549
        %v2578 = vmax.f32 %v2522, %v2550
        %v2579 = vmax.f32 %v2523, %v2551
        %v2580 = vmax.f32 %v2524, %v2552
        %v2581 = vmax.f32 %v2525, %v2553
        %v2582 = vmax.f32 %v2526, %v2554
        %v2583 = vmax.f32 %v2527, %v2555
        %v2584 = vmax.f32 %v2528, %v2556
        %v2585 = vmax.f32 %v2529, %v2557
        %v2586 = vmax.f32 %v2530, %v2558
        %v2587 = vmax.f32 %v2531, %v2559
        %v2588 = vmax.f32 %v2532, %v2560
        %v2589 = vmax.f32 %v2533, %v2561
        %v2590 = vmax.f32 %v2534, %v2562
        %v2591 = vmax.f32 %v2535, %v2563
        %v2592 = vmax.f32 %v2536, %v2564
        %v2593 = vmax.f32 %v2537, %v2565
        %2594 = vst [vmem:[#allocation4] sm:$0xff] %v2566
        %2595 = vst [vmem:[#allocation4 + $0x8] sm:$0xff] %v2567
        %2596 = vst [vmem:[#allocation4 + $0x10] sm:$0xff] %v2568
        %2597 = vst [vmem:[#allocation4 + $0x18] sm:$0xff] %v2569
        %2598 = vst [vmem:[#allocation4 + $0x20] sm:$0xff] %v2570
        %2599 = vst [vmem:[#allocation4 + $0x28] sm:$0xff] %v2571
        %2600 = vst [vmem:[#allocation4 + $0x30] sm:$0xff] %v2572
        %2601 = vst [vmem:[#allocation4 + $0x38] sm:$0xff] %v2573
        %2602 = vst [vmem:[#allocation4 + $0x40] sm:$0xff] %v2574
        %2603 = vst [vmem:[#allocation4 + $0x48] sm:$0xff] %v2575
        %2604 = vst [vmem:[#allocation4 + $0x50] sm:$0xff] %v2576
        %2605 = vst [vmem:[#allocation4 + $0x58] sm:$0xff] %v2577
        %2606 = vst [vmem:[#allocation4 + $0x60] sm:$0xff] %v2578
        %2607 = vst [vmem:[#allocation4 + $0x68] sm:$0xff] %v2579
        %2608 = vst [vmem:[#allocation4 + $0x70] sm:$0xff] %v2580
        %2609 = vst [vmem:[#allocation4 + $0x78] sm:$0xff] %v2581
        %2610 = vst [vmem:[#allocation4 + $0x80] sm:$0xff] %v2582
        %2611 = vst [vmem:[#allocation4 + $0x88] sm:$0xff] %v2583
        %2612 = vst [vmem:[#allocation4 + $0x90] sm:$0xff] %v2584
        %2613 = vst [vmem:[#allocation4 + $0x98] sm:$0xff] %v2585
        %2614 = vst [vmem:[#allocation4 + $0xa0] sm:$0xff] %v2586
        %2615 = vst [vmem:[#allocation4 + $0xa8] sm:$0xff] %v2587
        %2616 = vst [vmem:[#allocation4 + $0xb0] sm:$0xff] %v2588
        %2617 = vst [vmem:[#allocation4 + $0xb8] sm:$0xff] %v2589
        %2618 = vst [vmem:[#allocation4 + $0xc0] sm:$0xff] %v2590
        %2619 = vst [vmem:[#allocation4 + $0xc8] sm:$0xff] %v2591
        %2620 = vst [vmem:[#allocation4 + $0xd0] sm:$0xff] %v2592
        %2621 = vst [vmem:[#allocation4 + $0xd8] sm:$0xff] %v2593
        %v2622 = vld [vmem:[#allocation4] ss:$2 sm:$0xff]
        %s2623 = scalar_lea.vmem [#allocation4], 16
        %v2624 = vld [vmem:[%s2623] ss:$2 sm:$0xff]
        %s2625 = scalar_lea.vmem [#allocation4], 32
        %v2626 = vld [vmem:[%s2625] ss:$2 sm:$0xff]
        %s2627 = scalar_lea.vmem [#allocation4], 48
        %v2628 = vld [vmem:[%s2627] ss:$2 sm:$0xff]
        %s2629 = scalar_lea.vmem [#allocation4], 64
        %v2630 = vld [vmem:[%s2629] ss:$2 sm:$0xff]
        %s2631 = scalar_lea.vmem [#allocation4], 80
        %v2632 = vld [vmem:[%s2631] ss:$2 sm:$0xff]
        %s2633 = scalar_lea.vmem [#allocation4], 96
        %v2634 = vld [vmem:[%s2633] ss:$2 sm:$0xff]
        %s2635 = scalar_lea.vmem [#allocation4], 112
        %v2636 = vld [vmem:[%s2635] ss:$2 sm:$0xff]
        %s2637 = scalar_lea.vmem [#allocation4], 128
        %v2638 = vld [vmem:[%s2637] ss:$2 sm:$0xff]
        %s2639 = scalar_lea.vmem [#allocation4], 144
        %v2640 = vld [vmem:[%s2639] ss:$2 sm:$0xff]
        %s2641 = scalar_lea.vmem [#allocation4], 160
        %v2642 = vld [vmem:[%s2641] ss:$2 sm:$0xff]
        %s2643 = scalar_lea.vmem [#allocation4], 176
        %v2644 = vld [vmem:[%s2643] ss:$2 sm:$0xff]
        %s2645 = scalar_lea.vmem [#allocation4], 192
        %v2646 = vld [vmem:[%s2645] ss:$2 sm:$0xff]
        %s2647 = scalar_lea.vmem [#allocation4], 208
        %v2648 = vld [vmem:[%s2647] ss:$2 sm:$0xff]
        %s2649 = scalar_lea.vmem [#allocation4], 1
        %v2650 = vld [vmem:[%s2649] ss:$2 sm:$0xff]
        %s2651 = scalar_lea.vmem [#allocation4], 17
        %v2652 = vld [vmem:[%s2651] ss:$2 sm:$0xff]
        %s2653 = scalar_lea.vmem [#allocation4], 33
        %v2654 = vld [vmem:[%s2653] ss:$2 sm:$0xff]
        %s2655 = scalar_lea.vmem [#allocation4], 49
        %v2656 = vld [vmem:[%s2655] ss:$2 sm:$0xff]
        %s2657 = scalar_lea.vmem [#allocation4], 65
        %v2658 = vld [vmem:[%s2657] ss:$2 sm:$0xff]
        %s2659 = scalar_lea.vmem [#allocation4], 81
        %v2660 = vld [vmem:[%s2659] ss:$2 sm:$0xff]
        %s2661 = scalar_lea.vmem [#allocation4], 97
        %v2662 = vld [vmem:[%s2661] ss:$2 sm:$0xff]
        %s2663 = scalar_lea.vmem [#allocation4], 113
        %v2664 = vld [vmem:[%s2663] ss:$2 sm:$0xff]
        %s2665 = scalar_lea.vmem [#allocation4], 129
        %v2666 = vld [vmem:[%s2665] ss:$2 sm:$0xff]
        %s2667 = scalar_lea.vmem [#allocation4], 145
        %v2668 = vld [vmem:[%s2667] ss:$2 sm:$0xff]
        %s2669 = scalar_lea.vmem [#allocation4], 161
        %v2670 = vld [vmem:[%s2669] ss:$2 sm:$0xff]
        %s2671 = scalar_lea.vmem [#allocation4], 177
        %v2672 = vld [vmem:[%s2671] ss:$2 sm:$0xff]
        %s2673 = scalar_lea.vmem [#allocation4], 193
        %v2674 = vld [vmem:[%s2673] ss:$2 sm:$0xff]
        %s2675 = scalar_lea.vmem [#allocation4], 209
        %v2676 = vld [vmem:[%s2675] ss:$2 sm:$0xff]
        %v2677 = vmax.f32 %v2622, %v2650
        %v2678 = vmax.f32 %v2624, %v2652
        %v2679 = vmax.f32 %v2626, %v2654
        %v2680 = vmax.f32 %v2628, %v2656
        %v2681 = vmax.f32 %v2630, %v2658
        %v2682 = vmax.f32 %v2632, %v2660
        %v2683 = vmax.f32 %v2634, %v2662
        %v2684 = vmax.f32 %v2636, %v2664
        %v2685 = vmax.f32 %v2638, %v2666
        %v2686 = vmax.f32 %v2640, %v2668
        %v2687 = vmax.f32 %v2642, %v2670
        %v2688 = vmax.f32 %v2644, %v2672
        %v2689 = vmax.f32 %v2646, %v2674
        %v2690 = vmax.f32 %v2648, %v2676
        %v2691 = vld [vmem:[%s2] sm:$0x1]
        %v2693 = vperm.slane %v2691, 0
        %v2695 = vadd.f32 %v2677, %v2693
        %v2696 = vadd.f32 %v2678, %v2693
        %v2697 = vadd.f32 %v2679, %v2693
        %v2698 = vadd.f32 %v2680, %v2693
        %v2699 = vadd.f32 %v2681, %v2693
        %v2700 = vadd.f32 %v2682, %v2693
        %v2701 = vadd.f32 %v2683, %v2693
        %v2702 = vadd.f32 %v2684, %v2693
        %v2703 = vadd.f32 %v2685, %v2693
        %v2704 = vadd.f32 %v2686, %v2693
        %v2705 = vadd.f32 %v2687, %v2693
        %v2706 = vadd.f32 %v2688, %v2693
        %v2707 = vadd.f32 %v2689, %v2693
        %v2708 = vadd.f32 %v2690, %v2693
        %v2709 = vmax.f32 %v2695, 0.0
        %v2710 = vmax.f32 %v2696, 0.0
        %v2711 = vmax.f32 %v2697, 0.0
        %v2712 = vmax.f32 %v2698, 0.0
        %v2713 = vmax.f32 %v2699, 0.0
        %v2714 = vmax.f32 %v2700, 0.0
        %v2715 = vmax.f32 %v2701, 0.0
        %v2716 = vmax.f32 %v2702, 0.0
        %v2717 = vmax.f32 %v2703, 0.0
        %v2718 = vmax.f32 %v2704, 0.0
        %v2719 = vmax.f32 %v2705, 0.0
        %v2720 = vmax.f32 %v2706, 0.0
        %v2721 = vmax.f32 %v2707, 0.0
        %v2722 = vmax.f32 %v2708, 0.0
        %2723 = vst [vmem:[#allocation5] sm:$0xff] %v2709
        %2724 = vst [vmem:[#allocation5 + $0x8] sm:$0xff] %v2710
        %2725 = vst [vmem:[#allocation5 + $0x10] sm:$0xff] %v2711
        %2726 = vst [vmem:[#allocation5 + $0x18] sm:$0xff] %v2712
        %2727 = vst [vmem:[#allocation5 + $0x20] sm:$0xff] %v2713
        %2728 = vst [vmem:[#allocation5 + $0x28] sm:$0xff] %v2714
        %2729 = vst [vmem:[#allocation5 + $0x30] sm:$0xff] %v2715
        %2730 = vst [vmem:[#allocation5 + $0x38] sm:$0xff] %v2716
        %2731 = vst [vmem:[#allocation5 + $0x40] sm:$0xff] %v2717
        %2732 = vst [vmem:[#allocation5 + $0x48] sm:$0xff] %v2718
        %2733 = vst [vmem:[#allocation5 + $0x50] sm:$0xff] %v2719
        %2734 = vst [vmem:[#allocation5 + $0x58] sm:$0xff] %v2720
        %2735 = vst [vmem:[#allocation5 + $0x60] sm:$0xff] %v2721
        %2736 = vst [vmem:[#allocation5 + $0x68] sm:$0xff] %v2722
        %2737 = vst [vmem:[#allocation5 + $0x70] sm:$0xff] 0.0
        %v2738 = vld [vmem:[#allocation5] sm:$0xff]
        %v2739 = vld [vmem:[#allocation5 + $0x8] sm:$0xff]
        %v2740 = vld [vmem:[#allocation5 + $0x10] sm:$0xff]
        %v2741 = vld [vmem:[#allocation5 + $0x18] sm:$0xff]
        %v2742 = vld [vmem:[#allocation5 + $0x20] sm:$0xff]
        %v2743 = vld [vmem:[#allocation5 + $0x28] sm:$0xff]
        %v2744 = vld [vmem:[#allocation5 + $0x30] sm:$0xff]
        %v2745 = vld [vmem:[#allocation5 + $0x38] sm:$0xff]
        %v2746 = vld [vmem:[#allocation5 + $0x40] sm:$0xff]
        %v2747 = vld [vmem:[#allocation5 + $0x48] sm:$0xff]
        %v2748 = vld [vmem:[#allocation5 + $0x50] sm:$0xff]
        %v2749 = vld [vmem:[#allocation5 + $0x58] sm:$0xff]
        %v2750 = vld [vmem:[#allocation5 + $0x60] sm:$0xff]
        %v2751 = vld [vmem:[#allocation5 + $0x68] sm:$0xff]
        %v2752 = vpack.c.bf16 %v2739, %v2738
        %v2753 = vpack.c.bf16 %v2741, %v2740
        %v2754 = vpack.c.bf16 %v2743, %v2742
        %v2755 = vpack.c.bf16 %v2745, %v2744
        %v2756 = vpack.c.bf16 %v2747, %v2746
        %v2757 = vpack.c.bf16 %v2749, %v2748
        %v2758 = vpack.c.bf16 %v2751, %v2750
        %v2759 = vld [vmem:[#allocation8] sm:$0xff]
        %v2760 = vld [vmem:[#allocation8 + $0x28] sm:$0xff]
        %v2761 = vld [vmem:[#allocation8 + $0x50] sm:$0xff]
        %v2762 = vld [vmem:[#allocation8 + $0x78] sm:$0xff]
        %v2763 = vld [vmem:[#allocation8 + $0xa0] sm:$0xff]
        %v2764 = vld [vmem:[#allocation8 + $0xc8] sm:$0xff]
        %v2765 = vld [vmem:[#allocation8 + $0xf0] sm:$0xff]
        %v2766 = vld [vmem:[#allocation8 + $0x118] sm:$0xff]
        %v2767 = vld [vmem:[#allocation8 + $0x140] sm:$0xff]
        %v2768 = vld [vmem:[#allocation8 + $0x168] sm:$0xff]
        %v2769 = vld [vmem:[#allocation8 + $0x190] sm:$0xff]
        %v2770 = vld [vmem:[#allocation8 + $0x1b8] sm:$0xff]
        %v2771 = vld [vmem:[#allocation8 + $0x1e0] sm:$0xff]
        %v2772 = vld [vmem:[#allocation8 + $0x208] sm:$0xff]
        %v2773 = vld [vmem:[#allocation8 + $0x230] sm:$0xff]
        %v2774 = vld [vmem:[#allocation8 + $0x258] sm:$0xff]
        %v2791 = vunpack.c.l.b16 %v2759
        %v2792 = vunpack.c.h.b16 %v2759
        %v2793 = vunpack.c.l.b16 %v2760
        %v2794 = vunpack.c.h.b16 %v2760
        %v2795 = vunpack.c.l.b16 %v2761
        %v2796 = vunpack.c.h.b16 %v2761
        %v2797 = vunpack.c.l.b16 %v2762
        %v2798 = vunpack.c.h.b16 %v2762
        %v2799 = vunpack.c.l.b16 %v2763
        %v2800 = vunpack.c.h.b16 %v2763
        %v2801 = vunpack.c.l.b16 %v2764
        %v2802 = vunpack.c.h.b16 %v2764
        %v2803 = vunpack.c.l.b16 %v2765
        %v2804 = vunpack.c.h.b16 %v2765
        %v2805 = vunpack.c.l.b16 %v2766
        %v2806 = vunpack.c.h.b16 %v2766
        %v2807 = vunpack.c.l.b16 %v2767
        %v2808 = vunpack.c.h.b16 %v2767
        %v2809 = vunpack.c.l.b16 %v2768
        %v2810 = vunpack.c.h.b16 %v2768
        %v2811 = vunpack.c.l.b16 %v2769
        %v2812 = vunpack.c.h.b16 %v2769
        %v2813 = vunpack.c.l.b16 %v2770
        %v2814 = vunpack.c.h.b16 %v2770
        %v2815 = vunpack.c.l.b16 %v2771
        %v2816 = vunpack.c.h.b16 %v2771
        %v2817 = vunpack.c.l.b16 %v2772
        %v2818 = vunpack.c.h.b16 %v2772
        %v2819 = vunpack.c.l.b16 %v2773
        %v2820 = vunpack.c.h.b16 %v2773
        %v2821 = vunpack.c.l.b16 %v2774
        %v2822 = vunpack.c.h.b16 %v2774
        %v2823 = vpack.c.b16 %v2793, %v2791
        %v2824 = vpack.c.b16 %v2794, %v2792
        %v2825 = vpack.c.b16 %v2797, %v2795
        %v2826 = vpack.c.b16 %v2798, %v2796
        %v2827 = vpack.c.b16 %v2801, %v2799
        %v2828 = vpack.c.b16 %v2802, %v2800
        %v2829 = vpack.c.b16 %v2805, %v2803
        %v2830 = vpack.c.b16 %v2806, %v2804
        %v2831 = vpack.c.b16 %v2809, %v2807
        %v2832 = vpack.c.b16 %v2810, %v2808
        %v2833 = vpack.c.b16 %v2813, %v2811
        %v2834 = vpack.c.b16 %v2814, %v2812
        %v2835 = vpack.c.b16 %v2817, %v2815
        %v2836 = vpack.c.b16 %v2818, %v2816
        %v2837 = vpack.c.b16 %v2821, %v2819
        %v2838 = vpack.c.b16 %v2822, %v2820
        %2855 = vmatpush.bf16.msra.mxu0 %v2837
        %2856 = vmatpush.bf16.msra.mxu0 %v2835
        %2857 = vmatpush.bf16.msra.mxu0 %v2833
        %2858 = vmatpush.bf16.msra.mxu0 %v2831
        %2859 = vmatpush.bf16.msra.mxu0 %v2829
        %2860 = vmatpush.bf16.msra.mxu0 %v2827
        %2861 = vmatpush.bf16.msra.mxu0 %v2825
        %2862 = vmatpush.bf16.msra.mxu0 %v2823
        %2863 = vmatmul.bf16.gmra.mxu0 %v2752
        %v2864 = vpop.f32.mrf.mxu0
        %v2865 = vadd.f32 0.0, %v2864
        %v2866 = vpop.f32.mrf.mxu0
        %v2867 = vadd.f32 0.0, %v2866
        %2868 = vmatmul.bf16.gmra.mxu0 %v2753
        %v2869 = vpop.f32.mrf.mxu0
        %v2870 = vadd.f32 0.0, %v2869
        %v2871 = vpop.f32.mrf.mxu0
        %v2872 = vadd.f32 0.0, %v2871
        %2873 = vmatmul.bf16.gmra.mxu0 %v2754
        %v2874 = vpop.f32.mrf.mxu0
        %v2875 = vadd.f32 0.0, %v2874
        %v2876 = vpop.f32.mrf.mxu0
        %v2877 = vadd.f32 0.0, %v2876
        %2878 = vmatmul.bf16.gmra.mxu0 %v2755
        %v2879 = vpop.f32.mrf.mxu0
        %v2880 = vadd.f32 0.0, %v2879
        %v2881 = vpop.f32.mrf.mxu0
        %v2882 = vadd.f32 0.0, %v2881
        %2883 = vmatmul.bf16.gmra.mxu0 %v2756
        %v2884 = vpop.f32.mrf.mxu0
        %v2885 = vadd.f32 0.0, %v2884
        %v2886 = vpop.f32.mrf.mxu0
        %v2887 = vadd.f32 0.0, %v2886
        %2888 = vmatmul.bf16.gmra.mxu0 %v2757
        %v2889 = vpop.f32.mrf.mxu0
        %v2890 = vadd.f32 0.0, %v2889
        %v2891 = vpop.f32.mrf.mxu0
        %v2892 = vadd.f32 0.0, %v2891
        %2893 = vmatmul.bf16.gmra.mxu0 %v2758
        %v2894 = vpop.f32.mrf.mxu0
        %v2895 = vadd.f32 0.0, %v2894
        %v2896 = vpop.f32.mrf.mxu0
        %v2897 = vadd.f32 0.0, %v2896
        %2898 = vdwg.mxu0
        %2899 = vmatpush.bf16.msra.mxu0 %v2838
        %2900 = vmatpush.bf16.msra.mxu0 %v2836
        %2901 = vmatpush.bf16.msra.mxu0 %v2834
        %2902 = vmatpush.bf16.msra.mxu0 %v2832
        %2903 = vmatpush.bf16.msra.mxu0 %v2830
        %2904 = vmatpush.bf16.msra.mxu0 %v2828
        %2905 = vmatpush.bf16.msra.mxu0 %v2826
        %2906 = vmatpush.bf16.msra.mxu0 %v2824
        %2907 = vmatmul.bf16.gmra.mxu0 %v2752
        %v2908 = vpop.f32.mrf.mxu0
        %v2909 = vadd.f32 0.0, %v2908
        %v2910 = vpop.f32.mrf.mxu0
        %v2911 = vadd.f32 0.0, %v2910
        %2912 = vmatmul.bf16.gmra.mxu0 %v2753
        %v2913 = vpop.f32.mrf.mxu0
        %v2914 = vadd.f32 0.0, %v2913
        %v2915 = vpop.f32.mrf.mxu0
        %v2916 = vadd.f32 0.0, %v2915
        %2917 = vmatmul.bf16.gmra.mxu0 %v2754
        %v2918 = vpop.f32.mrf.mxu0
        %v2919 = vadd.f32 0.0, %v2918
        %v2920 = vpop.f32.mrf.mxu0
        %v2921 = vadd.f32 0.0, %v2920
        %2922 = vmatmul.bf16.gmra.mxu0 %v2755
        %v2923 = vpop.f32.mrf.mxu0
        %v2924 = vadd.f32 0.0, %v2923
        %v2925 = vpop.f32.mrf.mxu0
        %v2926 = vadd.f32 0.0, %v2925
        %2927 = vmatmul.bf16.gmra.mxu0 %v2756
        %v2928 = vpop.f32.mrf.mxu0
        %v2929 = vadd.f32 0.0, %v2928
        %v2930 = vpop.f32.mrf.mxu0
        %v2931 = vadd.f32 0.0, %v2930
        %2932 = vmatmul.bf16.gmra.mxu0 %v2757
        %v2933 = vpop.f32.mrf.mxu0
        %v2934 = vadd.f32 0.0, %v2933
        %v2935 = vpop.f32.mrf.mxu0
        %v2936 = vadd.f32 0.0, %v2935
        %2937 = vmatmul.bf16.gmra.mxu0 %v2758
        %v2938 = vpop.f32.mrf.mxu0
        %v2939 = vadd.f32 0.0, %v2938
        %v2940 = vpop.f32.mrf.mxu0
        %v2941 = vadd.f32 0.0, %v2940
        %2942 = vdwg.mxu0
        %2943 = vst [vmem:[#allocation6] sm:$0xff] %v2865
        %2944 = vst [vmem:[#allocation6 + $0x8] sm:$0xff] %v2909
        %2945 = vst [vmem:[#allocation6 + $0x10] sm:$0xff] %v2867
        %2946 = vst [vmem:[#allocation6 + $0x18] sm:$0xff] %v2911
        %2947 = vst [vmem:[#allocation6 + $0x20] sm:$0xff] %v2870
        %2948 = vst [vmem:[#allocation6 + $0x28] sm:$0xff] %v2914
        %2949 = vst [vmem:[#allocation6 + $0x30] sm:$0xff] %v2872
        %2950 = vst [vmem:[#allocation6 + $0x38] sm:$0xff] %v2916
        %2951 = vst [vmem:[#allocation6 + $0x40] sm:$0xff] %v2875
        %2952 = vst [vmem:[#allocation6 + $0x48] sm:$0xff] %v2919
        %2953 = vst [vmem:[#allocation6 + $0x50] sm:$0xff] %v2877
        %2954 = vst [vmem:[#allocation6 + $0x58] sm:$0xff] %v2921
        %2955 = vst [vmem:[#allocation6 + $0x60] sm:$0xff] %v2880
        %2956 = vst [vmem:[#allocation6 + $0x68] sm:$0xff] %v2924
        %2957 = vst [vmem:[#allocation6 + $0x70] sm:$0xff] %v2882
        %2958 = vst [vmem:[#allocation6 + $0x78] sm:$0xff] %v2926
        %2959 = vst [vmem:[#allocation6 + $0x80] sm:$0xff] %v2885
        %2960 = vst [vmem:[#allocation6 + $0x88] sm:$0xff] %v2929
        %2961 = vst [vmem:[#allocation6 + $0x90] sm:$0xff] %v2887
        %2962 = vst [vmem:[#allocation6 + $0x98] sm:$0xff] %v2931
        %2963 = vst [vmem:[#allocation6 + $0xa0] sm:$0xff] %v2890
        %2964 = vst [vmem:[#allocation6 + $0xa8] sm:$0xff] %v2934
        %2965 = vst [vmem:[#allocation6 + $0xb0] sm:$0xff] %v2892
        %2966 = vst [vmem:[#allocation6 + $0xb8] sm:$0xff] %v2936
        %2967 = vst [vmem:[#allocation6 + $0xc0] sm:$0xff] %v2895
        %2968 = vst [vmem:[#allocation6 + $0xc8] sm:$0xff] %v2939
        %2969 = vst [vmem:[#allocation6 + $0xd0] sm:$0xff] %v2897
        %2970 = vst [vmem:[#allocation6 + $0xd8] sm:$0xff] %v2941
        %v2971 = vld [vmem:[#allocation6] sm:$0xff]
        %v2972 = vld [vmem:[#allocation6 + $0x8] sm:$0xff]
        %v2973 = vld [vmem:[#allocation6 + $0x10] sm:$0xff]
        %v2974 = vld [vmem:[#allocation6 + $0x18] sm:$0xff]
        %v2975 = vld [vmem:[#allocation6 + $0x20] sm:$0xff]
        %v2976 = vld [vmem:[#allocation6 + $0x28] sm:$0xff]
        %v2977 = vld [vmem:[#allocation6 + $0x30] sm:$0xff]
        %v2978 = vld [vmem:[#allocation6 + $0x38] sm:$0xff]
        %v2979 = vld [vmem:[#allocation6 + $0x40] sm:$0xff]
        %v2980 = vld [vmem:[#allocation6 + $0x48] sm:$0xff]
        %v2981 = vld [vmem:[#allocation6 + $0x50] sm:$0xff]
        %v2982 = vld [vmem:[#allocation6 + $0x58] sm:$0xff]
        %v2983 = vld [vmem:[#allocation6 + $0x60] sm:$0xff]
        %v2984 = vld [vmem:[#allocation6 + $0x68] sm:$0xff]
        %v2985 = vld [vmem:[#allocation6 + $0x70] sm:$0xff]
        %v2986 = vld [vmem:[#allocation6 + $0x78] sm:$0xff]
        %v2987 = vld [vmem:[#allocation6 + $0x80] sm:$0xff]
        %v2988 = vld [vmem:[#allocation6 + $0x88] sm:$0xff]
        %v2989 = vld [vmem:[#allocation6 + $0x90] sm:$0xff]
        %v2990 = vld [vmem:[#allocation6 + $0x98] sm:$0xff]
        %v2991 = vld [vmem:[#allocation6 + $0xa0] sm:$0xff]
        %v2992 = vld [vmem:[#allocation6 + $0xa8] sm:$0xff]
        %v2993 = vld [vmem:[#allocation6 + $0xb0] sm:$0xff]
        %v2994 = vld [vmem:[#allocation6 + $0xb8] sm:$0xff]
        %v2995 = vld [vmem:[#allocation6 + $0xc0] sm:$0xff]
        %v2996 = vld [vmem:[#allocation6 + $0xc8] sm:$0xff]
        %v2997 = vld [vmem:[#allocation6 + $0xd0] sm:$0xff]
        %v2998 = vld [vmem:[#allocation6 + $0xd8] sm:$0xff]
        %v2999 = vld [vmem:[#allocation5 + $0x1] sm:$0xff]
        %v3000 = vld [vmem:[#allocation5 + $0x9] sm:$0xff]
        %v3001 = vld [vmem:[#allocation5 + $0x11] sm:$0xff]
        %v3002 = vld [vmem:[#allocation5 + $0x19] sm:$0xff]
        %v3003 = vld [vmem:[#allocation5 + $0x21] sm:$0xff]
        %v3004 = vld [vmem:[#allocation5 + $0x29] sm:$0xff]
        %v3005 = vld [vmem:[#allocation5 + $0x31] sm:$0xff]
        %v3006 = vld [vmem:[#allocation5 + $0x39] sm:$0xff]
        %v3007 = vld [vmem:[#allocation5 + $0x41] sm:$0xff]
        %v3008 = vld [vmem:[#allocation5 + $0x49] sm:$0xff]
        %v3009 = vld [vmem:[#allocation5 + $0x51] sm:$0xff]
        %v3010 = vld [vmem:[#allocation5 + $0x59] sm:$0xff]
        %v3011 = vld [vmem:[#allocation5 + $0x61] sm:$0xff]
        %v3012 = vld [vmem:[#allocation5 + $0x69] sm:$0xff]
        %v3013 = vpack.c.bf16 %v3000, %v2999
        %v3014 = vpack.c.bf16 %v3002, %v3001
        %v3015 = vpack.c.bf16 %v3004, %v3003
        %v3016 = vpack.c.bf16 %v3006, %v3005
        %v3017 = vpack.c.bf16 %v3008, %v3007
        %v3018 = vpack.c.bf16 %v3010, %v3009
        %v3019 = vpack.c.bf16 %v3012, %v3011
        %v3020 = vld [vmem:[#allocation8 + $0x8] sm:$0xff]
        %v3021 = vld [vmem:[#allocation8 + $0x30] sm:$0xff]
        %v3022 = vld [vmem:[#allocation8 + $0x58] sm:$0xff]
        %v3023 = vld [vmem:[#allocation8 + $0x80] sm:$0xff]
        %v3024 = vld [vmem:[#allocation8 + $0xa8] sm:$0xff]
        %v3025 = vld [vmem:[#allocation8 + $0xd0] sm:$0xff]
        %v3026 = vld [vmem:[#allocation8 + $0xf8] sm:$0xff]
        %v3027 = vld [vmem:[#allocation8 + $0x120] sm:$0xff]
        %v3028 = vld [vmem:[#allocation8 + $0x148] sm:$0xff]
        %v3029 = vld [vmem:[#allocation8 + $0x170] sm:$0xff]
        %v3030 = vld [vmem:[#allocation8 + $0x198] sm:$0xff]
        %v3031 = vld [vmem:[#allocation8 + $0x1c0] sm:$0xff]
        %v3032 = vld [vmem:[#allocation8 + $0x1e8] sm:$0xff]
        %v3033 = vld [vmem:[#allocation8 + $0x210] sm:$0xff]
        %v3034 = vld [vmem:[#allocation8 + $0x238] sm:$0xff]
        %v3035 = vld [vmem:[#allocation8 + $0x260] sm:$0xff]
        %v3052 = vunpack.c.l.b16 %v3020
        %v3053 = vunpack.c.h.b16 %v3020
        %v3054 = vunpack.c.l.b16 %v3021
        %v3055 = vunpack.c.h.b16 %v3021
        %v3056 = vunpack.c.l.b16 %v3022
        %v3057 = vunpack.c.h.b16 %v3022
        %v3058 = vunpack.c.l.b16 %v3023
        %v3059 = vunpack.c.h.b16 %v3023
        %v3060 = vunpack.c.l.b16 %v3024
        %v3061 = vunpack.c.h.b16 %v3024
        %v3062 = vunpack.c.l.b16 %v3025
        %v3063 = vunpack.c.h.b16 %v3025
        %v3064 = vunpack.c.l.b16 %v3026
        %v3065 = vunpack.c.h.b16 %v3026
        %v3066 = vunpack.c.l.b16 %v3027
        %v3067 = vunpack.c.h.b16 %v3027
        %v3068 = vunpack.c.l.b16 %v3028
        %v3069 = vunpack.c.h.b16 %v3028
        %v3070 = vunpack.c.l.b16 %v3029
        %v3071 = vunpack.c.h.b16 %v3029
        %v3072 = vunpack.c.l.b16 %v3030
        %v3073 = vunpack.c.h.b16 %v3030
        %v3074 = vunpack.c.l.b16 %v3031
        %v3075 = vunpack.c.h.b16 %v3031
        %v3076 = vunpack.c.l.b16 %v3032
        %v3077 = vunpack.c.h.b16 %v3032
        %v3078 = vunpack.c.l.b16 %v3033
        %v3079 = vunpack.c.h.b16 %v3033
        %v3080 = vunpack.c.l.b16 %v3034
        %v3081 = vunpack.c.h.b16 %v3034
        %v3082 = vunpack.c.l.b16 %v3035
        %v3083 = vunpack.c.h.b16 %v3035
        %v3084 = vpack.c.b16 %v3054, %v3052
        %v3085 = vpack.c.b16 %v3055, %v3053
        %v3086 = vpack.c.b16 %v3058, %v3056
        %v3087 = vpack.c.b16 %v3059, %v3057
        %v3088 = vpack.c.b16 %v3062, %v3060
        %v3089 = vpack.c.b16 %v3063, %v3061
        %v3090 = vpack.c.b16 %v3066, %v3064
        %v3091 = vpack.c.b16 %v3067, %v3065
        %v3092 = vpack.c.b16 %v3070, %v3068
        %v3093 = vpack.c.b16 %v3071, %v3069
        %v3094 = vpack.c.b16 %v3074, %v3072
        %v3095 = vpack.c.b16 %v3075, %v3073
        %v3096 = vpack.c.b16 %v3078, %v3076
        %v3097 = vpack.c.b16 %v3079, %v3077
        %v3098 = vpack.c.b16 %v3082, %v3080
        %v3099 = vpack.c.b16 %v3083, %v3081
        %3116 = vmatpush.bf16.msra.mxu0 %v3098
        %3117 = vmatpush.bf16.msra.mxu0 %v3096
        %3118 = vmatpush.bf16.msra.mxu0 %v3094
        %3119 = vmatpush.bf16.msra.mxu0 %v3092
        %3120 = vmatpush.bf16.msra.mxu0 %v3090
        %3121 = vmatpush.bf16.msra.mxu0 %v3088
        %3122 = vmatpush.bf16.msra.mxu0 %v3086
        %3123 = vmatpush.bf16.msra.mxu0 %v3084
        %3124 = vmatmul.bf16.gmra.mxu0 %v3013
        %v3125 = vpop.f32.mrf.mxu0
        %v3126 = vadd.f32 0.0, %v3125
        %v3127 = vpop.f32.mrf.mxu0
        %v3128 = vadd.f32 0.0, %v3127
        %3129 = vmatmul.bf16.gmra.mxu0 %v3014
        %v3130 = vpop.f32.mrf.mxu0
        %v3131 = vadd.f32 0.0, %v3130
        %v3132 = vpop.f32.mrf.mxu0
        %v3133 = vadd.f32 0.0, %v3132
        %3134 = vmatmul.bf16.gmra.mxu0 %v3015
        %v3135 = vpop.f32.mrf.mxu0
        %v3136 = vadd.f32 0.0, %v3135
        %v3137 = vpop.f32.mrf.mxu0
        %v3138 = vadd.f32 0.0, %v3137
        %3139 = vmatmul.bf16.gmra.mxu0 %v3016
        %v3140 = vpop.f32.mrf.mxu0
        %v3141 = vadd.f32 0.0, %v3140
        %v3142 = vpop.f32.mrf.mxu0
        %v3143 = vadd.f32 0.0, %v3142
        %3144 = vmatmul.bf16.gmra.mxu0 %v3017
        %v3145 = vpop.f32.mrf.mxu0
        %v3146 = vadd.f32 0.0, %v3145
        %v3147 = vpop.f32.mrf.mxu0
        %v3148 = vadd.f32 0.0, %v3147
        %3149 = vmatmul.bf16.gmra.mxu0 %v3018
        %v3150 = vpop.f32.mrf.mxu0
        %v3151 = vadd.f32 0.0, %v3150
        %v3152 = vpop.f32.mrf.mxu0
        %v3153 = vadd.f32 0.0, %v3152
        %3154 = vmatmul.bf16.gmra.mxu0 %v3019
        %v3155 = vpop.f32.mrf.mxu0
        %v3156 = vadd.f32 0.0, %v3155
        %v3157 = vpop.f32.mrf.mxu0
        %v3158 = vadd.f32 0.0, %v3157
        %3159 = vdwg.mxu0
        %3160 = vmatpush.bf16.msra.mxu0 %v3099
        %3161 = vmatpush.bf16.msra.mxu0 %v3097
        %3162 = vmatpush.bf16.msra.mxu0 %v3095
        %3163 = vmatpush.bf16.msra.mxu0 %v3093
        %3164 = vmatpush.bf16.msra.mxu0 %v3091
        %3165 = vmatpush.bf16.msra.mxu0 %v3089
        %3166 = vmatpush.bf16.msra.mxu0 %v3087
        %3167 = vmatpush.bf16.msra.mxu0 %v3085
        %3168 = vmatmul.bf16.gmra.mxu0 %v3013
        %v3169 = vpop.f32.mrf.mxu0
        %v3170 = vadd.f32 0.0, %v3169
        %v3171 = vpop.f32.mrf.mxu0
        %v3172 = vadd.f32 0.0, %v3171
        %3173 = vmatmul.bf16.gmra.mxu0 %v3014
        %v3174 = vpop.f32.mrf.mxu0
        %v3175 = vadd.f32 0.0, %v3174
        %v3176 = vpop.f32.mrf.mxu0
        %v3177 = vadd.f32 0.0, %v3176
        %3178 = vmatmul.bf16.gmra.mxu0 %v3015
        %v3179 = vpop.f32.mrf.mxu0
        %v3180 = vadd.f32 0.0, %v3179
        %v3181 = vpop.f32.mrf.mxu0
        %v3182 = vadd.f32 0.0, %v3181
        %3183 = vmatmul.bf16.gmra.mxu0 %v3016
        %v3184 = vpop.f32.mrf.mxu0
        %v3185 = vadd.f32 0.0, %v3184
        %v3186 = vpop.f32.mrf.mxu0
        %v3187 = vadd.f32 0.0, %v3186
        %3188 = vmatmul.bf16.gmra.mxu0 %v3017
        %v3189 = vpop.f32.mrf.mxu0
        %v3190 = vadd.f32 0.0, %v3189
        %v3191 = vpop.f32.mrf.mxu0
        %v3192 = vadd.f32 0.0, %v3191
        %3193 = vmatmul.bf16.gmra.mxu0 %v3018
        %v3194 = vpop.f32.mrf.mxu0
        %v3195 = vadd.f32 0.0, %v3194
        %v3196 = vpop.f32.mrf.mxu0
        %v3197 = vadd.f32 0.0, %v3196
        %3198 = vmatmul.bf16.gmra.mxu0 %v3019
        %v3199 = vpop.f32.mrf.mxu0
        %v3200 = vadd.f32 0.0, %v3199
        %v3201 = vpop.f32.mrf.mxu0
        %v3202 = vadd.f32 0.0, %v3201
        %3203 = vdwg.mxu0
        %v3204 = vadd.f32 %v2971, %v3126
        %v3205 = vadd.f32 %v2972, %v3170
        %v3206 = vadd.f32 %v2973, %v3128
        %v3207 = vadd.f32 %v2974, %v3172
        %v3208 = vadd.f32 %v2975, %v3131
        %v3209 = vadd.f32 %v2976, %v3175
        %v3210 = vadd.f32 %v2977, %v3133
        %v3211 = vadd.f32 %v2978, %v3177
        %v3212 = vadd.f32 %v2979, %v3136
        %v3213 = vadd.f32 %v2980, %v3180
        %v3214 = vadd.f32 %v2981, %v3138
        %v3215 = vadd.f32 %v2982, %v3182
        %v3216 = vadd.f32 %v2983, %v3141
        %v3217 = vadd.f32 %v2984, %v3185
        %v3218 = vadd.f32 %v2985, %v3143
        %v3219 = vadd.f32 %v2986, %v3187
        %v3220 = vadd.f32 %v2987, %v3146
        %v3221 = vadd.f32 %v2988, %v3190
        %v3222 = vadd.f32 %v2989, %v3148
        %v3223 = vadd.f32 %v2990, %v3192
        %v3224 = vadd.f32 %v2991, %v3151
        %v3225 = vadd.f32 %v2992, %v3195
        %v3226 = vadd.f32 %v2993, %v3153
        %v3227 = vadd.f32 %v2994, %v3197
        %v3228 = vadd.f32 %v2995, %v3156
        %v3229 = vadd.f32 %v2996, %v3200
        %v3230 = vadd.f32 %v2997, %v3158
        %v3231 = vadd.f32 %v2998, %v3202
        %3232 = vst [vmem:[#allocation6] sm:$0xff] %v3204
        %3233 = vst [vmem:[#allocation6 + $0x8] sm:$0xff] %v3205
        %3234 = vst [vmem:[#allocation6 + $0x10] sm:$0xff] %v3206
        %3235 = vst [vmem:[#allocation6 + $0x18] sm:$0xff] %v3207
        %3236 = vst [vmem:[#allocation6 + $0x20] sm:$0xff] %v3208
        %3237 = vst [vmem:[#allocation6 + $0x28] sm:$0xff] %v3209
        %3238 = vst [vmem:[#allocation6 + $0x30] sm:$0xff] %v3210
        %3239 = vst [vmem:[#allocation6 + $0x38] sm:$0xff] %v3211
        %3240 = vst [vmem:[#allocation6 + $0x40] sm:$0xff] %v3212
        %3241 = vst [vmem:[#allocation6 + $0x48] sm:$0xff] %v3213
        %3242 = vst [vmem:[#allocation6 + $0x50] sm:$0xff] %v3214
        %3243 = vst [vmem:[#allocation6 + $0x58] sm:$0xff] %v3215
        %3244 = vst [vmem:[#allocation6 + $0x60] sm:$0xff] %v3216
        %3245 = vst [vmem:[#allocation6 + $0x68] sm:$0xff] %v3217
        %3246 = vst [vmem:[#allocation6 + $0x70] sm:$0xff] %v3218
        %3247 = vst [vmem:[#allocation6 + $0x78] sm:$0xff] %v3219
        %3248 = vst [vmem:[#allocation6 + $0x80] sm:$0xff] %v3220
        %3249 = vst [vmem:[#allocation6 + $0x88] sm:$0xff] %v3221
        %3250 = vst [vmem:[#allocation6 + $0x90] sm:$0xff] %v3222
        %3251 = vst [vmem:[#allocation6 + $0x98] sm:$0xff] %v3223
        %3252 = vst [vmem:[#allocation6 + $0xa0] sm:$0xff] %v3224
        %3253 = vst [vmem:[#allocation6 + $0xa8] sm:$0xff] %v3225
        %3254 = vst [vmem:[#allocation6 + $0xb0] sm:$0xff] %v3226
        %3255 = vst [vmem:[#allocation6 + $0xb8] sm:$0xff] %v3227
        %3256 = vst [vmem:[#allocation6 + $0xc0] sm:$0xff] %v3228
        %3257 = vst [vmem:[#allocation6 + $0xc8] sm:$0xff] %v3229
        %3258 = vst [vmem:[#allocation6 + $0xd0] sm:$0xff] %v3230
        %3259 = vst [vmem:[#allocation6 + $0xd8] sm:$0xff] %v3231
        %v3260 = vld [vmem:[#allocation6] sm:$0xff]
        %v3261 = vld [vmem:[#allocation6 + $0x8] sm:$0xff]
        %v3262 = vld [vmem:[#allocation6 + $0x10] sm:$0xff]
        %v3263 = vld [vmem:[#allocation6 + $0x18] sm:$0xff]
        %v3264 = vld [vmem:[#allocation6 + $0x20] sm:$0xff]
        %v3265 = vld [vmem:[#allocation6 + $0x28] sm:$0xff]
        %v3266 = vld [vmem:[#allocation6 + $0x30] sm:$0xff]
        %v3267 = vld [vmem:[#allocation6 + $0x38] sm:$0xff]
        %v3268 = vld [vmem:[#allocation6 + $0x40] sm:$0xff]
        %v3269 = vld [vmem:[#allocation6 + $0x48] sm:$0xff]
        %v3270 = vld [vmem:[#allocation6 + $0x50] sm:$0xff]
        %v3271 = vld [vmem:[#allocation6 + $0x58] sm:$0xff]
        %v3272 = vld [vmem:[#allocation6 + $0x60] sm:$0xff]
        %v3273 = vld [vmem:[#allocation6 + $0x68] sm:$0xff]
        %v3274 = vld [vmem:[#allocation6 + $0x70] sm:$0xff]
        %v3275 = vld [vmem:[#allocation6 + $0x78] sm:$0xff]
        %v3276 = vld [vmem:[#allocation6 + $0x80] sm:$0xff]
        %v3277 = vld [vmem:[#allocation6 + $0x88] sm:$0xff]
        %v3278 = vld [vmem:[#allocation6 + $0x90] sm:$0xff]
        %v3279 = vld [vmem:[#allocation6 + $0x98] sm:$0xff]
        %v3280 = vld [vmem:[#allocation6 + $0xa0] sm:$0xff]
        %v3281 = vld [vmem:[#allocation6 + $0xa8] sm:$0xff]
        %v3282 = vld [vmem:[#allocation6 + $0xb0] sm:$0xff]
        %v3283 = vld [vmem:[#allocation6 + $0xb8] sm:$0xff]
        %v3284 = vld [vmem:[#allocation6 + $0xc0] sm:$0xff]
        %v3285 = vld [vmem:[#allocation6 + $0xc8] sm:$0xff]
        %v3286 = vld [vmem:[#allocation6 + $0xd0] sm:$0xff]
        %v3287 = vld [vmem:[#allocation6 + $0xd8] sm:$0xff]
        %v3288 = vld [vmem:[#allocation5 + $0x2] sm:$0xff]
        %v3289 = vld [vmem:[#allocation5 + $0xa] sm:$0xff]
        %v3290 = vld [vmem:[#allocation5 + $0x12] sm:$0xff]
        %v3291 = vld [vmem:[#allocation5 + $0x1a] sm:$0xff]
        %v3292 = vld [vmem:[#allocation5 + $0x22] sm:$0xff]
        %v3293 = vld [vmem:[#allocation5 + $0x2a] sm:$0xff]
        %v3294 = vld [vmem:[#allocation5 + $0x32] sm:$0xff]
        %v3295 = vld [vmem:[#allocation5 + $0x3a] sm:$0xff]
        %v3296 = vld [vmem:[#allocation5 + $0x42] sm:$0xff]
        %v3297 = vld [vmem:[#allocation5 + $0x4a] sm:$0xff]
        %v3298 = vld [vmem:[#allocation5 + $0x52] sm:$0xff]
        %v3299 = vld [vmem:[#allocation5 + $0x5a] sm:$0xff]
        %v3300 = vld [vmem:[#allocation5 + $0x62] sm:$0xff]
        %v3301 = vld [vmem:[#allocation5 + $0x6a] sm:$0xff]
        %v3302 = vpack.c.bf16 %v3289, %v3288
        %v3303 = vpack.c.bf16 %v3291, %v3290
        %v3304 = vpack.c.bf16 %v3293, %v3292
        %v3305 = vpack.c.bf16 %v3295, %v3294
        %v3306 = vpack.c.bf16 %v3297, %v3296
        %v3307 = vpack.c.bf16 %v3299, %v3298
        %v3308 = vpack.c.bf16 %v3301, %v3300
        %v3309 = vld [vmem:[#allocation8 + $0x10] sm:$0xff]
        %v3310 = vld [vmem:[#allocation8 + $0x38] sm:$0xff]
        %v3311 = vld [vmem:[#allocation8 + $0x60] sm:$0xff]
        %v3312 = vld [vmem:[#allocation8 + $0x88] sm:$0xff]
        %v3313 = vld [vmem:[#allocation8 + $0xb0] sm:$0xff]
        %v3314 = vld [vmem:[#allocation8 + $0xd8] sm:$0xff]
        %v3315 = vld [vmem:[#allocation8 + $0x100] sm:$0xff]
        %v3316 = vld [vmem:[#allocation8 + $0x128] sm:$0xff]
        %v3317 = vld [vmem:[#allocation8 + $0x150] sm:$0xff]
        %v3318 = vld [vmem:[#allocation8 + $0x178] sm:$0xff]
        %v3319 = vld [vmem:[#allocation8 + $0x1a0] sm:$0xff]
        %v3320 = vld [vmem:[#allocation8 + $0x1c8] sm:$0xff]
        %v3321 = vld [vmem:[#allocation8 + $0x1f0] sm:$0xff]
        %v3322 = vld [vmem:[#allocation8 + $0x218] sm:$0xff]
        %v3323 = vld [vmem:[#allocation8 + $0x240] sm:$0xff]
        %v3324 = vld [vmem:[#allocation8 + $0x268] sm:$0xff]
        %v3341 = vunpack.c.l.b16 %v3309
        %v3342 = vunpack.c.h.b16 %v3309
        %v3343 = vunpack.c.l.b16 %v3310
        %v3344 = vunpack.c.h.b16 %v3310
        %v3345 = vunpack.c.l.b16 %v3311
        %v3346 = vunpack.c.h.b16 %v3311
        %v3347 = vunpack.c.l.b16 %v3312
        %v3348 = vunpack.c.h.b16 %v3312
        %v3349 = vunpack.c.l.b16 %v3313
        %v3350 = vunpack.c.h.b16 %v3313
        %v3351 = vunpack.c.l.b16 %v3314
        %v3352 = vunpack.c.h.b16 %v3314
        %v3353 = vunpack.c.l.b16 %v3315
        %v3354 = vunpack.c.h.b16 %v3315
        %v3355 = vunpack.c.l.b16 %v3316
        %v3356 = vunpack.c.h.b16 %v3316
        %v3357 = vunpack.c.l.b16 %v3317
        %v3358 = vunpack.c.h.b16 %v3317
        %v3359 = vunpack.c.l.b16 %v3318
        %v3360 = vunpack.c.h.b16 %v3318
        %v3361 = vunpack.c.l.b16 %v3319
        %v3362 = vunpack.c.h.b16 %v3319
        %v3363 = vunpack.c.l.b16 %v3320
        %v3364 = vunpack.c.h.b16 %v3320
        %v3365 = vunpack.c.l.b16 %v3321
        %v3366 = vunpack.c.h.b16 %v3321
        %v3367 = vunpack.c.l.b16 %v3322
        %v3368 = vunpack.c.h.b16 %v3322
        %v3369 = vunpack.c.l.b16 %v3323
        %v3370 = vunpack.c.h.b16 %v3323
        %v3371 = vunpack.c.l.b16 %v3324
        %v3372 = vunpack.c.h.b16 %v3324
        %v3373 = vpack.c.b16 %v3343, %v3341
        %v3374 = vpack.c.b16 %v3344, %v3342
        %v3375 = vpack.c.b16 %v3347, %v3345
        %v3376 = vpack.c.b16 %v3348, %v3346
        %v3377 = vpack.c.b16 %v3351, %v3349
        %v3378 = vpack.c.b16 %v3352, %v3350
        %v3379 = vpack.c.b16 %v3355, %v3353
        %v3380 = vpack.c.b16 %v3356, %v3354
        %v3381 = vpack.c.b16 %v3359, %v3357
        %v3382 = vpack.c.b16 %v3360, %v3358
        %v3383 = vpack.c.b16 %v3363, %v3361
        %v3384 = vpack.c.b16 %v3364, %v3362
        %v3385 = vpack.c.b16 %v3367, %v3365
        %v3386 = vpack.c.b16 %v3368, %v3366
        %v3387 = vpack.c.b16 %v3371, %v3369
        %v3388 = vpack.c.b16 %v3372, %v3370
        %3405 = vmatpush.bf16.msra.mxu0 %v3387
        %3406 = vmatpush.bf16.msra.mxu0 %v3385
        %3407 = vmatpush.bf16.msra.mxu0 %v3383
        %3408 = vmatpush.bf16.msra.mxu0 %v3381
        %3409 = vmatpush.bf16.msra.mxu0 %v3379
        %3410 = vmatpush.bf16.msra.mxu0 %v3377
        %3411 = vmatpush.bf16.msra.mxu0 %v3375
        %3412 = vmatpush.bf16.msra.mxu0 %v3373
        %3413 = vmatmul.bf16.gmra.mxu0 %v3302
        %v3414 = vpop.f32.mrf.mxu0
        %v3415 = vadd.f32 0.0, %v3414
        %v3416 = vpop.f32.mrf.mxu0
        %v3417 = vadd.f32 0.0, %v3416
        %3418 = vmatmul.bf16.gmra.mxu0 %v3303
        %v3419 = vpop.f32.mrf.mxu0
        %v3420 = vadd.f32 0.0, %v3419
        %v3421 = vpop.f32.mrf.mxu0
        %v3422 = vadd.f32 0.0, %v3421
        %3423 = vmatmul.bf16.gmra.mxu0 %v3304
        %v3424 = vpop.f32.mrf.mxu0
        %v3425 = vadd.f32 0.0, %v3424
        %v3426 = vpop.f32.mrf.mxu0
        %v3427 = vadd.f32 0.0, %v3426
        %3428 = vmatmul.bf16.gmra.mxu0 %v3305
        %v3429 = vpop.f32.mrf.mxu0
        %v3430 = vadd.f32 0.0, %v3429
        %v3431 = vpop.f32.mrf.mxu0
        %v3432 = vadd.f32 0.0, %v3431
        %3433 = vmatmul.bf16.gmra.mxu0 %v3306
        %v3434 = vpop.f32.mrf.mxu0
        %v3435 = vadd.f32 0.0, %v3434
        %v3436 = vpop.f32.mrf.mxu0
        %v3437 = vadd.f32 0.0, %v3436
        %3438 = vmatmul.bf16.gmra.mxu0 %v3307
        %v3439 = vpop.f32.mrf.mxu0
        %v3440 = vadd.f32 0.0, %v3439
        %v3441 = vpop.f32.mrf.mxu0
        %v3442 = vadd.f32 0.0, %v3441
        %3443 = vmatmul.bf16.gmra.mxu0 %v3308
        %v3444 = vpop.f32.mrf.mxu0
        %v3445 = vadd.f32 0.0, %v3444
        %v3446 = vpop.f32.mrf.mxu0
        %v3447 = vadd.f32 0.0, %v3446
        %3448 = vdwg.mxu0
        %3449 = vmatpush.bf16.msra.mxu0 %v3388
        %3450 = vmatpush.bf16.msra.mxu0 %v3386
        %3451 = vmatpush.bf16.msra.mxu0 %v3384
        %3452 = vmatpush.bf16.msra.mxu0 %v3382
        %3453 = vmatpush.bf16.msra.mxu0 %v3380
        %3454 = vmatpush.bf16.msra.mxu0 %v3378
        %3455 = vmatpush.bf16.msra.mxu0 %v3376
        %3456 = vmatpush.bf16.msra.mxu0 %v3374
        %3457 = vmatmul.bf16.gmra.mxu0 %v3302
        %v3458 = vpop.f32.mrf.mxu0
        %v3459 = vadd.f32 0.0, %v3458
        %v3460 = vpop.f32.mrf.mxu0
        %v3461 = vadd.f32 0.0, %v3460
        %3462 = vmatmul.bf16.gmra.mxu0 %v3303
        %v3463 = vpop.f32.mrf.mxu0
        %v3464 = vadd.f32 0.0, %v3463
        %v3465 = vpop.f32.mrf.mxu0
        %v3466 = vadd.f32 0.0, %v3465
        %3467 = vmatmul.bf16.gmra.mxu0 %v3304
        %v3468 = vpop.f32.mrf.mxu0
        %v3469 = vadd.f32 0.0, %v3468
        %v3470 = vpop.f32.mrf.mxu0
        %v3471 = vadd.f32 0.0, %v3470
        %3472 = vmatmul.bf16.gmra.mxu0 %v3305
        %v3473 = vpop.f32.mrf.mxu0
        %v3474 = vadd.f32 0.0, %v3473
        %v3475 = vpop.f32.mrf.mxu0
        %v3476 = vadd.f32 0.0, %v3475
        %3477 = vmatmul.bf16.gmra.mxu0 %v3306
        %v3478 = vpop.f32.mrf.mxu0
        %v3479 = vadd.f32 0.0, %v3478
        %v3480 = vpop.f32.mrf.mxu0
        %v3481 = vadd.f32 0.0, %v3480
        %3482 = vmatmul.bf16.gmra.mxu0 %v3307
        %v3483 = vpop.f32.mrf.mxu0
        %v3484 = vadd.f32 0.0, %v3483
        %v3485 = vpop.f32.mrf.mxu0
        %v3486 = vadd.f32 0.0, %v3485
        %3487 = vmatmul.bf16.gmra.mxu0 %v3308
        %v3488 = vpop.f32.mrf.mxu0
        %v3489 = vadd.f32 0.0, %v3488
        %v3490 = vpop.f32.mrf.mxu0
        %v3491 = vadd.f32 0.0, %v3490
        %3492 = vdwg.mxu0
        %v3493 = vadd.f32 %v3260, %v3415
        %v3494 = vadd.f32 %v3261, %v3459
        %v3495 = vadd.f32 %v3262, %v3417
        %v3496 = vadd.f32 %v3263, %v3461
        %v3497 = vadd.f32 %v3264, %v3420
        %v3498 = vadd.f32 %v3265, %v3464
        %v3499 = vadd.f32 %v3266, %v3422
        %v3500 = vadd.f32 %v3267, %v3466
        %v3501 = vadd.f32 %v3268, %v3425
        %v3502 = vadd.f32 %v3269, %v3469
        %v3503 = vadd.f32 %v3270, %v3427
        %v3504 = vadd.f32 %v3271, %v3471
        %v3505 = vadd.f32 %v3272, %v3430
        %v3506 = vadd.f32 %v3273, %v3474
        %v3507 = vadd.f32 %v3274, %v3432
        %v3508 = vadd.f32 %v3275, %v3476
        %v3509 = vadd.f32 %v3276, %v3435
        %v3510 = vadd.f32 %v3277, %v3479
        %v3511 = vadd.f32 %v3278, %v3437
        %v3512 = vadd.f32 %v3279, %v3481
        %v3513 = vadd.f32 %v3280, %v3440
        %v3514 = vadd.f32 %v3281, %v3484
        %v3515 = vadd.f32 %v3282, %v3442
        %v3516 = vadd.f32 %v3283, %v3486
        %v3517 = vadd.f32 %v3284, %v3445
        %v3518 = vadd.f32 %v3285, %v3489
        %v3519 = vadd.f32 %v3286, %v3447
        %v3520 = vadd.f32 %v3287, %v3491
        %3521 = vst [vmem:[#allocation6] sm:$0xff] %v3493
        %3522 = vst [vmem:[#allocation6 + $0x8] sm:$0xff] %v3494
        %3523 = vst [vmem:[#allocation6 + $0x10] sm:$0xff] %v3495
        %3524 = vst [vmem:[#allocation6 + $0x18] sm:$0xff] %v3496
        %3525 = vst [vmem:[#allocation6 + $0x20] sm:$0xff] %v3497
        %3526 = vst [vmem:[#allocation6 + $0x28] sm:$0xff] %v3498
        %3527 = vst [vmem:[#allocation6 + $0x30] sm:$0xff] %v3499
        %3528 = vst [vmem:[#allocation6 + $0x38] sm:$0xff] %v3500
        %3529 = vst [vmem:[#allocation6 + $0x40] sm:$0xff] %v3501
        %3530 = vst [vmem:[#allocation6 + $0x48] sm:$0xff] %v3502
        %3531 = vst [vmem:[#allocation6 + $0x50] sm:$0xff] %v3503
        %3532 = vst [vmem:[#allocation6 + $0x58] sm:$0xff] %v3504
        %3533 = vst [vmem:[#allocation6 + $0x60] sm:$0xff] %v3505
        %3534 = vst [vmem:[#allocation6 + $0x68] sm:$0xff] %v3506
        %3535 = vst [vmem:[#allocation6 + $0x70] sm:$0xff] %v3507
        %3536 = vst [vmem:[#allocation6 + $0x78] sm:$0xff] %v3508
        %3537 = vst [vmem:[#allocation6 + $0x80] sm:$0xff] %v3509
        %3538 = vst [vmem:[#allocation6 + $0x88] sm:$0xff] %v3510
        %3539 = vst [vmem:[#allocation6 + $0x90] sm:$0xff] %v3511
        %3540 = vst [vmem:[#allocation6 + $0x98] sm:$0xff] %v3512
        %3541 = vst [vmem:[#allocation6 + $0xa0] sm:$0xff] %v3513
        %3542 = vst [vmem:[#allocation6 + $0xa8] sm:$0xff] %v3514
        %3543 = vst [vmem:[#allocation6 + $0xb0] sm:$0xff] %v3515
        %3544 = vst [vmem:[#allocation6 + $0xb8] sm:$0xff] %v3516
        %3545 = vst [vmem:[#allocation6 + $0xc0] sm:$0xff] %v3517
        %3546 = vst [vmem:[#allocation6 + $0xc8] sm:$0xff] %v3518
        %3547 = vst [vmem:[#allocation6 + $0xd0] sm:$0xff] %v3519
        %3548 = vst [vmem:[#allocation6 + $0xd8] sm:$0xff] %v3520
        %v3549 = vld [vmem:[#allocation6] sm:$0xff]
        %v3550 = vld [vmem:[#allocation6 + $0x8] sm:$0xff]
        %v3551 = vld [vmem:[#allocation6 + $0x10] sm:$0xff]
        %v3552 = vld [vmem:[#allocation6 + $0x18] sm:$0xff]
        %v3553 = vld [vmem:[#allocation6 + $0x20] sm:$0xff]
        %v3554 = vld [vmem:[#allocation6 + $0x28] sm:$0xff]
        %v3555 = vld [vmem:[#allocation6 + $0x30] sm:$0xff]
        %v3556 = vld [vmem:[#allocation6 + $0x38] sm:$0xff]
        %v3557 = vld [vmem:[#allocation6 + $0x40] sm:$0xff]
        %v3558 = vld [vmem:[#allocation6 + $0x48] sm:$0xff]
        %v3559 = vld [vmem:[#allocation6 + $0x50] sm:$0xff]
        %v3560 = vld [vmem:[#allocation6 + $0x58] sm:$0xff]
        %v3561 = vld [vmem:[#allocation6 + $0x60] sm:$0xff]
        %v3562 = vld [vmem:[#allocation6 + $0x68] sm:$0xff]
        %v3563 = vld [vmem:[#allocation6 + $0x70] sm:$0xff]
        %v3564 = vld [vmem:[#allocation6 + $0x78] sm:$0xff]
        %v3565 = vld [vmem:[#allocation6 + $0x80] sm:$0xff]
        %v3566 = vld [vmem:[#allocation6 + $0x88] sm:$0xff]
        %v3567 = vld [vmem:[#allocation6 + $0x90] sm:$0xff]
        %v3568 = vld [vmem:[#allocation6 + $0x98] sm:$0xff]
        %v3569 = vld [vmem:[#allocation6 + $0xa0] sm:$0xff]
        %v3570 = vld [vmem:[#allocation6 + $0xa8] sm:$0xff]
        %v3571 = vld [vmem:[#allocation6 + $0xb0] sm:$0xff]
        %v3572 = vld [vmem:[#allocation6 + $0xb8] sm:$0xff]
        %v3573 = vld [vmem:[#allocation6 + $0xc0] sm:$0xff]
        %v3574 = vld [vmem:[#allocation6 + $0xc8] sm:$0xff]
        %v3575 = vld [vmem:[#allocation6 + $0xd0] sm:$0xff]
        %v3576 = vld [vmem:[#allocation6 + $0xd8] sm:$0xff]
        %v3577 = vld [vmem:[#allocation5 + $0x3] sm:$0xff]
        %v3578 = vld [vmem:[#allocation5 + $0xb] sm:$0xff]
        %v3579 = vld [vmem:[#allocation5 + $0x13] sm:$0xff]
        %v3580 = vld [vmem:[#allocation5 + $0x1b] sm:$0xff]
        %v3581 = vld [vmem:[#allocation5 + $0x23] sm:$0xff]
        %v3582 = vld [vmem:[#allocation5 + $0x2b] sm:$0xff]
        %v3583 = vld [vmem:[#allocation5 + $0x33] sm:$0xff]
        %v3584 = vld [vmem:[#allocation5 + $0x3b] sm:$0xff]
        %v3585 = vld [vmem:[#allocation5 + $0x43] sm:$0xff]
        %v3586 = vld [vmem:[#allocation5 + $0x4b] sm:$0xff]
        %v3587 = vld [vmem:[#allocation5 + $0x53] sm:$0xff]
        %v3588 = vld [vmem:[#allocation5 + $0x5b] sm:$0xff]
        %v3589 = vld [vmem:[#allocation5 + $0x63] sm:$0xff]
        %v3590 = vld [vmem:[#allocation5 + $0x6b] sm:$0xff]
        %v3591 = vpack.c.bf16 %v3578, %v3577
        %v3592 = vpack.c.bf16 %v3580, %v3579
        %v3593 = vpack.c.bf16 %v3582, %v3581
        %v3594 = vpack.c.bf16 %v3584, %v3583
        %v3595 = vpack.c.bf16 %v3586, %v3585
        %v3596 = vpack.c.bf16 %v3588, %v3587
        %v3597 = vpack.c.bf16 %v3590, %v3589
        %v3598 = vld [vmem:[#allocation8 + $0x18] sm:$0xff]
        %v3599 = vld [vmem:[#allocation8 + $0x40] sm:$0xff]
        %v3600 = vld [vmem:[#allocation8 + $0x68] sm:$0xff]
        %v3601 = vld [vmem:[#allocation8 + $0x90] sm:$0xff]
        %v3602 = vld [vmem:[#allocation8 + $0xb8] sm:$0xff]
        %v3603 = vld [vmem:[#allocation8 + $0xe0] sm:$0xff]
        %v3604 = vld [vmem:[#allocation8 + $0x108] sm:$0xff]
        %v3605 = vld [vmem:[#allocation8 + $0x130] sm:$0xff]
        %v3606 = vld [vmem:[#allocation8 + $0x158] sm:$0xff]
        %v3607 = vld [vmem:[#allocation8 + $0x180] sm:$0xff]
        %v3608 = vld [vmem:[#allocation8 + $0x1a8] sm:$0xff]
        %v3609 = vld [vmem:[#allocation8 + $0x1d0] sm:$0xff]
        %v3610 = vld [vmem:[#allocation8 + $0x1f8] sm:$0xff]
        %v3611 = vld [vmem:[#allocation8 + $0x220] sm:$0xff]
        %v3612 = vld [vmem:[#allocation8 + $0x248] sm:$0xff]
        %v3613 = vld [vmem:[#allocation8 + $0x270] sm:$0xff]
        %v3630 = vunpack.c.l.b16 %v3598
        %v3631 = vunpack.c.h.b16 %v3598
        %v3632 = vunpack.c.l.b16 %v3599
        %v3633 = vunpack.c.h.b16 %v3599
        %v3634 = vunpack.c.l.b16 %v3600
        %v3635 = vunpack.c.h.b16 %v3600
        %v3636 = vunpack.c.l.b16 %v3601
        %v3637 = vunpack.c.h.b16 %v3601
        %v3638 = vunpack.c.l.b16 %v3602
        %v3639 = vunpack.c.h.b16 %v3602
        %v3640 = vunpack.c.l.b16 %v3603
        %v3641 = vunpack.c.h.b16 %v3603
        %v3642 = vunpack.c.l.b16 %v3604
        %v3643 = vunpack.c.h.b16 %v3604
        %v3644 = vunpack.c.l.b16 %v3605
        %v3645 = vunpack.c.h.b16 %v3605
        %v3646 = vunpack.c.l.b16 %v3606
        %v3647 = vunpack.c.h.b16 %v3606
        %v3648 = vunpack.c.l.b16 %v3607
        %v3649 = vunpack.c.h.b16 %v3607
        %v3650 = vunpack.c.l.b16 %v3608
        %v3651 = vunpack.c.h.b16 %v3608
        %v3652 = vunpack.c.l.b16 %v3609
        %v3653 = vunpack.c.h.b16 %v3609
        %v3654 = vunpack.c.l.b16 %v3610
        %v3655 = vunpack.c.h.b16 %v3610
        %v3656 = vunpack.c.l.b16 %v3611
        %v3657 = vunpack.c.h.b16 %v3611
        %v3658 = vunpack.c.l.b16 %v3612
        %v3659 = vunpack.c.h.b16 %v3612
        %v3660 = vunpack.c.l.b16 %v3613
        %v3661 = vunpack.c.h.b16 %v3613
        %v3662 = vpack.c.b16 %v3632, %v3630
        %v3663 = vpack.c.b16 %v3633, %v3631
        %v3664 = vpack.c.b16 %v3636, %v3634
        %v3665 = vpack.c.b16 %v3637, %v3635
        %v3666 = vpack.c.b16 %v3640, %v3638
        %v3667 = vpack.c.b16 %v3641, %v3639
        %v3668 = vpack.c.b16 %v3644, %v3642
        %v3669 = vpack.c.b16 %v3645, %v3643
        %v3670 = vpack.c.b16 %v3648, %v3646
        %v3671 = vpack.c.b16 %v3649, %v3647
        %v3672 = vpack.c.b16 %v3652, %v3650
        %v3673 = vpack.c.b16 %v3653, %v3651
        %v3674 = vpack.c.b16 %v3656, %v3654
        %v3675 = vpack.c.b16 %v3657, %v3655
        %v3676 = vpack.c.b16 %v3660, %v3658
        %v3677 = vpack.c.b16 %v3661, %v3659
        %3694 = vmatpush.bf16.msra.mxu0 %v3676
        %3695 = vmatpush.bf16.msra.mxu0 %v3674
        %3696 = vmatpush.bf16.msra.mxu0 %v3672
        %3697 = vmatpush.bf16.msra.mxu0 %v3670
        %3698 = vmatpush.bf16.msra.mxu0 %v3668
        %3699 = vmatpush.bf16.msra.mxu0 %v3666
        %3700 = vmatpush.bf16.msra.mxu0 %v3664
        %3701 = vmatpush.bf16.msra.mxu0 %v3662
        %3702 = vmatmul.bf16.gmra.mxu0 %v3591
        %v3703 = vpop.f32.mrf.mxu0
        %v3704 = vadd.f32 0.0, %v3703
        %v3705 = vpop.f32.mrf.mxu0
        %v3706 = vadd.f32 0.0, %v3705
        %3707 = vmatmul.bf16.gmra.mxu0 %v3592
        %v3708 = vpop.f32.mrf.mxu0
        %v3709 = vadd.f32 0.0, %v3708
        %v3710 = vpop.f32.mrf.mxu0
        %v3711 = vadd.f32 0.0, %v3710
        %3712 = vmatmul.bf16.gmra.mxu0 %v3593
        %v3713 = vpop.f32.mrf.mxu0
        %v3714 = vadd.f32 0.0, %v3713
        %v3715 = vpop.f32.mrf.mxu0
        %v3716 = vadd.f32 0.0, %v3715
        %3717 = vmatmul.bf16.gmra.mxu0 %v3594
        %v3718 = vpop.f32.mrf.mxu0
        %v3719 = vadd.f32 0.0, %v3718
        %v3720 = vpop.f32.mrf.mxu0
        %v3721 = vadd.f32 0.0, %v3720
        %3722 = vmatmul.bf16.gmra.mxu0 %v3595
        %v3723 = vpop.f32.mrf.mxu0
        %v3724 = vadd.f32 0.0, %v3723
        %v3725 = vpop.f32.mrf.mxu0
        %v3726 = vadd.f32 0.0, %v3725
        %3727 = vmatmul.bf16.gmra.mxu0 %v3596
        %v3728 = vpop.f32.mrf.mxu0
        %v3729 = vadd.f32 0.0, %v3728
        %v3730 = vpop.f32.mrf.mxu0
        %v3731 = vadd.f32 0.0, %v3730
        %3732 = vmatmul.bf16.gmra.mxu0 %v3597
        %v3733 = vpop.f32.mrf.mxu0
        %v3734 = vadd.f32 0.0, %v3733
        %v3735 = vpop.f32.mrf.mxu0
        %v3736 = vadd.f32 0.0, %v3735
        %3737 = vdwg.mxu0
        %3738 = vmatpush.bf16.msra.mxu0 %v3677
        %3739 = vmatpush.bf16.msra.mxu0 %v3675
        %3740 = vmatpush.bf16.msra.mxu0 %v3673
        %3741 = vmatpush.bf16.msra.mxu0 %v3671
        %3742 = vmatpush.bf16.msra.mxu0 %v3669
        %3743 = vmatpush.bf16.msra.mxu0 %v3667
        %3744 = vmatpush.bf16.msra.mxu0 %v3665
        %3745 = vmatpush.bf16.msra.mxu0 %v3663
        %3746 = vmatmul.bf16.gmra.mxu0 %v3591
        %v3747 = vpop.f32.mrf.mxu0
        %v3748 = vadd.f32 0.0, %v3747
        %v3749 = vpop.f32.mrf.mxu0
        %v3750 = vadd.f32 0.0, %v3749
        %3751 = vmatmul.bf16.gmra.mxu0 %v3592
        %v3752 = vpop.f32.mrf.mxu0
        %v3753 = vadd.f32 0.0, %v3752
        %v3754 = vpop.f32.mrf.mxu0
        %v3755 = vadd.f32 0.0, %v3754
        %3756 = vmatmul.bf16.gmra.mxu0 %v3593
        %v3757 = vpop.f32.mrf.mxu0
        %v3758 = vadd.f32 0.0, %v3757
        %v3759 = vpop.f32.mrf.mxu0
        %v3760 = vadd.f32 0.0, %v3759
        %3761 = vmatmul.bf16.gmra.mxu0 %v3594
        %v3762 = vpop.f32.mrf.mxu0
        %v3763 = vadd.f32 0.0, %v3762
        %v3764 = vpop.f32.mrf.mxu0
        %v3765 = vadd.f32 0.0, %v3764
        %3766 = vmatmul.bf16.gmra.mxu0 %v3595
        %v3767 = vpop.f32.mrf.mxu0
        %v3768 = vadd.f32 0.0, %v3767
        %v3769 = vpop.f32.mrf.mxu0
        %v3770 = vadd.f32 0.0, %v3769
        %3771 = vmatmul.bf16.gmra.mxu0 %v3596
        %v3772 = vpop.f32.mrf.mxu0
        %v3773 = vadd.f32 0.0, %v3772
        %v3774 = vpop.f32.mrf.mxu0
        %v3775 = vadd.f32 0.0, %v3774
        %3776 = vmatmul.bf16.gmra.mxu0 %v3597
        %v3777 = vpop.f32.mrf.mxu0
        %v3778 = vadd.f32 0.0, %v3777
        %v3779 = vpop.f32.mrf.mxu0
        %v3780 = vadd.f32 0.0, %v3779
        %3781 = vdwg.mxu0
        %v3782 = vadd.f32 %v3549, %v3704
        %v3783 = vadd.f32 %v3550, %v3748
        %v3784 = vadd.f32 %v3551, %v3706
        %v3785 = vadd.f32 %v3552, %v3750
        %v3786 = vadd.f32 %v3553, %v3709
        %v3787 = vadd.f32 %v3554, %v3753
        %v3788 = vadd.f32 %v3555, %v3711
        %v3789 = vadd.f32 %v3556, %v3755
        %v3790 = vadd.f32 %v3557, %v3714
        %v3791 = vadd.f32 %v3558, %v3758
        %v3792 = vadd.f32 %v3559, %v3716
        %v3793 = vadd.f32 %v3560, %v3760
        %v3794 = vadd.f32 %v3561, %v3719
        %v3795 = vadd.f32 %v3562, %v3763
        %v3796 = vadd.f32 %v3563, %v3721
        %v3797 = vadd.f32 %v3564, %v3765
        %v3798 = vadd.f32 %v3565, %v3724
        %v3799 = vadd.f32 %v3566, %v3768
        %v3800 = vadd.f32 %v3567, %v3726
        %v3801 = vadd.f32 %v3568, %v3770
        %v3802 = vadd.f32 %v3569, %v3729
        %v3803 = vadd.f32 %v3570, %v3773
        %v3804 = vadd.f32 %v3571, %v3731
        %v3805 = vadd.f32 %v3572, %v3775
        %v3806 = vadd.f32 %v3573, %v3734
        %v3807 = vadd.f32 %v3574, %v3778
        %v3808 = vadd.f32 %v3575, %v3736
        %v3809 = vadd.f32 %v3576, %v3780
        %3810 = vst [vmem:[#allocation6] sm:$0xff] %v3782
        %3811 = vst [vmem:[#allocation6 + $0x8] sm:$0xff] %v3783
        %3812 = vst [vmem:[#allocation6 + $0x10] sm:$0xff] %v3784
        %3813 = vst [vmem:[#allocation6 + $0x18] sm:$0xff] %v3785
        %3814 = vst [vmem:[#allocation6 + $0x20] sm:$0xff] %v3786
        %3815 = vst [vmem:[#allocation6 + $0x28] sm:$0xff] %v3787
        %3816 = vst [vmem:[#allocation6 + $0x30] sm:$0xff] %v3788
        %3817 = vst [vmem:[#allocation6 + $0x38] sm:$0xff] %v3789
        %3818 = vst [vmem:[#allocation6 + $0x40] sm:$0xff] %v3790
        %3819 = vst [vmem:[#allocation6 + $0x48] sm:$0xff] %v3791
        %3820 = vst [vmem:[#allocation6 + $0x50] sm:$0xff] %v3792
        %3821 = vst [vmem:[#allocation6 + $0x58] sm:$0xff] %v3793
        %3822 = vst [vmem:[#allocation6 + $0x60] sm:$0xff] %v3794
        %3823 = vst [vmem:[#allocation6 + $0x68] sm:$0xff] %v3795
        %3824 = vst [vmem:[#allocation6 + $0x70] sm:$0xff] %v3796
        %3825 = vst [vmem:[#allocation6 + $0x78] sm:$0xff] %v3797
        %3826 = vst [vmem:[#allocation6 + $0x80] sm:$0xff] %v3798
        %3827 = vst [vmem:[#allocation6 + $0x88] sm:$0xff] %v3799
        %3828 = vst [vmem:[#allocation6 + $0x90] sm:$0xff] %v3800
        %3829 = vst [vmem:[#allocation6 + $0x98] sm:$0xff] %v3801
        %3830 = vst [vmem:[#allocation6 + $0xa0] sm:$0xff] %v3802
        %3831 = vst [vmem:[#allocation6 + $0xa8] sm:$0xff] %v3803
        %3832 = vst [vmem:[#allocation6 + $0xb0] sm:$0xff] %v3804
        %3833 = vst [vmem:[#allocation6 + $0xb8] sm:$0xff] %v3805
        %3834 = vst [vmem:[#allocation6 + $0xc0] sm:$0xff] %v3806
        %3835 = vst [vmem:[#allocation6 + $0xc8] sm:$0xff] %v3807
        %3836 = vst [vmem:[#allocation6 + $0xd0] sm:$0xff] %v3808
        %3837 = vst [vmem:[#allocation6 + $0xd8] sm:$0xff] %v3809
        %v3838 = vld [vmem:[#allocation6] sm:$0xff]
        %v3839 = vld [vmem:[#allocation6 + $0x8] sm:$0xff]
        %v3840 = vld [vmem:[#allocation6 + $0x10] sm:$0xff]
        %v3841 = vld [vmem:[#allocation6 + $0x18] sm:$0xff]
        %v3842 = vld [vmem:[#allocation6 + $0x20] sm:$0xff]
        %v3843 = vld [vmem:[#allocation6 + $0x28] sm:$0xff]
        %v3844 = vld [vmem:[#allocation6 + $0x30] sm:$0xff]
        %v3845 = vld [vmem:[#allocation6 + $0x38] sm:$0xff]
        %v3846 = vld [vmem:[#allocation6 + $0x40] sm:$0xff]
        %v3847 = vld [vmem:[#allocation6 + $0x48] sm:$0xff]
        %v3848 = vld [vmem:[#allocation6 + $0x50] sm:$0xff]
        %v3849 = vld [vmem:[#allocation6 + $0x58] sm:$0xff]
        %v3850 = vld [vmem:[#allocation6 + $0x60] sm:$0xff]
        %v3851 = vld [vmem:[#allocation6 + $0x68] sm:$0xff]
        %v3852 = vld [vmem:[#allocation6 + $0x70] sm:$0xff]
        %v3853 = vld [vmem:[#allocation6 + $0x78] sm:$0xff]
        %v3854 = vld [vmem:[#allocation6 + $0x80] sm:$0xff]
        %v3855 = vld [vmem:[#allocation6 + $0x88] sm:$0xff]
        %v3856 = vld [vmem:[#allocation6 + $0x90] sm:$0xff]
        %v3857 = vld [vmem:[#allocation6 + $0x98] sm:$0xff]
        %v3858 = vld [vmem:[#allocation6 + $0xa0] sm:$0xff]
        %v3859 = vld [vmem:[#allocation6 + $0xa8] sm:$0xff]
        %v3860 = vld [vmem:[#allocation6 + $0xb0] sm:$0xff]
        %v3861 = vld [vmem:[#allocation6 + $0xb8] sm:$0xff]
        %v3862 = vld [vmem:[#allocation6 + $0xc0] sm:$0xff]
        %v3863 = vld [vmem:[#allocation6 + $0xc8] sm:$0xff]
        %v3864 = vld [vmem:[#allocation6 + $0xd0] sm:$0xff]
        %v3865 = vld [vmem:[#allocation6 + $0xd8] sm:$0xff]
        %v3866 = vld [vmem:[#allocation5 + $0x4] sm:$0xff]
        %v3867 = vld [vmem:[#allocation5 + $0xc] sm:$0xff]
        %v3868 = vld [vmem:[#allocation5 + $0x14] sm:$0xff]
        %v3869 = vld [vmem:[#allocation5 + $0x1c] sm:$0xff]
        %v3870 = vld [vmem:[#allocation5 + $0x24] sm:$0xff]
        %v3871 = vld [vmem:[#allocation5 + $0x2c] sm:$0xff]
        %v3872 = vld [vmem:[#allocation5 + $0x34] sm:$0xff]
        %v3873 = vld [vmem:[#allocation5 + $0x3c] sm:$0xff]
        %v3874 = vld [vmem:[#allocation5 + $0x44] sm:$0xff]
        %v3875 = vld [vmem:[#allocation5 + $0x4c] sm:$0xff]
        %v3876 = vld [vmem:[#allocation5 + $0x54] sm:$0xff]
        %v3877 = vld [vmem:[#allocation5 + $0x5c] sm:$0xff]
        %v3878 = vld [vmem:[#allocation5 + $0x64] sm:$0xff]
        %v3879 = vld [vmem:[#allocation5 + $0x6c] sm:$0xff]
        %v3880 = vpack.c.bf16 %v3867, %v3866
        %v3881 = vpack.c.bf16 %v3869, %v3868
        %v3882 = vpack.c.bf16 %v3871, %v3870
        %v3883 = vpack.c.bf16 %v3873, %v3872
        %v3884 = vpack.c.bf16 %v3875, %v3874
        %v3885 = vpack.c.bf16 %v3877, %v3876
        %v3886 = vpack.c.bf16 %v3879, %v3878
        %v3887 = vld [vmem:[#allocation8 + $0x20] sm:$0xff]
        %v3888 = vld [vmem:[#allocation8 + $0x48] sm:$0xff]
        %v3889 = vld [vmem:[#allocation8 + $0x70] sm:$0xff]
        %v3890 = vld [vmem:[#allocation8 + $0x98] sm:$0xff]
        %v3891 = vld [vmem:[#allocation8 + $0xc0] sm:$0xff]
        %v3892 = vld [vmem:[#allocation8 + $0xe8] sm:$0xff]
        %v3893 = vld [vmem:[#allocation8 + $0x110] sm:$0xff]
        %v3894 = vld [vmem:[#allocation8 + $0x138] sm:$0xff]
        %v3895 = vld [vmem:[#allocation8 + $0x160] sm:$0xff]
        %v3896 = vld [vmem:[#allocation8 + $0x188] sm:$0xff]
        %v3897 = vld [vmem:[#allocation8 + $0x1b0] sm:$0xff]
        %v3898 = vld [vmem:[#allocation8 + $0x1d8] sm:$0xff]
        %v3899 = vld [vmem:[#allocation8 + $0x200] sm:$0xff]
        %v3900 = vld [vmem:[#allocation8 + $0x228] sm:$0xff]
        %v3901 = vld [vmem:[#allocation8 + $0x250] sm:$0xff]
        %v3902 = vld [vmem:[#allocation8 + $0x278] sm:$0xff]
        %v3919 = vunpack.c.l.b16 %v3887
        %v3920 = vunpack.c.h.b16 %v3887
        %v3921 = vunpack.c.l.b16 %v3888
        %v3922 = vunpack.c.h.b16 %v3888
        %v3923 = vunpack.c.l.b16 %v3889
        %v3924 = vunpack.c.h.b16 %v3889
        %v3925 = vunpack.c.l.b16 %v3890
        %v3926 = vunpack.c.h.b16 %v3890
        %v3927 = vunpack.c.l.b16 %v3891
        %v3928 = vunpack.c.h.b16 %v3891
        %v3929 = vunpack.c.l.b16 %v3892
        %v3930 = vunpack.c.h.b16 %v3892
        %v3931 = vunpack.c.l.b16 %v3893
        %v3932 = vunpack.c.h.b16 %v3893
        %v3933 = vunpack.c.l.b16 %v3894
        %v3934 = vunpack.c.h.b16 %v3894
        %v3935 = vunpack.c.l.b16 %v3895
        %v3936 = vunpack.c.h.b16 %v3895
        %v3937 = vunpack.c.l.b16 %v3896
        %v3938 = vunpack.c.h.b16 %v3896
        %v3939 = vunpack.c.l.b16 %v3897
        %v3940 = vunpack.c.h.b16 %v3897
        %v3941 = vunpack.c.l.b16 %v3898
        %v3942 = vunpack.c.h.b16 %v3898
        %v3943 = vunpack.c.l.b16 %v3899
        %v3944 = vunpack.c.h.b16 %v3899
        %v3945 = vunpack.c.l.b16 %v3900
        %v3946 = vunpack.c.h.b16 %v3900
        %v3947 = vunpack.c.l.b16 %v3901
        %v3948 = vunpack.c.h.b16 %v3901
        %v3949 = vunpack.c.l.b16 %v3902
        %v3950 = vunpack.c.h.b16 %v3902
        %v3951 = vpack.c.b16 %v3921, %v3919
        %v3952 = vpack.c.b16 %v3922, %v3920
        %v3953 = vpack.c.b16 %v3925, %v3923
        %v3954 = vpack.c.b16 %v3926, %v3924
        %v3955 = vpack.c.b16 %v3929, %v3927
        %v3956 = vpack.c.b16 %v3930, %v3928
        %v3957 = vpack.c.b16 %v3933, %v3931
        %v3958 = vpack.c.b16 %v3934, %v3932
        %v3959 = vpack.c.b16 %v3937, %v3935
        %v3960 = vpack.c.b16 %v3938, %v3936
        %v3961 = vpack.c.b16 %v3941, %v3939
        %v3962 = vpack.c.b16 %v3942, %v3940
        %v3963 = vpack.c.b16 %v3945, %v3943
        %v3964 = vpack.c.b16 %v3946, %v3944
        %v3965 = vpack.c.b16 %v3949, %v3947
        %v3966 = vpack.c.b16 %v3950, %v3948
        %3983 = vmatpush.bf16.msra.mxu0 %v3965
        %3984 = vmatpush.bf16.msra.mxu0 %v3963
        %3985 = vmatpush.bf16.msra.mxu0 %v3961
        %3986 = vmatpush.bf16.msra.mxu0 %v3959
        %3987 = vmatpush.bf16.msra.mxu0 %v3957
        %3988 = vmatpush.bf16.msra.mxu0 %v3955
        %3989 = vmatpush.bf16.msra.mxu0 %v3953
        %3990 = vmatpush.bf16.msra.mxu0 %v3951
        %3991 = vmatmul.bf16.gmra.mxu0 %v3880
        %v3992 = vpop.f32.mrf.mxu0
        %v3993 = vadd.f32 0.0, %v3992
        %v3994 = vpop.f32.mrf.mxu0
        %v3995 = vadd.f32 0.0, %v3994
        %3996 = vmatmul.bf16.gmra.mxu0 %v3881
        %v3997 = vpop.f32.mrf.mxu0
        %v3998 = vadd.f32 0.0, %v3997
        %v3999 = vpop.f32.mrf.mxu0
        %v4000 = vadd.f32 0.0, %v3999
        %4001 = vmatmul.bf16.gmra.mxu0 %v3882
        %v4002 = vpop.f32.mrf.mxu0
        %v4003 = vadd.f32 0.0, %v4002
        %v4004 = vpop.f32.mrf.mxu0
        %v4005 = vadd.f32 0.0, %v4004
        %4006 = vmatmul.bf16.gmra.mxu0 %v3883
        %v4007 = vpop.f32.mrf.mxu0
        %v4008 = vadd.f32 0.0, %v4007
        %v4009 = vpop.f32.mrf.mxu0
        %v4010 = vadd.f32 0.0, %v4009
        %4011 = vmatmul.bf16.gmra.mxu0 %v3884
        %v4012 = vpop.f32.mrf.mxu0
        %v4013 = vadd.f32 0.0, %v4012
        %v4014 = vpop.f32.mrf.mxu0
        %v4015 = vadd.f32 0.0, %v4014
        %4016 = vmatmul.bf16.gmra.mxu0 %v3885
        %v4017 = vpop.f32.mrf.mxu0
        %v4018 = vadd.f32 0.0, %v4017
        %v4019 = vpop.f32.mrf.mxu0
        %v4020 = vadd.f32 0.0, %v4019
        %4021 = vmatmul.bf16.gmra.mxu0 %v3886
        %v4022 = vpop.f32.mrf.mxu0
        %v4023 = vadd.f32 0.0, %v4022
        %v4024 = vpop.f32.mrf.mxu0
        %v4025 = vadd.f32 0.0, %v4024
        %4026 = vdwg.mxu0
        %4027 = vmatpush.bf16.msra.mxu0 %v3966
        %4028 = vmatpush.bf16.msra.mxu0 %v3964
        %4029 = vmatpush.bf16.msra.mxu0 %v3962
        %4030 = vmatpush.bf16.msra.mxu0 %v3960
        %4031 = vmatpush.bf16.msra.mxu0 %v3958
        %4032 = vmatpush.bf16.msra.mxu0 %v3956
        %4033 = vmatpush.bf16.msra.mxu0 %v3954
        %4034 = vmatpush.bf16.msra.mxu0 %v3952
        %4035 = vmatmul.bf16.gmra.mxu0 %v3880
        %v4036 = vpop.f32.mrf.mxu0
        %v4037 = vadd.f32 0.0, %v4036
        %v4038 = vpop.f32.mrf.mxu0
        %v4039 = vadd.f32 0.0, %v4038
        %4040 = vmatmul.bf16.gmra.mxu0 %v3881
        %v4041 = vpop.f32.mrf.mxu0
        %v4042 = vadd.f32 0.0, %v4041
        %v4043 = vpop.f32.mrf.mxu0
        %v4044 = vadd.f32 0.0, %v4043
        %4045 = vmatmul.bf16.gmra.mxu0 %v3882
        %v4046 = vpop.f32.mrf.mxu0
        %v4047 = vadd.f32 0.0, %v4046
        %v4048 = vpop.f32.mrf.mxu0
        %v4049 = vadd.f32 0.0, %v4048
        %4050 = vmatmul.bf16.gmra.mxu0 %v3883
        %v4051 = vpop.f32.mrf.mxu0
        %v4052 = vadd.f32 0.0, %v4051
        %v4053 = vpop.f32.mrf.mxu0
        %v4054 = vadd.f32 0.0, %v4053
        %4055 = vmatmul.bf16.gmra.mxu0 %v3884
        %v4056 = vpop.f32.mrf.mxu0
        %v4057 = vadd.f32 0.0, %v4056
        %v4058 = vpop.f32.mrf.mxu0
        %v4059 = vadd.f32 0.0, %v4058
        %4060 = vmatmul.bf16.gmra.mxu0 %v3885
        %v4061 = vpop.f32.mrf.mxu0
        %v4062 = vadd.f32 0.0, %v4061
        %v4063 = vpop.f32.mrf.mxu0
        %v4064 = vadd.f32 0.0, %v4063
        %4065 = vmatmul.bf16.gmra.mxu0 %v3886
        %v4066 = vpop.f32.mrf.mxu0
        %v4067 = vadd.f32 0.0, %v4066
        %v4068 = vpop.f32.mrf.mxu0
        %v4069 = vadd.f32 0.0, %v4068
        %4070 = vdwg.mxu0
        %v4071 = vadd.f32 %v3838, %v3993
        %v4072 = vadd.f32 %v3839, %v4037
        %v4073 = vadd.f32 %v3840, %v3995
        %v4074 = vadd.f32 %v3841, %v4039
        %v4075 = vadd.f32 %v3842, %v3998
        %v4076 = vadd.f32 %v3843, %v4042
        %v4077 = vadd.f32 %v3844, %v4000
        %v4078 = vadd.f32 %v3845, %v4044
        %v4079 = vadd.f32 %v3846, %v4003
        %v4080 = vadd.f32 %v3847, %v4047
        %v4081 = vadd.f32 %v3848, %v4005
        %v4082 = vadd.f32 %v3849, %v4049
        %v4083 = vadd.f32 %v3850, %v4008
        %v4084 = vadd.f32 %v3851, %v4052
        %v4085 = vadd.f32 %v3852, %v4010
        %v4086 = vadd.f32 %v3853, %v4054
        %v4087 = vadd.f32 %v3854, %v4013
        %v4088 = vadd.f32 %v3855, %v4057
        %v4089 = vadd.f32 %v3856, %v4015
        %v4090 = vadd.f32 %v3857, %v4059
        %v4091 = vadd.f32 %v3858, %v4018
        %v4092 = vadd.f32 %v3859, %v4062
        %v4093 = vadd.f32 %v3860, %v4020
        %v4094 = vadd.f32 %v3861, %v4064
        %v4095 = vadd.f32 %v3862, %v4023
        %v4096 = vadd.f32 %v3863, %v4067
        %v4097 = vadd.f32 %v3864, %v4025
        %v4098 = vadd.f32 %v3865, %v4069
        %4099 = vst [vmem:[#allocation6] sm:$0xff] %v4071
        %4100 = vst [vmem:[#allocation6 + $0x8] sm:$0xff] %v4072
        %4101 = vst [vmem:[#allocation6 + $0x10] sm:$0xff] %v4073
        %4102 = vst [vmem:[#allocation6 + $0x18] sm:$0xff] %v4074
        %4103 = vst [vmem:[#allocation6 + $0x20] sm:$0xff] %v4075
        %4104 = vst [vmem:[#allocation6 + $0x28] sm:$0xff] %v4076
        %4105 = vst [vmem:[#allocation6 + $0x30] sm:$0xff] %v4077
        %4106 = vst [vmem:[#allocation6 + $0x38] sm:$0xff] %v4078
        %4107 = vst [vmem:[#allocation6 + $0x40] sm:$0xff] %v4079
        %4108 = vst [vmem:[#allocation6 + $0x48] sm:$0xff] %v4080
        %4109 = vst [vmem:[#allocation6 + $0x50] sm:$0xff] %v4081
        %4110 = vst [vmem:[#allocation6 + $0x58] sm:$0xff] %v4082
        %4111 = vst [vmem:[#allocation6 + $0x60] sm:$0xff] %v4083
        %4112 = vst [vmem:[#allocation6 + $0x68] sm:$0xff] %v4084
        %4113 = vst [vmem:[#allocation6 + $0x70] sm:$0xff] %v4085
        %4114 = vst [vmem:[#allocation6 + $0x78] sm:$0xff] %v4086
        %4115 = vst [vmem:[#allocation6 + $0x80] sm:$0xff] %v4087
        %4116 = vst [vmem:[#allocation6 + $0x88] sm:$0xff] %v4088
        %4117 = vst [vmem:[#allocation6 + $0x90] sm:$0xff] %v4089
        %4118 = vst [vmem:[#allocation6 + $0x98] sm:$0xff] %v4090
        %4119 = vst [vmem:[#allocation6 + $0xa0] sm:$0xff] %v4091
        %4120 = vst [vmem:[#allocation6 + $0xa8] sm:$0xff] %v4092
        %4121 = vst [vmem:[#allocation6 + $0xb0] sm:$0xff] %v4093
        %4122 = vst [vmem:[#allocation6 + $0xb8] sm:$0xff] %v4094
        %4123 = vst [vmem:[#allocation6 + $0xc0] sm:$0xff] %v4095
        %4124 = vst [vmem:[#allocation6 + $0xc8] sm:$0xff] %v4096
        %4125 = vst [vmem:[#allocation6 + $0xd0] sm:$0xff] %v4097
        %4126 = vst [vmem:[#allocation6 + $0xd8] sm:$0xff] %v4098
        %v4127 = vld [vmem:[#allocation6] sm:$0xff]
        %v4128 = vld [vmem:[#allocation6 + $0x10] sm:$0xff]
        %v4129 = vld [vmem:[#allocation6 + $0x20] sm:$0xff]
        %v4130 = vld [vmem:[#allocation6 + $0x30] sm:$0xff]
        %v4131 = vld [vmem:[#allocation6 + $0x40] sm:$0xff]
        %v4132 = vld [vmem:[#allocation6 + $0x50] sm:$0xff]
        %v4133 = vld [vmem:[#allocation6 + $0x60] sm:$0xff]
        %v4134 = vld [vmem:[#allocation6 + $0x70] sm:$0xff]
        %v4135 = vld [vmem:[#allocation6 + $0x80] sm:$0xff]
        %v4136 = vld [vmem:[#allocation6 + $0x90] sm:$0xff]
        %v4137 = vld [vmem:[#allocation6 + $0xa0] sm:$0xff]
        %v4138 = vld [vmem:[#allocation6 + $0xb0] sm:$0xff]
        %v4139 = vld [vmem:[#allocation6 + $0xc0] sm:$0xff]
        %v4140 = vld [vmem:[#allocation6 + $0xd0] sm:$0xff]
        %v4141 = vld [vmem:[#allocation6 + $0x8] sm:$0xff]
        %v4142 = vld [vmem:[#allocation6 + $0x18] sm:$0xff]
        %v4143 = vld [vmem:[#allocation6 + $0x28] sm:$0xff]
        %v4144 = vld [vmem:[#allocation6 + $0x38] sm:$0xff]
        %v4145 = vld [vmem:[#allocation6 + $0x48] sm:$0xff]
        %v4146 = vld [vmem:[#allocation6 + $0x58] sm:$0xff]
        %v4147 = vld [vmem:[#allocation6 + $0x68] sm:$0xff]
        %v4148 = vld [vmem:[#allocation6 + $0x78] sm:$0xff]
        %v4149 = vld [vmem:[#allocation6 + $0x88] sm:$0xff]
        %v4150 = vld [vmem:[#allocation6 + $0x98] sm:$0xff]
        %v4151 = vld [vmem:[#allocation6 + $0xa8] sm:$0xff]
        %v4152 = vld [vmem:[#allocation6 + $0xb8] sm:$0xff]
        %v4153 = vld [vmem:[#allocation6 + $0xc8] sm:$0xff]
        %v4154 = vld [vmem:[#allocation6 + $0xd8] sm:$0xff]
        %v4155 = vmax.f32 %v4127, %v4141
        %v4156 = vmax.f32 %v4128, %v4142
        %v4157 = vmax.f32 %v4129, %v4143
        %v4158 = vmax.f32 %v4130, %v4144
        %v4159 = vmax.f32 %v4131, %v4145
        %v4160 = vmax.f32 %v4132, %v4146
        %v4161 = vmax.f32 %v4133, %v4147
        %v4162 = vmax.f32 %v4134, %v4148
        %v4163 = vmax.f32 %v4135, %v4149
        %v4164 = vmax.f32 %v4136, %v4150
        %v4165 = vmax.f32 %v4137, %v4151
        %v4166 = vmax.f32 %v4138, %v4152
        %v4167 = vmax.f32 %v4139, %v4153
        %v4168 = vmax.f32 %v4140, %v4154
        %4169 = vst [vmem:[#allocation7] sm:$0xff] %v4155
        %4170 = vst [vmem:[#allocation7 + $0x8] sm:$0xff] %v4156
        %4171 = vst [vmem:[#allocation7 + $0x10] sm:$0xff] %v4157
        %4172 = vst [vmem:[#allocation7 + $0x18] sm:$0xff] %v4158
        %4173 = vst [vmem:[#allocation7 + $0x20] sm:$0xff] %v4159
        %4174 = vst [vmem:[#allocation7 + $0x28] sm:$0xff] %v4160
        %4175 = vst [vmem:[#allocation7 + $0x30] sm:$0xff] %v4161
        %4176 = vst [vmem:[#allocation7 + $0x38] sm:$0xff] %v4162
        %4177 = vst [vmem:[#allocation7 + $0x40] sm:$0xff] %v4163
        %4178 = vst [vmem:[#allocation7 + $0x48] sm:$0xff] %v4164
        %4179 = vst [vmem:[#allocation7 + $0x50] sm:$0xff] %v4165
        %4180 = vst [vmem:[#allocation7 + $0x58] sm:$0xff] %v4166
        %4181 = vst [vmem:[#allocation7 + $0x60] sm:$0xff] %v4167
        %4182 = vst [vmem:[#allocation7 + $0x68] sm:$0xff] %v4168
        %v4183 = vld [vmem:[#allocation7] ss:$2 sm:$0xff]
        %s4184 = scalar_lea.vmem [#allocation7], 16
        %v4185 = vld [vmem:[%s4184] ss:$2 sm:$0xff]
        %s4186 = scalar_lea.vmem [#allocation7], 32
        %v4187 = vld [vmem:[%s4186] ss:$2 sm:$0xff]
        %s4188 = scalar_lea.vmem [#allocation7], 48
        %v4189 = vld [vmem:[%s4188] ss:$2 sm:$0xff]
        %s4190 = scalar_lea.vmem [#allocation7], 64
        %v4191 = vld [vmem:[%s4190] ss:$2 sm:$0xff]
        %s4192 = scalar_lea.vmem [#allocation7], 80
        %v4193 = vld [vmem:[%s4192] ss:$2 sm:$0xff]
        %s4194 = scalar_lea.vmem [#allocation7], 96
        %v4195 = vld [vmem:[%s4194] ss:$2 sm:$0xff]
        %s4196 = scalar_lea.vmem [#allocation7], 1
        %v4197 = vld [vmem:[%s4196] ss:$2 sm:$0xff]
        %s4198 = scalar_lea.vmem [#allocation7], 17
        %v4199 = vld [vmem:[%s4198] ss:$2 sm:$0xff]
        %s4200 = scalar_lea.vmem [#allocation7], 33
        %v4201 = vld [vmem:[%s4200] ss:$2 sm:$0xff]
        %s4202 = scalar_lea.vmem [#allocation7], 49
        %v4203 = vld [vmem:[%s4202] ss:$2 sm:$0xff]
        %s4204 = scalar_lea.vmem [#allocation7], 65
        %v4205 = vld [vmem:[%s4204] ss:$2 sm:$0xff]
        %s4206 = scalar_lea.vmem [#allocation7], 81
        %v4207 = vld [vmem:[%s4206] ss:$2 sm:$0xff]
        %s4208 = scalar_lea.vmem [#allocation7], 97
        %v4209 = vld [vmem:[%s4208] ss:$2 sm:$0xff]
        %v4210 = vmax.f32 %v4183, %v4197
        %v4211 = vmax.f32 %v4185, %v4199
        %v4212 = vmax.f32 %v4187, %v4201
        %v4213 = vmax.f32 %v4189, %v4203
        %v4214 = vmax.f32 %v4191, %v4205
        %v4215 = vmax.f32 %v4193, %v4207
        %v4216 = vmax.f32 %v4195, %v4209
        %v4217 = vld [vmem:[%s4] sm:$0x1]
        %v4219 = vperm.slane %v4217, 0
        %v4221 = vadd.f32 %v4210, %v4219
        %v4222 = vadd.f32 %v4211, %v4219
        %v4223 = vadd.f32 %v4212, %v4219
        %v4224 = vadd.f32 %v4213, %v4219
        %v4225 = vadd.f32 %v4214, %v4219
        %v4226 = vadd.f32 %v4215, %v4219
        %v4227 = vadd.f32 %v4216, %v4219
        %v4228 = vmax.f32 %v4221, 0.0
        %v4229 = vmax.f32 %v4222, 0.0
        %v4230 = vmax.f32 %v4223, 0.0
        %v4231 = vmax.f32 %v4224, 0.0
        %v4232 = vmax.f32 %v4225, 0.0
        %v4233 = vmax.f32 %v4226, 0.0
        %v4234 = vmax.f32 %v4227, 0.0
        %4235 = vst [vmem:[%s243] sm:$0xff] %v4228
        %4236 = vst [vmem:[%s243 + $0x8] sm:$0xff] %v4229
        %4237 = vst [vmem:[%s243 + $0x10] sm:$0xff] %v4230
        %4238 = vst [vmem:[%s243 + $0x18] sm:$0xff] %v4231
        %4239 = vst [vmem:[%s243 + $0x20] sm:$0xff] %v4232
        %4240 = vst [vmem:[%s243 + $0x28] sm:$0xff] %v4233
        %4241 = vst [vmem:[%s243 + $0x30] sm:$0xff] %v4234
        %s4242 = smul.u32 7, %s17
        %p4243 = scmp.lt.s32.totalorder %s4242, 13
        %s4244 = scalar_select %p4243, %s4242, 13
        %s4245 = smul.addr %s4244, 8
        %s4246 = scalar_lea.vmem %s5, %s4245
        // Predicated region
        $region45: #{network_forward.1} parent=39 // pred_check
          %p4247 = pneg %p145
        $region46: #{network_forward.1} parent=39 // pred_check_branch
          %4249 = sbr.rel (%p4247) target = $region48
        $region47: #{network_forward.1} parent=39 // pred_region
          %s4250 = smul.u32 7, %s17
        $region48: #{network_forward.1} parent=39 // pred_fallthru
          _
      $region40: #{network_forward.1} parent=5 // pred_fallthru
        _
      %p4251 = scmp.le.s32.totalorder 2, %s12
      // Predicated region
      $region49: #{network_forward.1} parent=5 // pred_check
        %p4252 = pneg %p4251
      $region50: #{network_forward.1} parent=5 // pred_check_branch
        %4254 = sbr.rel (%p4252) target = $region52
      $region51: #{network_forward.1} parent=5 // pred_region
        %s4255 = ssub.s32 %s12, 2
        // Predicated region
        $region53: #{network_forward.1} parent=51 // pred_check
          %p4256 = pneg %p151
        $region54: #{network_forward.1} parent=51 // pred_check_branch
          %4258 = sbr.rel (%p4256) target = $region56
        $region55: #{network_forward.1} parent=51 // pred_region
          %s4259 = smul.u32 7, %s18
          %p4260 = scmp.lt.s32.totalorder %s4259, 13
          %s4261 = scalar_select %p4260, %s4259, 13
          %s4262 = smul.addr %s4261, 8
          %s4263 = scalar_lea.vmem %s5, %s4262
        $region56: #{network_forward.1} parent=51 // pred_fallthru
          _
      $region52: #{network_forward.1} parent=5 // pred_fallthru
        _
    $region6: #{network_forward.1} parent=1 // loop_footer
      %s16 = sadd.s32 1, %s12
    $region7: #{network_forward.1} parent=1 // loop_footer_branch
      %11 = sbr.rel target = $region3
    $region8: #{network_forward.1} parent=1 // loop_exit
      _
    %4264 = vsyncpa [#allocation9], 1
    %s4265 = scalar_lea.sflag [#allocation9], 1
    %4266 = vsyncpa %s4265, 1

</llo_original>
